<compile_context>
chip_gen: v7x
topology: tpu7x:2x2x1
jax: 0.10.0
libtpu: 0.0.40
codegen_flags: <defaults>
</compile_context>

<pallas_src>
import jax
import jax.numpy as jnp
import numpy as np
from jax.experimental import pallas as pl
from jax.experimental.pallas import tpu as pltpu


def _upmask_kernel(x_ref, w1_ref, b1_ref, w2_ref, b2_ref, out_ref, xpad_ref):
    # Block shapes (per batch element):
    #   x_ref    : (1, H,   W,   C1)  bf16  unpadded input features
    #   w1_ref   : (3, 3, C1, C2)     bf16  3x3 conv weights (HWIO)
    #   b1_ref   : (1, C2)            f32
    #   w2_ref   : (C2, C3)           bf16  1x1 conv weights
    #   b2_ref   : (1, C3)            f32
    #   out_ref  : (1, H,   W,   C3)  f32
    #   xpad_ref : (1, H+2, W+2, C1)  bf16  VMEM scratch (zero-padded input)
    _, H, W, C1 = x_ref.shape
    C2 = w1_ref.shape[-1]
    C3 = out_ref.shape[-1]
    HW = H * W

    # Build the zero-padded input in VMEM (no padded tensor in HBM).
    # Re-zeroed every step so this is correct when the batch grid axis is
    # sharded across TensorCores; the sweep is tiny ((H+2)*(W+2)*C1 bf16).
    xpad_ref[...] = jnp.zeros_like(xpad_ref)
    xpad_ref[0, 1:H + 1, 1:W + 1, :] = x_ref[0]

    # --- Conv 3x3 (SAME) as 9 shifted-window matmuls, f32 accumulation. ---
    acc = jnp.zeros((HW, C2), jnp.float32)
    for dy in range(3):
        for dx in range(3):
            patch = xpad_ref[0, dy:dy + H, dx:dx + W, :].reshape(HW, C1)
            acc = acc + jnp.dot(patch, w1_ref[dy, dx],
                                preferred_element_type=jnp.float32)

    # Bias + ReLU, then cast back to bf16 for the second MXU matmul.
    a1 = jnp.maximum(acc + b1_ref[...], 0.0).astype(jnp.bfloat16)

    # --- Conv 1x1 == single matmul, then bias and the 0.25 scale. ---
    y = jnp.dot(a1, w2_ref[...], preferred_element_type=jnp.float32)
    y = 0.25 * (y + b2_ref[...])

    out_ref[0] = y.reshape(H, W, C3).astype(out_ref.dtype)


def upmask_pallas(feat_nchw, params):
    """UpMaskNet forward.  feat_nchw: (B, C1, H, W) -> (B, C3, H, W)."""
    B, C1, H, W = feat_nchw.shape
    w1 = params["w1"]                      # (3, 3, C1, C2)  HWIO
    b1 = params["b1"]                      # (C2,)
    w2 = params["w2"]                      # (C2, C3)
    b2 = params["b2"]                      # (C3,)
    C2 = w1.shape[-1]
    C3 = w2.shape[-1]

    # NCHW -> NHWC; bf16 activations/weights (f32 accumulation in-kernel).
    x = jnp.transpose(feat_nchw, (0, 2, 3, 1)).astype(jnp.bfloat16)
    w1b = w1.astype(jnp.bfloat16)
    w2b = w2.astype(jnp.bfloat16)
    b1f = b1.reshape(1, C2).astype(jnp.float32)
    b2f = b2.reshape(1, C3).astype(jnp.float32)

    out_nhwc = pl.pallas_call(
        _upmask_kernel,
        out_shape=jax.ShapeDtypeStruct((B, H, W, C3), jnp.float32),
        grid_spec=pltpu.PrefetchScalarGridSpec(
            num_scalar_prefetch=0,
            grid=(B,),
            in_specs=[
                pl.BlockSpec((1, H, W, C1), lambda b: (b, 0, 0, 0)),
                pl.BlockSpec((3, 3, C1, C2), lambda b: (0, 0, 0, 0)),
                pl.BlockSpec((1, C2), lambda b: (0, 0)),
                pl.BlockSpec((C2, C3), lambda b: (0, 0)),
                pl.BlockSpec((1, C3), lambda b: (0, 0)),
            ],
            out_specs=pl.BlockSpec((1, H, W, C3), lambda b: (b, 0, 0, 0)),
            scratch_shapes=[pltpu.VMEM((1, H + 2, W + 2, C1), jnp.bfloat16)],
        ),
        compiler_params=pltpu.CompilerParams(
            dimension_semantics=("parallel",)),   # v7x: 2 TCs split the batch
    )(x, w1b, b1f, w2b, b2f)

    return jnp.transpose(out_nhwc, (0, 3, 1, 2))


def _ref_forward(feat_nchw, params):
    """Pure-JAX reference matching the PyTorch module semantics
    (same bf16 inputs / f32 accumulation as the kernel)."""
    x = jnp.transpose(feat_nchw, (0, 2, 3, 1)).astype(jnp.bfloat16)
    w1 = params["w1"].astype(jnp.bfloat16)
    w2 = params["w2"].astype(jnp.bfloat16)
    b1 = params["b1"].astype(jnp.float32)
    b2 = params["b2"].astype(jnp.float32)
    dn = ("NHWC", "HWIO", "NHWC")

    y1 = jax.lax.conv_general_dilated(
        x, w1, (1, 1), "SAME", dimension_numbers=dn,
        preferred_element_type=jnp.float32) + b1
    a1 = jnp.maximum(y1, 0.0).astype(jnp.bfloat16)
    y2 = jnp.einsum("bhwc,cd->bhwd", a1, w2,
                    preferred_element_type=jnp.float32) + b2
    out = 0.25 * y2
    return jnp.transpose(out, (0, 3, 1, 2))


if __name__ == "__main__":
    key = jax.random.PRNGKey(0)
    # Small shapes consistent with the module: hidden_dim=32, ratio=4.
    B, C1, H, W = 2, 32, 16, 16
    ratio = 4
    C2 = 2 * C1                   # hidden_dim * 2
    C3 = ratio * ratio * 9        # = 144

    keys = jax.random.split(key, 5)
    feat = jax.random.normal(keys[0], (B, C1, H, W), jnp.float32)

    def init_conv(k, cin, cout, ksize):
        # Deterministic init mimicking nn.Conv2d default (uniform +-1/sqrt(fan_in)).
        kw, kb = jax.random.split(k)
        bound = 1.0 / np.sqrt(cin * ksize * ksize)
        w_oihw = jax.random.uniform(kw, (cout, cin, ksize, ksize),
                                    jnp.float32, -bound, bound)
        b = jax.random.uniform(kb, (cout,), jnp.float32, -bound, bound)
        return w_oihw, b

    w1_pt, b1 = init_conv(keys[1], C1, C2, 3)   # Conv2d(C1, C2, 3, padding=1)
    w2_pt, b2 = init_conv(keys[2], C2, C3, 1)   # Conv2d(C2, C3, 1)

    params = dict(
        w1=jnp.transpose(w1_pt, (2, 3, 1, 0)),          # OIHW -> HWIO
        b1=b1,
        w2=jnp.transpose(w2_pt[:, :, 0, 0], (1, 0)),    # (C3,C2,1,1) -> (C2,C3)
        b2=b2,
    )

    out = upmask_pallas(feat, params)
    out = jax.block_until_ready(out)

    ref = _ref_forward(feat, params)
    np.testing.assert_allclose(np.asarray(out), np.asarray(ref),
                               rtol=1e-2, atol=1e-2)
    print("KERNEL_OK")
</pallas_src>

<mosaic_0001>
module attributes {stable_mosaic.version = 11 : i64} {
  func.func @_upmask_kernel(%arg0: i32, %arg1: memref<1x16x16x32xbf16, #tpu.memory_space<vmem>>, %arg2: memref<3x3x32x64xbf16, #tpu.memory_space<vmem>>, %arg3: memref<1x64xf32, #tpu.memory_space<vmem>>, %arg4: memref<64x144xbf16, #tpu.memory_space<vmem>>, %arg5: memref<1x144xf32, #tpu.memory_space<vmem>>, %arg6: memref<1x16x16x144xf32, #tpu.memory_space<vmem>>, %arg7: memref<1x18x18x32xbf16, #tpu.memory_space<vmem>>) attributes {dimension_semantics = [#tpu.dimension_semantics<parallel>], iteration_bounds = array<i64: 2>, scalar_prefetch = 0 : i64, scratch_operands = 1 : i64, tpu.core_type = #tpu.core_type<tc>, window_params = [{transform_indices = @transform_0, window_bounds = array<i64: 1, 16, 16, 32>}, {pipeline_mode = #tpu.pipeline_mode<synchronous>, transform_indices = @transform_1, window_bounds = array<i64: 3, 3, 32, 64>}, {pipeline_mode = #tpu.pipeline_mode<synchronous>, transform_indices = @transform_2, window_bounds = array<i64: 1, 64>}, {pipeline_mode = #tpu.pipeline_mode<synchronous>, transform_indices = @transform_3, window_bounds = array<i64: 64, 144>}, {pipeline_mode = #tpu.pipeline_mode<synchronous>, transform_indices = @transform_4, window_bounds = array<i64: 1, 144>}, {transform_indices = @transform_5, window_bounds = array<i64: 1, 16, 16, 144>}]} {
    %cst = arith.constant 0.000000e+00 : bf16
    %0 = vector.broadcast %cst : bf16 to vector<1x18x18x32xbf16>
    %c0 = arith.constant 0 : index
    %c0_0 = arith.constant 0 : index
    %c0_1 = arith.constant 0 : index
    %c0_2 = arith.constant 0 : index
    %1 = vector.load %arg7[%c0, %c0_0, %c0_1, %c0_2] : memref<1x18x18x32xbf16, #tpu.memory_space<vmem>>, vector<1x18x18x32xbf16>
    tpu.vector_store %arg7[%c0, %c0_0, %c0_1, %c0_2], %0 {strides = array<i32>} : memref<1x18x18x32xbf16, #tpu.memory_space<vmem>>, vector<1x18x18x32xbf16>,
    %c0_3 = arith.constant 0 : index
    %c0_4 = arith.constant 0 : index
    %c0_5 = arith.constant 0 : index
    %c0_6 = arith.constant 0 : index
    %2 = vector.load %arg1[%c0_3, %c0_4, %c0_5, %c0_6] : memref<1x16x16x32xbf16, #tpu.memory_space<vmem>>, vector<1x16x16x32xbf16>
    %3 = vector.shape_cast %2 : vector<1x16x16x32xbf16> to vector<16x16x32xbf16>
    %c0_7 = arith.constant 0 : index
    %c1 = arith.constant 1 : index
    %c1_8 = arith.constant 1 : index
    %c0_9 = arith.constant 0 : index
    %4 = vector.load %arg7[%c0_7, %c1, %c1_8, %c0_9] : memref<1x18x18x32xbf16, #tpu.memory_space<vmem>>, vector<1x16x16x32xbf16>
    %5 = vector.shape_cast %4 : vector<1x16x16x32xbf16> to vector<16x16x32xbf16>
    %6 = vector.shape_cast %3 : vector<16x16x32xbf16> to vector<1x16x16x32xbf16>
    tpu.vector_store %arg7[%c0_7, %c1, %c1_8, %c0_9], %6 {strides = array<i32>} : memref<1x18x18x32xbf16, #tpu.memory_space<vmem>>, vector<1x16x16x32xbf16>,
    %cst_10 = arith.constant 0.000000e+00 : f32
    %7 = vector.broadcast %cst_10 : f32 to vector<256x64xf32>
    %c0_11 = arith.constant 0 : index
    %c0_12 = arith.constant 0 : index
    %c0_13 = arith.constant 0 : index
    %c0_14 = arith.constant 0 : index
    %8 = vector.load %arg7[%c0_11, %c0_12, %c0_13, %c0_14] : memref<1x18x18x32xbf16, #tpu.memory_space<vmem>>, vector<1x16x16x32xbf16>
    %9 = vector.shape_cast %8 : vector<1x16x16x32xbf16> to vector<16x16x32xbf16>
    %10 = vector.shape_cast %9 : vector<16x16x32xbf16> to vector<256x32xbf16>
    %c0_15 = arith.constant 0 : index
    %c0_16 = arith.constant 0 : index
    %c0_17 = arith.constant 0 : index
    %c0_18 = arith.constant 0 : index
    %11 = vector.load %arg2[%c0_15, %c0_16, %c0_17, %c0_18] : memref<3x3x32x64xbf16, #tpu.memory_space<vmem>>, vector<1x1x32x64xbf16>
    %12 = vector.shape_cast %11 : vector<1x1x32x64xbf16> to vector<32x64xbf16>
    %cst_19 = arith.constant dense<0.000000e+00> : vector<256x64xf32>
    %13 = tpu.matmul %10, %12, %cst_19 {dimension_numbers = #tpu.dot_dimension_numbers<[1], [0], [0], [1], [0, 0, 1, 1], [], []>} : vector<256x32xbf16>, vector<32x64xbf16>, vector<256x64xf32> -> vector<256x64xf32>
    %14 = arith.addf %7, %13 : vector<256x64xf32>
    %c0_20 = arith.constant 0 : index
    %c0_21 = arith.constant 0 : index
    %c1_22 = arith.constant 1 : index
    %c0_23 = arith.constant 0 : index
    %15 = vector.load %arg7[%c0_20, %c0_21, %c1_22, %c0_23] : memref<1x18x18x32xbf16, #tpu.memory_space<vmem>>, vector<1x16x16x32xbf16>
    %16 = vector.shape_cast %15 : vector<1x16x16x32xbf16> to vector<16x16x32xbf16>
    %17 = vector.shape_cast %16 : vector<16x16x32xbf16> to vector<256x32xbf16>
    %c0_24 = arith.constant 0 : index
    %c1_25 = arith.constant 1 : index
    %c0_26 = arith.constant 0 : index
    %c0_27 = arith.constant 0 : index
    %18 = vector.load %arg2[%c0_24, %c1_25, %c0_26, %c0_27] : memref<3x3x32x64xbf16, #tpu.memory_space<vmem>>, vector<1x1x32x64xbf16>
    %19 = vector.shape_cast %18 : vector<1x1x32x64xbf16> to vector<32x64xbf16>
    %cst_28 = arith.constant dense<0.000000e+00> : vector<256x64xf32>
    %20 = tpu.matmul %17, %19, %cst_28 {dimension_numbers = #tpu.dot_dimension_numbers<[1], [0], [0], [1], [0, 0, 1, 1], [], []>} : vector<256x32xbf16>, vector<32x64xbf16>, vector<256x64xf32> -> vector<256x64xf32>
    %21 = arith.addf %14, %20 : vector<256x64xf32>
    %c0_29 = arith.constant 0 : index
    %c0_30 = arith.constant 0 : index
    %c2 = arith.constant 2 : index
    %c0_31 = arith.constant 0 : index
    %22 = vector.load %arg7[%c0_29, %c0_30, %c2, %c0_31] : memref<1x18x18x32xbf16, #tpu.memory_space<vmem>>, vector<1x16x16x32xbf16>
    %23 = vector.shape_cast %22 : vector<1x16x16x32xbf16> to vector<16x16x32xbf16>
    %24 = vector.shape_cast %23 : vector<16x16x32xbf16> to vector<256x32xbf16>
    %c0_32 = arith.constant 0 : index
    %c2_33 = arith.constant 2 : index
    %c0_34 = arith.constant 0 : index
    %c0_35 = arith.constant 0 : index
    %25 = vector.load %arg2[%c0_32, %c2_33, %c0_34, %c0_35] : memref<3x3x32x64xbf16, #tpu.memory_space<vmem>>, vector<1x1x32x64xbf16>
    %26 = vector.shape_cast %25 : vector<1x1x32x64xbf16> to vector<32x64xbf16>
    %cst_36 = arith.constant dense<0.000000e+00> : vector<256x64xf32>
    %27 = tpu.matmul %24, %26, %cst_36 {dimension_numbers = #tpu.dot_dimension_numbers<[1], [0], [0], [1], [0, 0, 1, 1], [], []>} : vector<256x32xbf16>, vector<32x64xbf16>, vector<256x64xf32> -> vector<256x64xf32>
    %28 = arith.addf %21, %27 : vector<256x64xf32>
    %c0_37 = arith.constant 0 : index
    %c1_38 = arith.constant 1 : index
    %c0_39 = arith.constant 0 : index
    %c0_40 = arith.constant 0 : index
    %29 = vector.load %arg7[%c0_37, %c1_38, %c0_39, %c0_40] : memref<1x18x18x32xbf16, #tpu.memory_space<vmem>>, vector<1x16x16x32xbf16>
    %30 = vector.shape_cast %29 : vector<1x16x16x32xbf16> to vector<16x16x32xbf16>
    %31 = vector.shape_cast %30 : vector<16x16x32xbf16> to vector<256x32xbf16>
    %c1_41 = arith.constant 1 : index
    %c0_42 = arith.constant 0 : index
    %c0_43 = arith.constant 0 : index
    %c0_44 = arith.constant 0 : index
    %32 = vector.load %arg2[%c1_41, %c0_42, %c0_43, %c0_44] : memref<3x3x32x64xbf16, #tpu.memory_space<vmem>>, vector<1x1x32x64xbf16>
    %33 = vector.shape_cast %32 : vector<1x1x32x64xbf16> to vector<32x64xbf16>
    %cst_45 = arith.constant dense<0.000000e+00> : vector<256x64xf32>
    %34 = tpu.matmul %31, %33, %cst_45 {dimension_numbers = #tpu.dot_dimension_numbers<[1], [0], [0], [1], [0, 0, 1, 1], [], []>} : vector<256x32xbf16>, vector<32x64xbf16>, vector<256x64xf32> -> vector<256x64xf32>
    %35 = arith.addf %28, %34 : vector<256x64xf32>
    %c0_46 = arith.constant 0 : index
    %c1_47 = arith.constant 1 : index
    %c1_48 = arith.constant 1 : index
    %c0_49 = arith.constant 0 : index
    %36 = vector.load %arg7[%c0_46, %c1_47, %c1_48, %c0_49] : memref<1x18x18x32xbf16, #tpu.memory_space<vmem>>, vector<1x16x16x32xbf16>
    %37 = vector.shape_cast %36 : vector<1x16x16x32xbf16> to vector<16x16x32xbf16>
    %38 = vector.shape_cast %37 : vector<16x16x32xbf16> to vector<256x32xbf16>
    %c1_50 = arith.constant 1 : index
    %c1_51 = arith.constant 1 : index
    %c0_52 = arith.constant 0 : index
    %c0_53 = arith.constant 0 : index
    %39 = vector.load %arg2[%c1_50, %c1_51, %c0_52, %c0_53] : memref<3x3x32x64xbf16, #tpu.memory_space<vmem>>, vector<1x1x32x64xbf16>
    %40 = vector.shape_cast %39 : vector<1x1x32x64xbf16> to vector<32x64xbf16>
    %cst_54 = arith.constant dense<0.000000e+00> : vector<256x64xf32>
    %41 = tpu.matmul %38, %40, %cst_54 {dimension_numbers = #tpu.dot_dimension_numbers<[1], [0], [0], [1], [0, 0, 1, 1], [], []>} : vector<256x32xbf16>, vector<32x64xbf16>, vector<256x64xf32> -> vector<256x64xf32>
    %42 = arith.addf %35, %41 : vector<256x64xf32>
    %c0_55 = arith.constant 0 : index
    %c1_56 = arith.constant 1 : index
    %c2_57 = arith.constant 2 : index
    %c0_58 = arith.constant 0 : index
    %43 = vector.load %arg7[%c0_55, %c1_56, %c2_57, %c0_58] : memref<1x18x18x32xbf16, #tpu.memory_space<vmem>>, vector<1x16x16x32xbf16>
    %44 = vector.shape_cast %43 : vector<1x16x16x32xbf16> to vector<16x16x32xbf16>
    %45 = vector.shape_cast %44 : vector<16x16x32xbf16> to vector<256x32xbf16>
    %c1_59 = arith.constant 1 : index
    %c2_60 = arith.constant 2 : index
    %c0_61 = arith.constant 0 : index
    %c0_62 = arith.constant 0 : index
    %46 = vector.load %arg2[%c1_59, %c2_60, %c0_61, %c0_62] : memref<3x3x32x64xbf16, #tpu.memory_space<vmem>>, vector<1x1x32x64xbf16>
    %47 = vector.shape_cast %46 : vector<1x1x32x64xbf16> to vector<32x64xbf16>
    %cst_63 = arith.constant dense<0.000000e+00> : vector<256x64xf32>
    %48 = tpu.matmul %45, %47, %cst_63 {dimension_numbers = #tpu.dot_dimension_numbers<[1], [0], [0], [1], [0, 0, 1, 1], [], []>} : vector<256x32xbf16>, vector<32x64xbf16>, vector<256x64xf32> -> vector<256x64xf32>
    %49 = arith.addf %42, %48 : vector<256x64xf32>
    %c0_64 = arith.constant 0 : index
    %c2_65 = arith.constant 2 : index
    %c0_66 = arith.constant 0 : index
    %c0_67 = arith.constant 0 : index
    %50 = vector.load %arg7[%c0_64, %c2_65, %c0_66, %c0_67] : memref<1x18x18x32xbf16, #tpu.memory_space<vmem>>, vector<1x16x16x32xbf16>
    %51 = vector.shape_cast %50 : vector<1x16x16x32xbf16> to vector<16x16x32xbf16>
    %52 = vector.shape_cast %51 : vector<16x16x32xbf16> to vector<256x32xbf16>
    %c2_68 = arith.constant 2 : index
    %c0_69 = arith.constant 0 : index
    %c0_70 = arith.constant 0 : index
    %c0_71 = arith.constant 0 : index
    %53 = vector.load %arg2[%c2_68, %c0_69, %c0_70, %c0_71] : memref<3x3x32x64xbf16, #tpu.memory_space<vmem>>, vector<1x1x32x64xbf16>
    %54 = vector.shape_cast %53 : vector<1x1x32x64xbf16> to vector<32x64xbf16>
    %cst_72 = arith.constant dense<0.000000e+00> : vector<256x64xf32>
    %55 = tpu.matmul %52, %54, %cst_72 {dimension_numbers = #tpu.dot_dimension_numbers<[1], [0], [0], [1], [0, 0, 1, 1], [], []>} : vector<256x32xbf16>, vector<32x64xbf16>, vector<256x64xf32> -> vector<256x64xf32>
    %56 = arith.addf %49, %55 : vector<256x64xf32>
    %c0_73 = arith.constant 0 : index
    %c2_74 = arith.constant 2 : index
    %c1_75 = arith.constant 1 : index
    %c0_76 = arith.constant 0 : index
    %57 = vector.load %arg7[%c0_73, %c2_74, %c1_75, %c0_76] : memref<1x18x18x32xbf16, #tpu.memory_space<vmem>>, vector<1x16x16x32xbf16>
    %58 = vector.shape_cast %57 : vector<1x16x16x32xbf16> to vector<16x16x32xbf16>
    %59 = vector.shape_cast %58 : vector<16x16x32xbf16> to vector<256x32xbf16>
    %c2_77 = arith.constant 2 : index
    %c1_78 = arith.constant 1 : index
    %c0_79 = arith.constant 0 : index
    %c0_80 = arith.constant 0 : index
    %60 = vector.load %arg2[%c2_77, %c1_78, %c0_79, %c0_80] : memref<3x3x32x64xbf16, #tpu.memory_space<vmem>>, vector<1x1x32x64xbf16>
    %61 = vector.shape_cast %60 : vector<1x1x32x64xbf16> to vector<32x64xbf16>
    %cst_81 = arith.constant dense<0.000000e+00> : vector<256x64xf32>
    %62 = tpu.matmul %59, %61, %cst_81 {dimension_numbers = #tpu.dot_dimension_numbers<[1], [0], [0], [1], [0, 0, 1, 1], [], []>} : vector<256x32xbf16>, vector<32x64xbf16>, vector<256x64xf32> -> vector<256x64xf32>
    %63 = arith.addf %56, %62 : vector<256x64xf32>
    %c0_82 = arith.constant 0 : index
    %c2_83 = arith.constant 2 : index
    %c2_84 = arith.constant 2 : index
    %c0_85 = arith.constant 0 : index
    %64 = vector.load %arg7[%c0_82, %c2_83, %c2_84, %c0_85] : memref<1x18x18x32xbf16, #tpu.memory_space<vmem>>, vector<1x16x16x32xbf16>
    %65 = vector.shape_cast %64 : vector<1x16x16x32xbf16> to vector<16x16x32xbf16>
    %66 = vector.shape_cast %65 : vector<16x16x32xbf16> to vector<256x32xbf16>
    %c2_86 = arith.constant 2 : index
    %c2_87 = arith.constant 2 : index
    %c0_88 = arith.constant 0 : index
    %c0_89 = arith.constant 0 : index
    %67 = vector.load %arg2[%c2_86, %c2_87, %c0_88, %c0_89] : memref<3x3x32x64xbf16, #tpu.memory_space<vmem>>, vector<1x1x32x64xbf16>
    %68 = vector.shape_cast %67 : vector<1x1x32x64xbf16> to vector<32x64xbf16>
    %cst_90 = arith.constant dense<0.000000e+00> : vector<256x64xf32>
    %69 = tpu.matmul %66, %68, %cst_90 {dimension_numbers = #tpu.dot_dimension_numbers<[1], [0], [0], [1], [0, 0, 1, 1], [], []>} : vector<256x32xbf16>, vector<32x64xbf16>, vector<256x64xf32> -> vector<256x64xf32>
    %70 = arith.addf %63, %69 : vector<256x64xf32>
    %c0_91 = arith.constant 0 : index
    %c0_92 = arith.constant 0 : index
    %71 = vector.load %arg3[%c0_91, %c0_92] : memref<1x64xf32, #tpu.memory_space<vmem>>, vector<1x64xf32>
    %72 = vector.broadcast %71 : vector<1x64xf32> to vector<256x64xf32>
    %73 = arith.addf %70, %72 : vector<256x64xf32>
    %cst_93 = arith.constant 0.000000e+00 : f32
    %74 = vector.broadcast %cst_93 : f32 to vector<256x64xf32>
    %75 = arith.maximumf %73, %74 : vector<256x64xf32>
    %76 = arith.truncf %75 : vector<256x64xf32> to vector<256x64xbf16>
    %c0_94 = arith.constant 0 : index
    %c0_95 = arith.constant 0 : index
    %77 = vector.load %arg4[%c0_94, %c0_95] : memref<64x144xbf16, #tpu.memory_space<vmem>>, vector<64x144xbf16>
    %cst_96 = arith.constant dense<0.000000e+00> : vector<256x144xf32>
    %78 = tpu.matmul %76, %77, %cst_96 {dimension_numbers = #tpu.dot_dimension_numbers<[1], [0], [0], [1], [0, 0, 1, 1], [], []>} : vector<256x64xbf16>, vector<64x144xbf16>, vector<256x144xf32> -> vector<256x144xf32>
    %c0_97 = arith.constant 0 : index
    %c0_98 = arith.constant 0 : index
    %79 = vector.load %arg5[%c0_97, %c0_98] : memref<1x144xf32, #tpu.memory_space<vmem>>, vector<1x144xf32>
    %80 = vector.broadcast %79 : vector<1x144xf32> to vector<256x144xf32>
    %81 = arith.addf %78, %80 : vector<256x144xf32>
    %cst_99 = arith.constant 2.500000e-01 : f32
    %82 = vector.broadcast %cst_99 : f32 to vector<256x144xf32>
    %83 = arith.mulf %82, %81 : vector<256x144xf32>
    %84 = vector.shape_cast %83 : vector<256x144xf32> to vector<16x16x144xf32>
    %c0_100 = arith.constant 0 : index
    %c0_101 = arith.constant 0 : index
    %c0_102 = arith.constant 0 : index
    %c0_103 = arith.constant 0 : index
    %85 = vector.load %arg6[%c0_100, %c0_101, %c0_102, %c0_103] : memref<1x16x16x144xf32, #tpu.memory_space<vmem>>, vector<1x16x16x144xf32>
    %86 = vector.shape_cast %85 : vector<1x16x16x144xf32> to vector<16x16x144xf32>
    %87 = vector.shape_cast %84 : vector<16x16x144xf32> to vector<1x16x16x144xf32>
    tpu.vector_store %arg6[%c0_100, %c0_101, %c0_102, %c0_103], %87 {strides = array<i32>} : memref<1x16x16x144xf32, #tpu.memory_space<vmem>>, vector<1x16x16x144xf32>,
    return
  }
  func.func @transform_0(%arg0: i32) -> (i32, i32, i32, i32) {
    %c0_i32 = arith.constant 0 : i32
    %c0_i32_0 = arith.constant 0 : i32
    %c0_i32_1 = arith.constant 0 : i32
    %c0_i32_2 = arith.constant 0 : i32
    return %arg0, %c0_i32, %c0_i32_0, %c0_i32_1 : i32, i32, i32, i32
  }
  func.func @transform_1(%arg0: i32) -> (i32, i32, i32, i32) {
    %c0_i32 = arith.constant 0 : i32
    %c0_i32_0 = arith.constant 0 : i32
    %c0_i32_1 = arith.constant 0 : i32
    %c0_i32_2 = arith.constant 0 : i32
    %c0_i32_3 = arith.constant 0 : i32
    return %c0_i32, %c0_i32_0, %c0_i32_1, %c0_i32_2 : i32, i32, i32, i32
  }
  func.func @transform_2(%arg0: i32) -> (i32, i32) {
    %c0_i32 = arith.constant 0 : i32
    %c0_i32_0 = arith.constant 0 : i32
    %c0_i32_1 = arith.constant 0 : i32
    return %c0_i32, %c0_i32_0 : i32, i32
  }
  func.func @transform_3(%arg0: i32) -> (i32, i32) {
    %c0_i32 = arith.constant 0 : i32
    %c0_i32_0 = arith.constant 0 : i32
    %c0_i32_1 = arith.constant 0 : i32
    return %c0_i32, %c0_i32_0 : i32, i32
  }
  func.func @transform_4(%arg0: i32) -> (i32, i32) {
    %c0_i32 = arith.constant 0 : i32
    %c0_i32_0 = arith.constant 0 : i32
    %c0_i32_1 = arith.constant 0 : i32
    return %c0_i32, %c0_i32_0 : i32, i32
  }
  func.func @transform_5(%arg0: i32) -> (i32, i32, i32, i32) {
    %c0_i32 = arith.constant 0 : i32
    %c0_i32_0 = arith.constant 0 : i32
    %c0_i32_1 = arith.constant 0 : i32
    %c0_i32_2 = arith.constant 0 : i32
    return %arg0, %c0_i32, %c0_i32_0, %c0_i32_1 : i32, i32, i32, i32
  }
}

</mosaic_0001>

<llo_original>
// kernel: tpu_custom_call.1
$region0: #{tpu_custom_call.1}
  #allocation0 [shape = 'u32[]', space=smem, size = 0x4, offset = 0x4, fixed_abs, tag = 'smem constant byte address 0x4 - core index']
  #allocation1 [shape = 'u32[144,128]{1,0:T(1,128)}', space=vmem, size = 0x12000, scoped, tag = 'internal scratch']
  #allocation2 [shape = 'bf16[1,18,18,32]{3,2,1,0:T(8,128)(2,1)}', space=vmem, size = 0x1b000, scoped, tag = 'scratch operand']
  %s0 = inlined_call_operand.hbm [shape: bf16[2,16,16,32], index: 0, kind: input, shape index: {}]
  %s1 = inlined_call_operand.hbm [shape: bf16[3,3,32,64], index: 1, kind: input, shape index: {}]
  %s2 = inlined_call_operand.vmem [shape: f32[1,64], index: 2, kind: input, shape index: {}]
  %s3 = inlined_call_operand.hbm [shape: bf16[64,144], index: 3, kind: input, shape index: {}]
  %s4 = inlined_call_operand.vmem [shape: f32[1,144], index: 4, kind: input, shape index: {}]
  %s5 = inlined_call_operand.hbm [shape: f32[2,16,16,144], index: 5, kind: output, shape index: {}]
  %s6 = sld [smem:[#allocation0]]
  $region65: #{tpu_custom_call.1} parent=0
    _
  %s8 = ssub.s32 1, %s6
  %s9 = scalar_select 0, %s8, %s6
  $region1: #{tpu_custom_call.1} parent=0
    #allocation3 [shape = 'u8[131072]{0}', space=vmem, size = 0x20000, scoped, tag = 'input window, operand 0']
    #allocation4 [shape = 's32[2]{0}', space=sflag, size = 0x8, scoped, tag = 'scoped memory for tpu_custom_call.1']
    #allocation5 [shape = 's32[2]{0}', space=sflag, size = 0x8, scoped, tag = 'scoped memory for tpu_custom_call.1']
    #allocation6 [shape = 'u8[73728]{0}', space=vmem, size = 0x12000, scoped, tag = 'input window, operand 1, single buffered']
    #allocation7 [shape = 's32[1]{0}', space=sflag, size = 0x4, scoped, tag = 'scoped memory for tpu_custom_call.1']
    #allocation8 [shape = 'u8[32768]{0}', space=vmem, size = 0x8000, scoped, tag = 'input window, operand 3, single buffered']
    #allocation9 [shape = 'u8[524288]{0}', space=vmem, size = 0x80000, scoped, tag = 'output window, operand 0']
    %10 = vsyncpa [#allocation4], 0
    %s11 = scalar_lea.sflag [#allocation4], 1
    %12 = vsyncpa %s11, 0
    %13 = vsyncpa [#allocation7], 0
    %14 = vsyncpa [#allocation5], 0
    %s15 = scalar_lea.sflag [#allocation5], 1
    %16 = vsyncpa %s15, 0
    loop: start=0, step=1, limit=4
    $region2: #{tpu_custom_call.1} parent=1 // loop_pre_header
      _
    $region3: #{tpu_custom_call.1} parent=1 // loop_header
      %s18 = sphi 0, %s22
      %p19 = scmp.ge.s32.totalorder %s18, 4
      %s28 = sphi 0, %s30
      %s31 = sphi 0, %s28
      %s32 = sphi 0, %s31
      %s48 = sphi 0, %s32
      %s52 = sphi 0, %s52
      %s54 = sphi 0, %s52
      %s55 = sphi 0, %s54
      %s69 = sphi 0, %s55
      %s73 = sphi 0, %s73
      %s75 = sphi 0, %s73
      %s76 = sphi 0, %s75
      %s90 = sphi 0, %s76
      %s94 = sphi 0, %s94
      %s96 = sphi 0, %s94
      %s97 = sphi 0, %s96
      %s111 = sphi 0, %s97
      %s115 = sphi 0, %s115
      %s117 = sphi 0, %s115
      %s118 = sphi 0, %s117
      %s132 = sphi 0, %s118
      %s138 = sphi 0, %s140
      %s141 = sphi 0, %s138
      %s142 = sphi 0, %s141
      %s158 = sphi 0, %s142
    $region4: #{tpu_custom_call.1} parent=1 // loop_header_branch
      %21 = sbr.rel (%p19) target = $region8
    $region5: #{tpu_custom_call.1} parent=1 // loop_body
      %s23 = ssub.s32 %s18, 1
      %s24 = ssub.s32 %s18, 2
      %s25 = sadd.s32 %s18, 1
      %s26 = ssub.s32 %s18, %s25
      %p27 = scmp.eq.s32.totalorder %s26, 0
      %s29 = sadd.s32 %s28, 1
      %s30 = scalar_select %p27, %s28, %s29
      %p33 = pneg %p27
      %p34 = scmp.eq.s32.totalorder %s18, 1
      %p35 = por %p33, %p34
      %p36 = scmp.ne.s32.totalorder %s28, %s31
      %p37 = scmp.eq.s32.totalorder %s18, 0
      %p38 = por %p36, %p37
      %p39 = scmp.ne.s32.totalorder %s28, %s31
      %p40 = scmp.eq.s32.totalorder %s23, 1
      %p41 = por %p39, %p40
      %p42 = scmp.ne.s32.totalorder %s31, %s32
      %p43 = scmp.eq.s32.totalorder %s23, 0
      %p44 = por %p42, %p43
      %p45 = scmp.ne.s32.totalorder %s31, %s32
      %p46 = scmp.eq.s32.totalorder %s24, 1
      %p47 = por %p45, %p46
      %p49 = scmp.ne.s32.totalorder %s32, %s48
      %p50 = scmp.eq.s32.totalorder %s24, 0
      %p51 = por %p49, %p50
      %s53 = sadd.s32 %s52, 1
      %p56 = scmp.eq.s32.totalorder %s18, 1
      %p57 = scmp.ne.s32.totalorder %s52, %s54
      %p58 = scmp.eq.s32.totalorder %s18, 0
      %p59 = por %p57, %p58
      %p60 = scmp.ne.s32.totalorder %s52, %s54
      %p61 = scmp.eq.s32.totalorder %s23, 1
      %p62 = por %p60, %p61
      %p63 = scmp.ne.s32.totalorder %s54, %s55
      %p64 = scmp.eq.s32.totalorder %s23, 0
      %p65 = por %p63, %p64
      %p66 = scmp.ne.s32.totalorder %s54, %s55
      %p67 = scmp.eq.s32.totalorder %s24, 1
      %p68 = por %p66, %p67
      %p70 = scmp.ne.s32.totalorder %s55, %s69
      %p71 = scmp.eq.s32.totalorder %s24, 0
      %p72 = por %p70, %p71
      %s74 = sadd.s32 %s73, 1
      %p77 = scmp.eq.s32.totalorder %s18, 1
      %p78 = scmp.ne.s32.totalorder %s73, %s75
      %p79 = scmp.eq.s32.totalorder %s18, 0
      %p80 = por %p78, %p79
      %p81 = scmp.ne.s32.totalorder %s73, %s75
      %p82 = scmp.eq.s32.totalorder %s23, 1
      %p83 = por %p81, %p82
      %p84 = scmp.ne.s32.totalorder %s75, %s76
      %p85 = scmp.eq.s32.totalorder %s23, 0
      %p86 = por %p84, %p85
      %p87 = scmp.ne.s32.totalorder %s75, %s76
      %p88 = scmp.eq.s32.totalorder %s24, 1
      %p89 = por %p87, %p88
      %p91 = scmp.ne.s32.totalorder %s76, %s90
      %p92 = scmp.eq.s32.totalorder %s24, 0
      %p93 = por %p91, %p92
      %s95 = sadd.s32 %s94, 1
      %p98 = scmp.eq.s32.totalorder %s18, 1
      %p99 = scmp.ne.s32.totalorder %s94, %s96
      %p100 = scmp.eq.s32.totalorder %s18, 0
      %p101 = por %p99, %p100
      %p102 = scmp.ne.s32.totalorder %s94, %s96
      %p103 = scmp.eq.s32.totalorder %s23, 1
      %p104 = por %p102, %p103
      %p105 = scmp.ne.s32.totalorder %s96, %s97
      %p106 = scmp.eq.s32.totalorder %s23, 0
      %p107 = por %p105, %p106
      %p108 = scmp.ne.s32.totalorder %s96, %s97
      %p109 = scmp.eq.s32.totalorder %s24, 1
      %p110 = por %p108, %p109
      %p112 = scmp.ne.s32.totalorder %s97, %s111
      %p113 = scmp.eq.s32.totalorder %s24, 0
      %p114 = por %p112, %p113
      %s116 = sadd.s32 %s115, 1
      %p119 = scmp.eq.s32.totalorder %s18, 1
      %p120 = scmp.ne.s32.totalorder %s115, %s117
      %p121 = scmp.eq.s32.totalorder %s18, 0
      %p122 = por %p120, %p121
      %p123 = scmp.ne.s32.totalorder %s115, %s117
      %p124 = scmp.eq.s32.totalorder %s23, 1
      %p125 = por %p123, %p124
      %p126 = scmp.ne.s32.totalorder %s117, %s118
      %p127 = scmp.eq.s32.totalorder %s23, 0
      %p128 = por %p126, %p127
      %p129 = scmp.ne.s32.totalorder %s117, %s118
      %p130 = scmp.eq.s32.totalorder %s24, 1
      %p131 = por %p129, %p130
      %p133 = scmp.ne.s32.totalorder %s118, %s132
      %p134 = scmp.eq.s32.totalorder %s24, 0
      %p135 = por %p133, %p134
      %s136 = ssub.s32 %s18, %s25
      %p137 = scmp.eq.s32.totalorder %s136, 0
      %s139 = sadd.s32 %s138, 1
      %s140 = scalar_select %p137, %s138, %s139
      %p143 = pneg %p137
      %p144 = scmp.eq.s32.totalorder %s18, 1
      %p145 = por %p143, %p144
      %p146 = scmp.ne.s32.totalorder %s138, %s141
      %p147 = scmp.eq.s32.totalorder %s18, 0
      %p148 = por %p146, %p147
      %p149 = scmp.ne.s32.totalorder %s138, %s141
      %p150 = scmp.eq.s32.totalorder %s23, 1
      %p151 = por %p149, %p150
      %p152 = scmp.ne.s32.totalorder %s141, %s142
      %p153 = scmp.eq.s32.totalorder %s23, 0
      %p154 = por %p152, %p153
      %p155 = scmp.ne.s32.totalorder %s141, %s142
      %p156 = scmp.eq.s32.totalorder %s24, 1
      %p157 = por %p155, %p156
      %p159 = scmp.ne.s32.totalorder %s142, %s158
      %p160 = scmp.eq.s32.totalorder %s24, 0
      %p161 = por %p159, %p160
      %p162 = scmp.le.s32.totalorder 1, %s18
      %p163 = scmp.lt.s32.totalorder %s18, 3
      %p164 = pnand %p162, %p163
      %p165 = pneg %p164
      // Predicated region
      $region9: #{tpu_custom_call.1} parent=5 // pred_check
        _
      $region10: #{tpu_custom_call.1} parent=5 // pred_check_branch
        %167 = sbr.rel (%p164) target = $region12
      $region11: #{tpu_custom_call.1} parent=5 // pred_region
        %s168 = ssub.s32 %s18, 1
        // Predicated region
        $region13: #{tpu_custom_call.1} parent=11 // pred_check
          %p169 = pneg %p65
        $region14: #{tpu_custom_call.1} parent=11 // pred_check_branch
          %171 = sbr.rel (%p169) target = $region16
        $region15: #{tpu_custom_call.1} parent=11 // pred_region
          %s173 = ssub.s32 2304, 2304
          %174 = vsyncadd [#allocation7], %s173
          %s175 = sshll.u32 [#allocation6], 4
          %s176 = int_to_ptr.vmem [resolvable:$true] %s175
          %181 = dma.hbm_to_vmem [thread:$0]  %s1, 2304, %s176, [#allocation7], 64, 64, 4
        $region16: #{tpu_custom_call.1} parent=11 // pred_fallthru
          _
        // Predicated region
        $region17: #{tpu_custom_call.1} parent=11 // pred_check
          %p182 = pneg %p86
        $region18: #{tpu_custom_call.1} parent=11 // pred_check_branch
          %184 = sbr.rel (%p182) target = $region20
        $region19: #{tpu_custom_call.1} parent=11 // pred_region
          _
        $region20: #{tpu_custom_call.1} parent=11 // pred_fallthru
          _
        // Predicated region
        $region21: #{tpu_custom_call.1} parent=11 // pred_check
          %p185 = pneg %p107
        $region22: #{tpu_custom_call.1} parent=11 // pred_check_branch
          %187 = sbr.rel (%p185) target = $region24
        $region23: #{tpu_custom_call.1} parent=11 // pred_region
          %s189 = ssub.s32 1024, 1024
          %190 = vsyncadd [#allocation7], %s189
          %s191 = sshll.u32 [#allocation8], 4
          %s192 = int_to_ptr.vmem [resolvable:$true] %s191
          %197 = dma.hbm_to_vmem [thread:$0]  %s3, 1024, %s192, [#allocation7], 128, 128, 8
        $region24: #{tpu_custom_call.1} parent=11 // pred_fallthru
          _
        // Predicated region
        $region25: #{tpu_custom_call.1} parent=11 // pred_check
          %p198 = pneg %p128
        $region26: #{tpu_custom_call.1} parent=11 // pred_check_branch
          %200 = sbr.rel (%p198) target = $region28
        $region27: #{tpu_custom_call.1} parent=11 // pred_region
          _
        $region28: #{tpu_custom_call.1} parent=11 // pred_fallthru
          _
      $region12: #{tpu_custom_call.1} parent=5 // pred_fallthru
        _
      %p201 = scmp.lt.s32.totalorder %s18, 2
      // Predicated region
      $region29: #{tpu_custom_call.1} parent=5 // pred_check
        %p202 = pneg %p201
      $region30: #{tpu_custom_call.1} parent=5 // pred_check_branch
        %204 = sbr.rel (%p202) target = $region32
      $region31: #{tpu_custom_call.1} parent=5 // pred_region
        // Predicated region
        $region33: #{tpu_custom_call.1} parent=31 // pred_check
          %p205 = pneg %p38
        $region34: #{tpu_custom_call.1} parent=31 // pred_check_branch
          %207 = sbr.rel (%p205) target = $region36
        $region35: #{tpu_custom_call.1} parent=31 // pred_region
          %s208 = sand.u32 %s28, 1
          %s209 = scalar_lea.sflag [#allocation4], %s208
          %s210 = sand.u32 %s28, 1
          %s211 = smul.addr %s210, 128
          %s212 = scalar_lea.vmem [#allocation3], %s211
          %s214 = ssub.s32 2048, 2048
          %215 = vsyncadd %s209, %s214
          %s216 = smul.addr %s18, 32
          %s217 = smul.addr %s216, 64
          %s218 = scalar_lea.hbm %s0, %s217
          %s219 = sshll.u32 %s212, 4
          %s220 = int_to_ptr.vmem [resolvable:$true] %s219
          %225 = dma.hbm_to_vmem [thread:$0]  %s218, 2048, %s220, %s209, 64, 64, 4
        $region36: #{tpu_custom_call.1} parent=31 // pred_fallthru
          _
      $region32: #{tpu_custom_call.1} parent=5 // pred_fallthru
        _
      %p226 = scmp.le.s32.totalorder 1, %s18
      %p227 = scmp.lt.s32.totalorder %s18, 3
      %p228 = pnand %p226, %p227
      %p229 = pneg %p228
      // Predicated region
      $region37: #{tpu_custom_call.1} parent=5 // pred_check
        _
      $region38: #{tpu_custom_call.1} parent=5 // pred_check_branch
        %231 = sbr.rel (%p228) target = $region40
      $region39: #{tpu_custom_call.1} parent=5 // pred_region
        %s232 = ssub.s32 %s18, 1
        %s233 = sand.u32 %s31, 1
        %s234 = scalar_lea.sflag [#allocation4], %s233
        %s235 = sand.u32 %s31, 1
        %s236 = smul.addr %s235, 128
        %s237 = scalar_lea.vmem [#allocation3], %s236
        // Predicated region
        $region41: #{tpu_custom_call.1} parent=39 // pred_check
          %p238 = pneg %p44
        $region42: #{tpu_custom_call.1} parent=39 // pred_check_branch
          %240 = sbr.rel (%p238) target = $region44
        $region43: #{tpu_custom_call.1} parent=39 // pred_region
          %241 = dma.done %s234, 2048
        $region44: #{tpu_custom_call.1} parent=39 // pred_fallthru
          _
        // Predicated region
        $region45: #{tpu_custom_call.1} parent=39 // pred_check
          %p242 = pneg %p65
        $region46: #{tpu_custom_call.1} parent=39 // pred_check_branch
          %244 = sbr.rel (%p242) target = $region48
        $region47: #{tpu_custom_call.1} parent=39 // pred_region
          %245 = dma.done [#allocation7], 2304
        $region48: #{tpu_custom_call.1} parent=39 // pred_fallthru
          _
        // Predicated region
        $region49: #{tpu_custom_call.1} parent=39 // pred_check
          %p246 = pneg %p107
        $region50: #{tpu_custom_call.1} parent=39 // pred_check_branch
          %248 = sbr.rel (%p246) target = $region52
        $region51: #{tpu_custom_call.1} parent=39 // pred_region
          %249 = dma.done [#allocation7], 1024
        $region52: #{tpu_custom_call.1} parent=39 // pred_fallthru
          _
        %s250 = sand.u32 %s31, 1
        %s251 = scalar_lea.sflag [#allocation4], %s250
        %s252 = sand.u32 %s31, 1
        %s253 = smul.addr %s252, 128
        %s254 = scalar_lea.vmem [#allocation3], %s253
        %p255 = pneg %p44
        %p256 = pneg %p41
        %p257 = pneg %p65
        %p258 = pneg %p62
        %p259 = pneg %p86
        %p260 = pneg %p83
        %p261 = pneg %p107
        %p262 = pneg %p104
        %p263 = pneg %p128
        %p264 = pneg %p125
        %p265 = pneg %p154
        %p266 = pneg %p151
        %s267 = sand.u32 %s141, 1
        %s268 = scalar_lea.sflag [#allocation5], %s267
        %s269 = sand.u32 %s141, 1
        %s270 = smul.addr %s269, 512
        %s271 = scalar_lea.vmem [#allocation9], %s270
        %vm273 = vcmask 257024
        %274 = vst.msk [vmem:[#allocation2] sm:$0xf] %vm273, 0
        %275 = vst.msk [vmem:[#allocation2 + $0x4] sm:$0xf] %vm273, 0
        %vm276 = vcmask 253952
        %277 = vst.msk [vmem:[#allocation2 + $0x8] sm:$0x1] %vm276, 0
        %278 = vst.msk [vmem:[#allocation2 + $0xc] sm:$0xf] %vm273, 0
        %279 = vst.msk [vmem:[#allocation2 + $0x10] sm:$0xf] %vm273, 0
        %280 = vst.msk [vmem:[#allocation2 + $0x14] sm:$0x1] %vm276, 0
        %281 = vst.msk [vmem:[#allocation2 + $0x18] sm:$0xf] %vm273, 0
        %282 = vst.msk [vmem:[#allocation2 + $0x1c] sm:$0xf] %vm273, 0
        %283 = vst.msk [vmem:[#allocation2 + $0x20] sm:$0x1] %vm276, 0
        %284 = vst.msk [vmem:[#allocation2 + $0x24] sm:$0xf] %vm273, 0
        %285 = vst.msk [vmem:[#allocation2 + $0x28] sm:$0xf] %vm273, 0
        %286 = vst.msk [vmem:[#allocation2 + $0x2c] sm:$0x1] %vm276, 0
        %287 = vst.msk [vmem:[#allocation2 + $0x30] sm:$0xf] %vm273, 0
        %288 = vst.msk [vmem:[#allocation2 + $0x34] sm:$0xf] %vm273, 0
        %289 = vst.msk [vmem:[#allocation2 + $0x38] sm:$0x1] %vm276, 0
        %290 = vst.msk [vmem:[#allocation2 + $0x3c] sm:$0xf] %vm273, 0
        %291 = vst.msk [vmem:[#allocation2 + $0x40] sm:$0xf] %vm273, 0
        %292 = vst.msk [vmem:[#allocation2 + $0x44] sm:$0x1] %vm276, 0
        %293 = vst.msk [vmem:[#allocation2 + $0x48] sm:$0xf] %vm273, 0
        %294 = vst.msk [vmem:[#allocation2 + $0x4c] sm:$0xf] %vm273, 0
        %295 = vst.msk [vmem:[#allocation2 + $0x50] sm:$0x1] %vm276, 0
        %296 = vst.msk [vmem:[#allocation2 + $0x54] sm:$0xf] %vm273, 0
        %297 = vst.msk [vmem:[#allocation2 + $0x58] sm:$0xf] %vm273, 0
        %298 = vst.msk [vmem:[#allocation2 + $0x5c] sm:$0x1] %vm276, 0
        %299 = vst.msk [vmem:[#allocation2 + $0x60] sm:$0xf] %vm273, 0
        %300 = vst.msk [vmem:[#allocation2 + $0x64] sm:$0xf] %vm273, 0
        %301 = vst.msk [vmem:[#allocation2 + $0x68] sm:$0x1] %vm276, 0
        %302 = vst.msk [vmem:[#allocation2 + $0x6c] sm:$0xf] %vm273, 0
        %303 = vst.msk [vmem:[#allocation2 + $0x70] sm:$0xf] %vm273, 0
        %304 = vst.msk [vmem:[#allocation2 + $0x74] sm:$0x1] %vm276, 0
        %305 = vst.msk [vmem:[#allocation2 + $0x78] sm:$0xf] %vm273, 0
        %306 = vst.msk [vmem:[#allocation2 + $0x7c] sm:$0xf] %vm273, 0
        %307 = vst.msk [vmem:[#allocation2 + $0x80] sm:$0x1] %vm276, 0
        %308 = vst.msk [vmem:[#allocation2 + $0x84] sm:$0xf] %vm273, 0
        %309 = vst.msk [vmem:[#allocation2 + $0x88] sm:$0xf] %vm273, 0
        %310 = vst.msk [vmem:[#allocation2 + $0x8c] sm:$0x1] %vm276, 0
        %311 = vst.msk [vmem:[#allocation2 + $0x90] sm:$0xf] %vm273, 0
        %312 = vst.msk [vmem:[#allocation2 + $0x94] sm:$0xf] %vm273, 0
        %313 = vst.msk [vmem:[#allocation2 + $0x98] sm:$0x1] %vm276, 0
        %314 = vst.msk [vmem:[#allocation2 + $0x9c] sm:$0xf] %vm273, 0
        %315 = vst.msk [vmem:[#allocation2 + $0xa0] sm:$0xf] %vm273, 0
        %316 = vst.msk [vmem:[#allocation2 + $0xa4] sm:$0x1] %vm276, 0
        %317 = vst.msk [vmem:[#allocation2 + $0xa8] sm:$0xf] %vm273, 0
        %318 = vst.msk [vmem:[#allocation2 + $0xac] sm:$0xf] %vm273, 0
        %319 = vst.msk [vmem:[#allocation2 + $0xb0] sm:$0x1] %vm276, 0
        %320 = vst.msk [vmem:[#allocation2 + $0xb4] sm:$0xf] %vm273, 0
        %321 = vst.msk [vmem:[#allocation2 + $0xb8] sm:$0xf] %vm273, 0
        %322 = vst.msk [vmem:[#allocation2 + $0xbc] sm:$0x1] %vm276, 0
        %323 = vst.msk [vmem:[#allocation2 + $0xc0] sm:$0xf] %vm273, 0
        %324 = vst.msk [vmem:[#allocation2 + $0xc4] sm:$0xf] %vm273, 0
        %325 = vst.msk [vmem:[#allocation2 + $0xc8] sm:$0x1] %vm276, 0
        %326 = vst.msk [vmem:[#allocation2 + $0xcc] sm:$0xf] %vm273, 0
        %327 = vst.msk [vmem:[#allocation2 + $0xd0] sm:$0xf] %vm273, 0
        %328 = vst.msk [vmem:[#allocation2 + $0xd4] sm:$0x1] %vm276, 0
        %v329 = vld [vmem:[%s237] sm:$0xf]
        %v330 = vld [vmem:[%s237 + $0x4] sm:$0xf]
        %v331 = vld [vmem:[%s237 + $0x8] sm:$0xf]
        %v332 = vld [vmem:[%s237 + $0xc] sm:$0xf]
        %v333 = vld [vmem:[%s237 + $0x10] sm:$0xf]
        %v334 = vld [vmem:[%s237 + $0x14] sm:$0xf]
        %v335 = vld [vmem:[%s237 + $0x18] sm:$0xf]
        %v336 = vld [vmem:[%s237 + $0x1c] sm:$0xf]
        %v337 = vld [vmem:[%s237 + $0x20] sm:$0xf]
        %v338 = vld [vmem:[%s237 + $0x24] sm:$0xf]
        %v339 = vld [vmem:[%s237 + $0x28] sm:$0xf]
        %v340 = vld [vmem:[%s237 + $0x2c] sm:$0xf]
        %v341 = vld [vmem:[%s237 + $0x30] sm:$0xf]
        %v342 = vld [vmem:[%s237 + $0x34] sm:$0xf]
        %v343 = vld [vmem:[%s237 + $0x38] sm:$0xf]
        %v344 = vld [vmem:[%s237 + $0x3c] sm:$0xf]
        %v345 = vld [vmem:[%s237 + $0x40] sm:$0xf]
        %v346 = vld [vmem:[%s237 + $0x44] sm:$0xf]
        %v347 = vld [vmem:[%s237 + $0x48] sm:$0xf]
        %v348 = vld [vmem:[%s237 + $0x4c] sm:$0xf]
        %v349 = vld [vmem:[%s237 + $0x50] sm:$0xf]
        %v350 = vld [vmem:[%s237 + $0x54] sm:$0xf]
        %v351 = vld [vmem:[%s237 + $0x58] sm:$0xf]
        %v352 = vld [vmem:[%s237 + $0x5c] sm:$0xf]
        %v353 = vld [vmem:[%s237 + $0x60] sm:$0xf]
        %v354 = vld [vmem:[%s237 + $0x64] sm:$0xf]
        %v355 = vld [vmem:[%s237 + $0x68] sm:$0xf]
        %v356 = vld [vmem:[%s237 + $0x6c] sm:$0xf]
        %v357 = vld [vmem:[%s237 + $0x70] sm:$0xf]
        %v358 = vld [vmem:[%s237 + $0x74] sm:$0xf]
        %v359 = vld [vmem:[%s237 + $0x78] sm:$0xf]
        %v360 = vld [vmem:[%s237 + $0x7c] sm:$0xf]
        %vm361 = vsmask.f32 256
        %vm362 = vsmask.f32 4368
        %vm363 = vmor %vm361, %vm362
        %v365 = vshrl.u32 %v329, 16
        %v367 = vrot.slane %v365, 7
        %v368 = vshll.u32 %v329, 16
        %v370 = vor.u32 %v367, %v368
        %v371 = vrot.slane %v367, 4
        %v373 = vshrl.u32 %v330, 16
        %v375 = vrot.slane %v373, 7
        %v376 = vshll.u32 %v330, 16
        %v378 = vor.u32 %v375, %v376
        %v379 = vsel %vm363, %v371, %v378
        %v380 = vrot.slane %v375, 4
        %v382 = vshrl.u32 %v331, 16
        %v384 = vrot.slane %v382, 7
        %v385 = vshll.u32 %v331, 16
        %v387 = vor.u32 %v384, %v385
        %v388 = vrot.slane %v384, 4
        %v390 = vshrl.u32 %v332, 16
        %v392 = vrot.slane %v390, 7
        %v393 = vshll.u32 %v332, 16
        %v395 = vor.u32 %v392, %v393
        %v396 = vsel %vm363, %v388, %v395
        %v397 = vrot.slane %v392, 4
        %v399 = vshrl.u32 %v333, 16
        %v401 = vrot.slane %v399, 7
        %v402 = vshll.u32 %v333, 16
        %v404 = vor.u32 %v401, %v402
        %v405 = vrot.slane %v401, 4
        %v407 = vshrl.u32 %v334, 16
        %v409 = vrot.slane %v407, 7
        %v410 = vshll.u32 %v334, 16
        %v412 = vor.u32 %v409, %v410
        %v413 = vsel %vm363, %v405, %v412
        %v414 = vrot.slane %v409, 4
        %v416 = vshrl.u32 %v335, 16
        %v418 = vrot.slane %v416, 7
        %v419 = vshll.u32 %v335, 16
        %v421 = vor.u32 %v418, %v419
        %v422 = vrot.slane %v418, 4
        %v424 = vshrl.u32 %v336, 16
        %v426 = vrot.slane %v424, 7
        %v427 = vshll.u32 %v336, 16
        %v429 = vor.u32 %v426, %v427
        %v430 = vsel %vm363, %v422, %v429
        %v431 = vrot.slane %v426, 4
        %v433 = vshrl.u32 %v337, 16
        %v435 = vrot.slane %v433, 7
        %v436 = vshll.u32 %v337, 16
        %v438 = vor.u32 %v435, %v436
        %v439 = vrot.slane %v435, 4
        %v441 = vshrl.u32 %v338, 16
        %v443 = vrot.slane %v441, 7
        %v444 = vshll.u32 %v338, 16
        %v446 = vor.u32 %v443, %v444
        %v447 = vsel %vm363, %v439, %v446
        %v448 = vrot.slane %v443, 4
        %v450 = vshrl.u32 %v339, 16
        %v452 = vrot.slane %v450, 7
        %v453 = vshll.u32 %v339, 16
        %v455 = vor.u32 %v452, %v453
        %v456 = vrot.slane %v452, 4
        %v458 = vshrl.u32 %v340, 16
        %v460 = vrot.slane %v458, 7
        %v461 = vshll.u32 %v340, 16
        %v463 = vor.u32 %v460, %v461
        %v464 = vsel %vm363, %v456, %v463
        %v465 = vrot.slane %v460, 4
        %v467 = vshrl.u32 %v341, 16
        %v469 = vrot.slane %v467, 7
        %v470 = vshll.u32 %v341, 16
        %v472 = vor.u32 %v469, %v470
        %v473 = vrot.slane %v469, 4
        %v475 = vshrl.u32 %v342, 16
        %v477 = vrot.slane %v475, 7
        %v478 = vshll.u32 %v342, 16
        %v480 = vor.u32 %v477, %v478
        %v481 = vsel %vm363, %v473, %v480
        %v482 = vrot.slane %v477, 4
        %v484 = vshrl.u32 %v343, 16
        %v486 = vrot.slane %v484, 7
        %v487 = vshll.u32 %v343, 16
        %v489 = vor.u32 %v486, %v487
        %v490 = vrot.slane %v486, 4
        %v492 = vshrl.u32 %v344, 16
        %v494 = vrot.slane %v492, 7
        %v495 = vshll.u32 %v344, 16
        %v497 = vor.u32 %v494, %v495
        %v498 = vsel %vm363, %v490, %v497
        %v499 = vrot.slane %v494, 4
        %v501 = vshrl.u32 %v345, 16
        %v503 = vrot.slane %v501, 7
        %v504 = vshll.u32 %v345, 16
        %v506 = vor.u32 %v503, %v504
        %v507 = vrot.slane %v503, 4
        %v509 = vshrl.u32 %v346, 16
        %v511 = vrot.slane %v509, 7
        %v512 = vshll.u32 %v346, 16
        %v514 = vor.u32 %v511, %v512
        %v515 = vsel %vm363, %v507, %v514
        %v516 = vrot.slane %v511, 4
        %v518 = vshrl.u32 %v347, 16
        %v520 = vrot.slane %v518, 7
        %v521 = vshll.u32 %v347, 16
        %v523 = vor.u32 %v520, %v521
        %v524 = vrot.slane %v520, 4
        %v526 = vshrl.u32 %v348, 16
        %v528 = vrot.slane %v526, 7
        %v529 = vshll.u32 %v348, 16
        %v531 = vor.u32 %v528, %v529
        %v532 = vsel %vm363, %v524, %v531
        %v533 = vrot.slane %v528, 4
        %v535 = vshrl.u32 %v349, 16
        %v537 = vrot.slane %v535, 7
        %v538 = vshll.u32 %v349, 16
        %v540 = vor.u32 %v537, %v538
        %v541 = vrot.slane %v537, 4
        %v543 = vshrl.u32 %v350, 16
        %v545 = vrot.slane %v543, 7
        %v546 = vshll.u32 %v350, 16
        %v548 = vor.u32 %v545, %v546
        %v549 = vsel %vm363, %v541, %v548
        %v550 = vrot.slane %v545, 4
        %v552 = vshrl.u32 %v351, 16
        %v554 = vrot.slane %v552, 7
        %v555 = vshll.u32 %v351, 16
        %v557 = vor.u32 %v554, %v555
        %v558 = vrot.slane %v554, 4
        %v560 = vshrl.u32 %v352, 16
        %v562 = vrot.slane %v560, 7
        %v563 = vshll.u32 %v352, 16
        %v565 = vor.u32 %v562, %v563
        %v566 = vsel %vm363, %v558, %v565
        %v567 = vrot.slane %v562, 4
        %v569 = vshrl.u32 %v353, 16
        %v571 = vrot.slane %v569, 7
        %v572 = vshll.u32 %v353, 16
        %v574 = vor.u32 %v571, %v572
        %v575 = vrot.slane %v571, 4
        %v577 = vshrl.u32 %v354, 16
        %v579 = vrot.slane %v577, 7
        %v580 = vshll.u32 %v354, 16
        %v582 = vor.u32 %v579, %v580
        %v583 = vsel %vm363, %v575, %v582
        %v584 = vrot.slane %v579, 4
        %v586 = vshrl.u32 %v355, 16
        %v588 = vrot.slane %v586, 7
        %v589 = vshll.u32 %v355, 16
        %v591 = vor.u32 %v588, %v589
        %v592 = vrot.slane %v588, 4
        %v594 = vshrl.u32 %v356, 16
        %v596 = vrot.slane %v594, 7
        %v597 = vshll.u32 %v356, 16
        %v599 = vor.u32 %v596, %v597
        %v600 = vsel %vm363, %v592, %v599
        %v601 = vrot.slane %v596, 4
        %v603 = vshrl.u32 %v357, 16
        %v605 = vrot.slane %v603, 7
        %v606 = vshll.u32 %v357, 16
        %v608 = vor.u32 %v605, %v606
        %v609 = vrot.slane %v605, 4
        %v611 = vshrl.u32 %v358, 16
        %v613 = vrot.slane %v611, 7
        %v614 = vshll.u32 %v358, 16
        %v616 = vor.u32 %v613, %v614
        %v617 = vsel %vm363, %v609, %v616
        %v618 = vrot.slane %v613, 4
        %v620 = vshrl.u32 %v359, 16
        %v622 = vrot.slane %v620, 7
        %v623 = vshll.u32 %v359, 16
        %v625 = vor.u32 %v622, %v623
        %v626 = vrot.slane %v622, 4
        %v628 = vshrl.u32 %v360, 16
        %v630 = vrot.slane %v628, 7
        %v631 = vshll.u32 %v360, 16
        %v633 = vor.u32 %v630, %v631
        %v634 = vsel %vm363, %v626, %v633
        %v635 = vrot.slane %v630, 4
        %s684 = scalar_lea.vmem [#allocation2], 12
        %vm685 = vcmask 257024
        %vm686 = vsmask.f32 7938
        %vm687 = vmand %vm685, %vm686
        %v688 = vld [vmem:[%s684] sm:$0xf]
        %v689 = vsel %vm687, %v370, %v688
        %690 = vst [vmem:[%s684] sm:$0xf] %v689
        %691 = vst.msk [vmem:[%s684 + $0x4] sm:$0xf] %vm273, %v379
        %vm692 = vcmask 253952
        %vm693 = vmand %vm692, %vm361
        %v694 = vld [vmem:[%s684 + $0x8] sm:$0x1]
        %v695 = vsel %vm693, %v380, %v694
        %696 = vst [vmem:[%s684 + $0x8] sm:$0x1] %v695
        %v697 = vld [vmem:[%s684 + $0xc] sm:$0xf]
        %v698 = vsel %vm687, %v387, %v697
        %699 = vst [vmem:[%s684 + $0xc] sm:$0xf] %v698
        %700 = vst.msk [vmem:[%s684 + $0x10] sm:$0xf] %vm273, %v396
        %v701 = vld [vmem:[%s684 + $0x14] sm:$0x1]
        %v702 = vsel %vm693, %v397, %v701
        %703 = vst [vmem:[%s684 + $0x14] sm:$0x1] %v702
        %v704 = vld [vmem:[%s684 + $0x18] sm:$0xf]
        %v705 = vsel %vm687, %v404, %v704
        %706 = vst [vmem:[%s684 + $0x18] sm:$0xf] %v705
        %707 = vst.msk [vmem:[%s684 + $0x1c] sm:$0xf] %vm273, %v413
        %v708 = vld [vmem:[%s684 + $0x20] sm:$0x1]
        %v709 = vsel %vm693, %v414, %v708
        %710 = vst [vmem:[%s684 + $0x20] sm:$0x1] %v709
        %v711 = vld [vmem:[%s684 + $0x24] sm:$0xf]
        %v712 = vsel %vm687, %v421, %v711
        %713 = vst [vmem:[%s684 + $0x24] sm:$0xf] %v712
        %714 = vst.msk [vmem:[%s684 + $0x28] sm:$0xf] %vm273, %v430
        %v715 = vld [vmem:[%s684 + $0x2c] sm:$0x1]
        %v716 = vsel %vm693, %v431, %v715
        %717 = vst [vmem:[%s684 + $0x2c] sm:$0x1] %v716
        %v718 = vld [vmem:[%s684 + $0x30] sm:$0xf]
        %v719 = vsel %vm687, %v438, %v718
        %720 = vst [vmem:[%s684 + $0x30] sm:$0xf] %v719
        %721 = vst.msk [vmem:[%s684 + $0x34] sm:$0xf] %vm273, %v447
        %v722 = vld [vmem:[%s684 + $0x38] sm:$0x1]
        %v723 = vsel %vm693, %v448, %v722
        %724 = vst [vmem:[%s684 + $0x38] sm:$0x1] %v723
        %v725 = vld [vmem:[%s684 + $0x3c] sm:$0xf]
        %v726 = vsel %vm687, %v455, %v725
        %727 = vst [vmem:[%s684 + $0x3c] sm:$0xf] %v726
        %728 = vst.msk [vmem:[%s684 + $0x40] sm:$0xf] %vm273, %v464
        %v729 = vld [vmem:[%s684 + $0x44] sm:$0x1]
        %v730 = vsel %vm693, %v465, %v729
        %731 = vst [vmem:[%s684 + $0x44] sm:$0x1] %v730
        %v732 = vld [vmem:[%s684 + $0x48] sm:$0xf]
        %v733 = vsel %vm687, %v472, %v732
        %734 = vst [vmem:[%s684 + $0x48] sm:$0xf] %v733
        %735 = vst.msk [vmem:[%s684 + $0x4c] sm:$0xf] %vm273, %v481
        %v736 = vld [vmem:[%s684 + $0x50] sm:$0x1]
        %v737 = vsel %vm693, %v482, %v736
        %738 = vst [vmem:[%s684 + $0x50] sm:$0x1] %v737
        %v739 = vld [vmem:[%s684 + $0x54] sm:$0xf]
        %v740 = vsel %vm687, %v489, %v739
        %741 = vst [vmem:[%s684 + $0x54] sm:$0xf] %v740
        %742 = vst.msk [vmem:[%s684 + $0x58] sm:$0xf] %vm273, %v498
        %v743 = vld [vmem:[%s684 + $0x5c] sm:$0x1]
        %v744 = vsel %vm693, %v499, %v743
        %745 = vst [vmem:[%s684 + $0x5c] sm:$0x1] %v744
        %v746 = vld [vmem:[%s684 + $0x60] sm:$0xf]
        %v747 = vsel %vm687, %v506, %v746
        %748 = vst [vmem:[%s684 + $0x60] sm:$0xf] %v747
        %749 = vst.msk [vmem:[%s684 + $0x64] sm:$0xf] %vm273, %v515
        %v750 = vld [vmem:[%s684 + $0x68] sm:$0x1]
        %v751 = vsel %vm693, %v516, %v750
        %752 = vst [vmem:[%s684 + $0x68] sm:$0x1] %v751
        %v753 = vld [vmem:[%s684 + $0x6c] sm:$0xf]
        %v754 = vsel %vm687, %v523, %v753
        %755 = vst [vmem:[%s684 + $0x6c] sm:$0xf] %v754
        %756 = vst.msk [vmem:[%s684 + $0x70] sm:$0xf] %vm273, %v532
        %v757 = vld [vmem:[%s684 + $0x74] sm:$0x1]
        %v758 = vsel %vm693, %v533, %v757
        %759 = vst [vmem:[%s684 + $0x74] sm:$0x1] %v758
        %v760 = vld [vmem:[%s684 + $0x78] sm:$0xf]
        %v761 = vsel %vm687, %v540, %v760
        %762 = vst [vmem:[%s684 + $0x78] sm:$0xf] %v761
        %763 = vst.msk [vmem:[%s684 + $0x7c] sm:$0xf] %vm273, %v549
        %v764 = vld [vmem:[%s684 + $0x80] sm:$0x1]
        %v765 = vsel %vm693, %v550, %v764
        %766 = vst [vmem:[%s684 + $0x80] sm:$0x1] %v765
        %v767 = vld [vmem:[%s684 + $0x84] sm:$0xf]
        %v768 = vsel %vm687, %v557, %v767
        %769 = vst [vmem:[%s684 + $0x84] sm:$0xf] %v768
        %770 = vst.msk [vmem:[%s684 + $0x88] sm:$0xf] %vm273, %v566
        %v771 = vld [vmem:[%s684 + $0x8c] sm:$0x1]
        %v772 = vsel %vm693, %v567, %v771
        %773 = vst [vmem:[%s684 + $0x8c] sm:$0x1] %v772
        %v774 = vld [vmem:[%s684 + $0x90] sm:$0xf]
        %v775 = vsel %vm687, %v574, %v774
        %776 = vst [vmem:[%s684 + $0x90] sm:$0xf] %v775
        %777 = vst.msk [vmem:[%s684 + $0x94] sm:$0xf] %vm273, %v583
        %v778 = vld [vmem:[%s684 + $0x98] sm:$0x1]
        %v779 = vsel %vm693, %v584, %v778
        %780 = vst [vmem:[%s684 + $0x98] sm:$0x1] %v779
        %v781 = vld [vmem:[%s684 + $0x9c] sm:$0xf]
        %v782 = vsel %vm687, %v591, %v781
        %783 = vst [vmem:[%s684 + $0x9c] sm:$0xf] %v782
        %784 = vst.msk [vmem:[%s684 + $0xa0] sm:$0xf] %vm273, %v600
        %v785 = vld [vmem:[%s684 + $0xa4] sm:$0x1]
        %v786 = vsel %vm693, %v601, %v785
        %787 = vst [vmem:[%s684 + $0xa4] sm:$0x1] %v786
        %v788 = vld [vmem:[%s684 + $0xa8] sm:$0xf]
        %v789 = vsel %vm687, %v608, %v788
        %790 = vst [vmem:[%s684 + $0xa8] sm:$0xf] %v789
        %791 = vst.msk [vmem:[%s684 + $0xac] sm:$0xf] %vm273, %v617
        %v792 = vld [vmem:[%s684 + $0xb0] sm:$0x1]
        %v793 = vsel %vm693, %v618, %v792
        %794 = vst [vmem:[%s684 + $0xb0] sm:$0x1] %v793
        %v795 = vld [vmem:[%s684 + $0xb4] sm:$0xf]
        %v796 = vsel %vm687, %v625, %v795
        %797 = vst [vmem:[%s684 + $0xb4] sm:$0xf] %v796
        %798 = vst.msk [vmem:[%s684 + $0xb8] sm:$0xf] %vm273, %v634
        %v799 = vld [vmem:[%s684 + $0xbc] sm:$0x1]
        %v800 = vsel %vm693, %v635, %v799
        %801 = vst [vmem:[%s684 + $0xbc] sm:$0x1] %v800
        %v802 = vld [vmem:[#allocation2] sm:$0xf]
        %v803 = vld [vmem:[#allocation2 + $0x4] sm:$0xf]
        %v804 = vld [vmem:[#allocation2 + $0xc] sm:$0xf]
        %v805 = vld [vmem:[#allocation2 + $0x10] sm:$0xf]
        %v806 = vld [vmem:[#allocation2 + $0x18] sm:$0xf]
        %v807 = vld [vmem:[#allocation2 + $0x1c] sm:$0xf]
        %v808 = vld [vmem:[#allocation2 + $0x24] sm:$0xf]
        %v809 = vld [vmem:[#allocation2 + $0x28] sm:$0xf]
        %v810 = vld [vmem:[#allocation2 + $0x30] sm:$0xf]
        %v811 = vld [vmem:[#allocation2 + $0x34] sm:$0xf]
        %v812 = vld [vmem:[#allocation2 + $0x3c] sm:$0xf]
        %v813 = vld [vmem:[#allocation2 + $0x40] sm:$0xf]
        %v814 = vld [vmem:[#allocation2 + $0x48] sm:$0xf]
        %v815 = vld [vmem:[#allocation2 + $0x4c] sm:$0xf]
        %v816 = vld [vmem:[#allocation2 + $0x54] sm:$0xf]
        %v817 = vld [vmem:[#allocation2 + $0x58] sm:$0xf]
        %v818 = vld [vmem:[#allocation2 + $0x60] sm:$0xf]
        %v819 = vld [vmem:[#allocation2 + $0x64] sm:$0xf]
        %v820 = vld [vmem:[#allocation2 + $0x6c] sm:$0xf]
        %v821 = vld [vmem:[#allocation2 + $0x70] sm:$0xf]
        %v822 = vld [vmem:[#allocation2 + $0x78] sm:$0xf]
        %v823 = vld [vmem:[#allocation2 + $0x7c] sm:$0xf]
        %v824 = vld [vmem:[#allocation2 + $0x84] sm:$0xf]
        %v825 = vld [vmem:[#allocation2 + $0x88] sm:$0xf]
        %v826 = vld [vmem:[#allocation2 + $0x90] sm:$0xf]
        %v827 = vld [vmem:[#allocation2 + $0x94] sm:$0xf]
        %v828 = vld [vmem:[#allocation2 + $0x9c] sm:$0xf]
        %v829 = vld [vmem:[#allocation2 + $0xa0] sm:$0xf]
        %v830 = vld [vmem:[#allocation2 + $0xa8] sm:$0xf]
        %v831 = vld [vmem:[#allocation2 + $0xac] sm:$0xf]
        %v832 = vld [vmem:[#allocation2 + $0xb4] sm:$0xf]
        %v833 = vld [vmem:[#allocation2 + $0xb8] sm:$0xf]
        %v834 = vld [vmem:[#allocation6] sm:$0xf]
        %v835 = vld [vmem:[#allocation6 + $0x4] sm:$0xf]
        %v836 = vld [vmem:[#allocation6 + $0x8] sm:$0xf]
        %v837 = vld [vmem:[#allocation6 + $0xc] sm:$0xf]
        %v838 = vld [vmem:[#allocation2 + $0x8] sm:$0x1]
        %v839 = vld [vmem:[#allocation2 + $0x14] sm:$0x1]
        %v840 = vld [vmem:[#allocation2 + $0x20] sm:$0x1]
        %v841 = vld [vmem:[#allocation2 + $0x2c] sm:$0x1]
        %v842 = vld [vmem:[#allocation2 + $0x38] sm:$0x1]
        %v843 = vld [vmem:[#allocation2 + $0x44] sm:$0x1]
        %v844 = vld [vmem:[#allocation2 + $0x50] sm:$0x1]
        %v845 = vld [vmem:[#allocation2 + $0x5c] sm:$0x1]
        %v846 = vld [vmem:[#allocation2 + $0x68] sm:$0x1]
        %v847 = vld [vmem:[#allocation2 + $0x74] sm:$0x1]
        %v848 = vld [vmem:[#allocation2 + $0x80] sm:$0x1]
        %v849 = vld [vmem:[#allocation2 + $0x8c] sm:$0x1]
        %v850 = vld [vmem:[#allocation2 + $0x98] sm:$0x1]
        %v851 = vld [vmem:[#allocation2 + $0xa4] sm:$0x1]
        %v852 = vld [vmem:[#allocation2 + $0xb0] sm:$0x1]
        %v853 = vld [vmem:[#allocation2 + $0xbc] sm:$0x1]
        %vm854 = vsmask.f32 3328
        %vm855 = vsmask.f32 7440
        %vm856 = vmor %vm854, %vm855
        %v858 = vshrl.u32 %v802, 16
        %v860 = vrot.slane %v858, 4
        %v861 = vshll.u32 %v802, 16
        %v863 = vrot.slane %v861, 5
        %v864 = vor.u32 %v860, %v863
        %v865 = vrot.slane %v864, 4
        %v867 = vshll.u32 %v803, 16
        %v869 = vrot.slane %v867, 5
        %v870 = vsel %vm856, %v865, %v869
        %v871 = vshrl.u32 %v803, 16
        %v873 = vrot.slane %v871, 4
        %v874 = vor.u32 %v873, %v869
        %v875 = vrot.slane %v874, 4
        %v877 = vshll.u32 %v838, 16
        %v879 = vrot.slane %v877, 5
        %v880 = vsel %vm856, %v875, %v879
        %v882 = vshrl.u32 %v804, 16
        %v884 = vrot.slane %v882, 4
        %v885 = vshll.u32 %v804, 16
        %v887 = vrot.slane %v885, 5
        %v888 = vor.u32 %v884, %v887
        %v889 = vrot.slane %v888, 4
        %v891 = vshll.u32 %v805, 16
        %v893 = vrot.slane %v891, 5
        %v894 = vsel %vm856, %v889, %v893
        %v895 = vshrl.u32 %v805, 16
        %v897 = vrot.slane %v895, 4
        %v898 = vor.u32 %v897, %v893
        %v899 = vrot.slane %v898, 4
        %v901 = vshll.u32 %v839, 16
        %v903 = vrot.slane %v901, 5
        %v904 = vsel %vm856, %v899, %v903
        %v906 = vshrl.u32 %v806, 16
        %v908 = vrot.slane %v906, 4
        %v909 = vshll.u32 %v806, 16
        %v911 = vrot.slane %v909, 5
        %v912 = vor.u32 %v908, %v911
        %v913 = vrot.slane %v912, 4
        %v915 = vshll.u32 %v807, 16
        %v917 = vrot.slane %v915, 5
        %v918 = vsel %vm856, %v913, %v917
        %v919 = vshrl.u32 %v807, 16
        %v921 = vrot.slane %v919, 4
        %v922 = vor.u32 %v921, %v917
        %v923 = vrot.slane %v922, 4
        %v925 = vshll.u32 %v840, 16
        %v927 = vrot.slane %v925, 5
        %v928 = vsel %vm856, %v923, %v927
        %v930 = vshrl.u32 %v808, 16
        %v932 = vrot.slane %v930, 4
        %v933 = vshll.u32 %v808, 16
        %v935 = vrot.slane %v933, 5
        %v936 = vor.u32 %v932, %v935
        %v937 = vrot.slane %v936, 4
        %v939 = vshll.u32 %v809, 16
        %v941 = vrot.slane %v939, 5
        %v942 = vsel %vm856, %v937, %v941
        %v943 = vshrl.u32 %v809, 16
        %v945 = vrot.slane %v943, 4
        %v946 = vor.u32 %v945, %v941
        %v947 = vrot.slane %v946, 4
        %v949 = vshll.u32 %v841, 16
        %v951 = vrot.slane %v949, 5
        %v952 = vsel %vm856, %v947, %v951
        %v954 = vshrl.u32 %v810, 16
        %v956 = vrot.slane %v954, 4
        %v957 = vshll.u32 %v810, 16
        %v959 = vrot.slane %v957, 5
        %v960 = vor.u32 %v956, %v959
        %v961 = vrot.slane %v960, 4
        %v963 = vshll.u32 %v811, 16
        %v965 = vrot.slane %v963, 5
        %v966 = vsel %vm856, %v961, %v965
        %v967 = vshrl.u32 %v811, 16
        %v969 = vrot.slane %v967, 4
        %v970 = vor.u32 %v969, %v965
        %v971 = vrot.slane %v970, 4
        %v973 = vshll.u32 %v842, 16
        %v975 = vrot.slane %v973, 5
        %v976 = vsel %vm856, %v971, %v975
        %v978 = vshrl.u32 %v812, 16
        %v980 = vrot.slane %v978, 4
        %v981 = vshll.u32 %v812, 16
        %v983 = vrot.slane %v981, 5
        %v984 = vor.u32 %v980, %v983
        %v985 = vrot.slane %v984, 4
        %v987 = vshll.u32 %v813, 16
        %v989 = vrot.slane %v987, 5
        %v990 = vsel %vm856, %v985, %v989
        %v991 = vshrl.u32 %v813, 16
        %v993 = vrot.slane %v991, 4
        %v994 = vor.u32 %v993, %v989
        %v995 = vrot.slane %v994, 4
        %v997 = vshll.u32 %v843, 16
        %v999 = vrot.slane %v997, 5
        %v1000 = vsel %vm856, %v995, %v999
        %v1002 = vshrl.u32 %v814, 16
        %v1004 = vrot.slane %v1002, 4
        %v1005 = vshll.u32 %v814, 16
        %v1007 = vrot.slane %v1005, 5
        %v1008 = vor.u32 %v1004, %v1007
        %v1009 = vrot.slane %v1008, 4
        %v1011 = vshll.u32 %v815, 16
        %v1013 = vrot.slane %v1011, 5
        %v1014 = vsel %vm856, %v1009, %v1013
        %v1015 = vshrl.u32 %v815, 16
        %v1017 = vrot.slane %v1015, 4
        %v1018 = vor.u32 %v1017, %v1013
        %v1019 = vrot.slane %v1018, 4
        %v1021 = vshll.u32 %v844, 16
        %v1023 = vrot.slane %v1021, 5
        %v1024 = vsel %vm856, %v1019, %v1023
        %v1026 = vshrl.u32 %v816, 16
        %v1028 = vrot.slane %v1026, 4
        %v1029 = vshll.u32 %v816, 16
        %v1031 = vrot.slane %v1029, 5
        %v1032 = vor.u32 %v1028, %v1031
        %v1033 = vrot.slane %v1032, 4
        %v1035 = vshll.u32 %v817, 16
        %v1037 = vrot.slane %v1035, 5
        %v1038 = vsel %vm856, %v1033, %v1037
        %v1039 = vshrl.u32 %v817, 16
        %v1041 = vrot.slane %v1039, 4
        %v1042 = vor.u32 %v1041, %v1037
        %v1043 = vrot.slane %v1042, 4
        %v1045 = vshll.u32 %v845, 16
        %v1047 = vrot.slane %v1045, 5
        %v1048 = vsel %vm856, %v1043, %v1047
        %v1050 = vshrl.u32 %v818, 16
        %v1052 = vrot.slane %v1050, 4
        %v1053 = vshll.u32 %v818, 16
        %v1055 = vrot.slane %v1053, 5
        %v1056 = vor.u32 %v1052, %v1055
        %v1057 = vrot.slane %v1056, 4
        %v1059 = vshll.u32 %v819, 16
        %v1061 = vrot.slane %v1059, 5
        %v1062 = vsel %vm856, %v1057, %v1061
        %v1063 = vshrl.u32 %v819, 16
        %v1065 = vrot.slane %v1063, 4
        %v1066 = vor.u32 %v1065, %v1061
        %v1067 = vrot.slane %v1066, 4
        %v1069 = vshll.u32 %v846, 16
        %v1071 = vrot.slane %v1069, 5
        %v1072 = vsel %vm856, %v1067, %v1071
        %v1074 = vshrl.u32 %v820, 16
        %v1076 = vrot.slane %v1074, 4
        %v1077 = vshll.u32 %v820, 16
        %v1079 = vrot.slane %v1077, 5
        %v1080 = vor.u32 %v1076, %v1079
        %v1081 = vrot.slane %v1080, 4
        %v1083 = vshll.u32 %v821, 16
        %v1085 = vrot.slane %v1083, 5
        %v1086 = vsel %vm856, %v1081, %v1085
        %v1087 = vshrl.u32 %v821, 16
        %v1089 = vrot.slane %v1087, 4
        %v1090 = vor.u32 %v1089, %v1085
        %v1091 = vrot.slane %v1090, 4
        %v1093 = vshll.u32 %v847, 16
        %v1095 = vrot.slane %v1093, 5
        %v1096 = vsel %vm856, %v1091, %v1095
        %v1098 = vshrl.u32 %v822, 16
        %v1100 = vrot.slane %v1098, 4
        %v1101 = vshll.u32 %v822, 16
        %v1103 = vrot.slane %v1101, 5
        %v1104 = vor.u32 %v1100, %v1103
        %v1105 = vrot.slane %v1104, 4
        %v1107 = vshll.u32 %v823, 16
        %v1109 = vrot.slane %v1107, 5
        %v1110 = vsel %vm856, %v1105, %v1109
        %v1111 = vshrl.u32 %v823, 16
        %v1113 = vrot.slane %v1111, 4
        %v1114 = vor.u32 %v1113, %v1109
        %v1115 = vrot.slane %v1114, 4
        %v1117 = vshll.u32 %v848, 16
        %v1119 = vrot.slane %v1117, 5
        %v1120 = vsel %vm856, %v1115, %v1119
        %v1122 = vshrl.u32 %v824, 16
        %v1124 = vrot.slane %v1122, 4
        %v1125 = vshll.u32 %v824, 16
        %v1127 = vrot.slane %v1125, 5
        %v1128 = vor.u32 %v1124, %v1127
        %v1129 = vrot.slane %v1128, 4
        %v1131 = vshll.u32 %v825, 16
        %v1133 = vrot.slane %v1131, 5
        %v1134 = vsel %vm856, %v1129, %v1133
        %v1135 = vshrl.u32 %v825, 16
        %v1137 = vrot.slane %v1135, 4
        %v1138 = vor.u32 %v1137, %v1133
        %v1139 = vrot.slane %v1138, 4
        %v1141 = vshll.u32 %v849, 16
        %v1143 = vrot.slane %v1141, 5
        %v1144 = vsel %vm856, %v1139, %v1143
        %v1146 = vshrl.u32 %v826, 16
        %v1148 = vrot.slane %v1146, 4
        %v1149 = vshll.u32 %v826, 16
        %v1151 = vrot.slane %v1149, 5
        %v1152 = vor.u32 %v1148, %v1151
        %v1153 = vrot.slane %v1152, 4
        %v1155 = vshll.u32 %v827, 16
        %v1157 = vrot.slane %v1155, 5
        %v1158 = vsel %vm856, %v1153, %v1157
        %v1159 = vshrl.u32 %v827, 16
        %v1161 = vrot.slane %v1159, 4
        %v1162 = vor.u32 %v1161, %v1157
        %v1163 = vrot.slane %v1162, 4
        %v1165 = vshll.u32 %v850, 16
        %v1167 = vrot.slane %v1165, 5
        %v1168 = vsel %vm856, %v1163, %v1167
        %v1170 = vshrl.u32 %v828, 16
        %v1172 = vrot.slane %v1170, 4
        %v1173 = vshll.u32 %v828, 16
        %v1175 = vrot.slane %v1173, 5
        %v1176 = vor.u32 %v1172, %v1175
        %v1177 = vrot.slane %v1176, 4
        %v1179 = vshll.u32 %v829, 16
        %v1181 = vrot.slane %v1179, 5
        %v1182 = vsel %vm856, %v1177, %v1181
        %v1183 = vshrl.u32 %v829, 16
        %v1185 = vrot.slane %v1183, 4
        %v1186 = vor.u32 %v1185, %v1181
        %v1187 = vrot.slane %v1186, 4
        %v1189 = vshll.u32 %v851, 16
        %v1191 = vrot.slane %v1189, 5
        %v1192 = vsel %vm856, %v1187, %v1191
        %v1194 = vshrl.u32 %v830, 16
        %v1196 = vrot.slane %v1194, 4
        %v1197 = vshll.u32 %v830, 16
        %v1199 = vrot.slane %v1197, 5
        %v1200 = vor.u32 %v1196, %v1199
        %v1201 = vrot.slane %v1200, 4
        %v1203 = vshll.u32 %v831, 16
        %v1205 = vrot.slane %v1203, 5
        %v1206 = vsel %vm856, %v1201, %v1205
        %v1207 = vshrl.u32 %v831, 16
        %v1209 = vrot.slane %v1207, 4
        %v1210 = vor.u32 %v1209, %v1205
        %v1211 = vrot.slane %v1210, 4
        %v1213 = vshll.u32 %v852, 16
        %v1215 = vrot.slane %v1213, 5
        %v1216 = vsel %vm856, %v1211, %v1215
        %v1218 = vshrl.u32 %v832, 16
        %v1220 = vrot.slane %v1218, 4
        %v1221 = vshll.u32 %v832, 16
        %v1223 = vrot.slane %v1221, 5
        %v1224 = vor.u32 %v1220, %v1223
        %v1225 = vrot.slane %v1224, 4
        %v1227 = vshll.u32 %v833, 16
        %v1229 = vrot.slane %v1227, 5
        %v1230 = vsel %vm856, %v1225, %v1229
        %v1231 = vshrl.u32 %v833, 16
        %v1233 = vrot.slane %v1231, 4
        %v1234 = vor.u32 %v1233, %v1229
        %v1235 = vrot.slane %v1234, 4
        %v1237 = vshll.u32 %v853, 16
        %v1239 = vrot.slane %v1237, 5
        %v1240 = vsel %vm856, %v1235, %v1239
        %s1241 = scalar_lea.vmem [#allocation6], 16
        %v1242 = vld [vmem:[%s1241] sm:$0xf]
        %v1243 = vld [vmem:[%s1241 + $0x4] sm:$0xf]
        %v1244 = vld [vmem:[%s1241 + $0x8] sm:$0xf]
        %v1245 = vld [vmem:[%s1241 + $0xc] sm:$0xf]
        %v1246 = vunpack.c.l.b16 %v870
        %v1247 = vunpack.c.l.b16 %v880
        %v1248 = vunpack.c.l.b16 %v894
        %v1249 = vunpack.c.l.b16 %v904
        %v1250 = vunpack.c.l.b16 %v918
        %v1251 = vunpack.c.l.b16 %v928
        %v1252 = vunpack.c.l.b16 %v942
        %v1253 = vunpack.c.l.b16 %v952
        %v1254 = vunpack.c.l.b16 %v966
        %v1255 = vunpack.c.l.b16 %v976
        %v1256 = vunpack.c.l.b16 %v990
        %v1257 = vunpack.c.l.b16 %v1000
        %v1258 = vunpack.c.l.b16 %v1014
        %v1259 = vunpack.c.l.b16 %v1024
        %v1260 = vunpack.c.l.b16 %v1038
        %v1261 = vunpack.c.l.b16 %v1048
        %v1262 = vunpack.c.l.b16 %v1062
        %v1263 = vunpack.c.l.b16 %v1072
        %v1264 = vunpack.c.l.b16 %v1086
        %v1265 = vunpack.c.l.b16 %v1096
        %v1266 = vunpack.c.l.b16 %v1110
        %v1267 = vunpack.c.l.b16 %v1120
        %v1268 = vunpack.c.l.b16 %v1134
        %v1269 = vunpack.c.l.b16 %v1144
        %v1270 = vunpack.c.l.b16 %v1158
        %v1271 = vunpack.c.l.b16 %v1168
        %v1272 = vunpack.c.l.b16 %v1182
        %v1273 = vunpack.c.l.b16 %v1192
        %v1274 = vunpack.c.l.b16 %v1206
        %v1275 = vunpack.c.l.b16 %v1216
        %v1276 = vunpack.c.l.b16 %v1230
        %v1277 = vunpack.c.l.b16 %v1240
        %v1278 = vpack.c.b16 %v1247, %v1246
        %v1279 = vpack.c.b16 %v1249, %v1248
        %v1280 = vpack.c.b16 %v1251, %v1250
        %v1281 = vpack.c.b16 %v1253, %v1252
        %v1282 = vpack.c.b16 %v1255, %v1254
        %v1283 = vpack.c.b16 %v1257, %v1256
        %v1284 = vpack.c.b16 %v1259, %v1258
        %v1285 = vpack.c.b16 %v1261, %v1260
        %v1286 = vpack.c.b16 %v1263, %v1262
        %v1287 = vpack.c.b16 %v1265, %v1264
        %v1288 = vpack.c.b16 %v1267, %v1266
        %v1289 = vpack.c.b16 %v1269, %v1268
        %v1290 = vpack.c.b16 %v1271, %v1270
        %v1291 = vpack.c.b16 %v1273, %v1272
        %v1292 = vpack.c.b16 %v1275, %v1274
        %v1293 = vpack.c.b16 %v1277, %v1276
        %v1298 = vunpack.c.l.b16 %v1242
        %v1299 = vunpack.c.l.b16 %v1243
        %v1300 = vunpack.c.l.b16 %v1244
        %v1301 = vunpack.c.l.b16 %v1245
        %v1302 = vpack.c.b16 %v1299, %v1298
        %v1303 = vpack.c.b16 %v1301, %v1300
        %vm1306 = vcmask 261120
        %v1308 = vsel %vm1306, %v1278, 0
        %v1311 = vsel %vm1306, %v1279, 0
        %v1314 = vsel %vm1306, %v1280, 0
        %v1317 = vsel %vm1306, %v1281, 0
        %v1320 = vsel %vm1306, %v1282, 0
        %v1323 = vsel %vm1306, %v1283, 0
        %v1326 = vsel %vm1306, %v1284, 0
        %v1329 = vsel %vm1306, %v1285, 0
        %v1332 = vsel %vm1306, %v1286, 0
        %v1335 = vsel %vm1306, %v1287, 0
        %v1338 = vsel %vm1306, %v1288, 0
        %v1341 = vsel %vm1306, %v1289, 0
        %v1344 = vsel %vm1306, %v1290, 0
        %v1347 = vsel %vm1306, %v1291, 0
        %v1350 = vsel %vm1306, %v1292, 0
        %v1353 = vsel %vm1306, %v1293, 0
        %1355 = vmatprep.subr.bf16.mxu0 0
        %1356 = vmatpush1.bf16.msra.mxu0 %v1302
        %1357 = vmatprep.subr.bf16.mxu0 0
        %1358 = vmatpush1.bf16.msra.mxu0 %v1303
        %1359 = vmatprep.subr.bf16.mxu0 0
        %1360 = vmatpush1.bf16.msra.mxu0 0
        %1361 = vmatprep.subr.bf16.mxu0 0
        %1362 = vmatpush1.bf16.msra.mxu0 0
        %1363 = vmatprep.subr.bf16.mxu0 0
        %1364 = vmatpush1.bf16.msra.mxu0 0
        %1365 = vmatprep.subr.bf16.mxu0 0
        %1366 = vmatpush1.bf16.msra.mxu0 0
        %1367 = vmatprep.subr.bf16.mxu0 0
        %1368 = vmatpush1.bf16.msra.mxu0 0
        %1369 = vmatprep.subr.bf16.mxu0 0
        %1370 = vmatpush1.bf16.msra.mxu0 0
        %1371 = vmatprep.subr.bf16.mxu0 0
        %1372 = vmatpush1.bf16.msra.mxu0 0
        %1373 = vmatprep.subr.bf16.mxu0 0
        %1374 = vmatpush1.bf16.msra.mxu0 0
        %1375 = vmatprep.subr.bf16.mxu0 0
        %1376 = vmatpush1.bf16.msra.mxu0 0
        %1377 = vmatprep.subr.bf16.mxu0 0
        %1378 = vmatpush1.bf16.msra.mxu0 0
        %1379 = vmatprep.subr.bf16.mxu0 0
        %1380 = vmatpush1.bf16.msra.mxu0 0
        %1381 = vmatprep.subr.bf16.mxu0 0
        %1382 = vmatpush1.bf16.msra.mxu0 0
        %1383 = vmatprep.subr.bf16.mxu0 0
        %1384 = vmatpush1.bf16.msra.mxu0 0
        %1385 = vmatprep.subr.bf16.mxu0 0
        %1386 = vmatpush1.bf16.msra.mxu0 0
        %1387 = vmatprep.mubr.bf16.mxu0 0
        %1388 = vmatmul.mubr.bf16.gmra.mrb[0].mxu0 %v1308
        %v1389 = vpop.f32.mrb[0].mxu0
        %v1390 = vadd.f32 0.0, %v1389
        %v1391 = vpop.f32.mrb[0].mxu0
        %v1392 = vpop.f32.mrb[0].mxu0
        %v1393 = vadd.f32 0.0, %v1392
        %v1394 = vpop.f32.mrb[0].mxu0
        %1395 = vmatprep.mubr.bf16.mxu0 0
        %1396 = vmatmul.mubr.bf16.gmra.mrb[0].mxu0 %v1311
        %v1397 = vpop.f32.mrb[0].mxu0
        %v1398 = vadd.f32 0.0, %v1397
        %v1399 = vpop.f32.mrb[0].mxu0
        %v1400 = vpop.f32.mrb[0].mxu0
        %v1401 = vadd.f32 0.0, %v1400
        %v1402 = vpop.f32.mrb[0].mxu0
        %1403 = vmatprep.mubr.bf16.mxu0 0
        %1404 = vmatmul.mubr.bf16.gmra.mrb[0].mxu0 %v1314
        %v1405 = vpop.f32.mrb[0].mxu0
        %v1406 = vadd.f32 0.0, %v1405
        %v1407 = vpop.f32.mrb[0].mxu0
        %v1408 = vpop.f32.mrb[0].mxu0
        %v1409 = vadd.f32 0.0, %v1408
        %v1410 = vpop.f32.mrb[0].mxu0
        %1411 = vmatprep.mubr.bf16.mxu0 0
        %1412 = vmatmul.mubr.bf16.gmra.mrb[0].mxu0 %v1317
        %v1413 = vpop.f32.mrb[0].mxu0
        %v1414 = vadd.f32 0.0, %v1413
        %v1415 = vpop.f32.mrb[0].mxu0
        %v1416 = vpop.f32.mrb[0].mxu0
        %v1417 = vadd.f32 0.0, %v1416
        %v1418 = vpop.f32.mrb[0].mxu0
        %1419 = vmatprep.mubr.bf16.mxu0 0
        %1420 = vmatmul.mubr.bf16.gmra.mrb[0].mxu0 %v1320
        %v1421 = vpop.f32.mrb[0].mxu0
        %v1422 = vadd.f32 0.0, %v1421
        %v1423 = vpop.f32.mrb[0].mxu0
        %v1424 = vpop.f32.mrb[0].mxu0
        %v1425 = vadd.f32 0.0, %v1424
        %v1426 = vpop.f32.mrb[0].mxu0
        %1427 = vmatprep.mubr.bf16.mxu0 0
        %1428 = vmatmul.mubr.bf16.gmra.mrb[0].mxu0 %v1323
        %v1429 = vpop.f32.mrb[0].mxu0
        %v1430 = vadd.f32 0.0, %v1429
        %v1431 = vpop.f32.mrb[0].mxu0
        %v1432 = vpop.f32.mrb[0].mxu0
        %v1433 = vadd.f32 0.0, %v1432
        %v1434 = vpop.f32.mrb[0].mxu0
        %1435 = vmatprep.mubr.bf16.mxu0 0
        %1436 = vmatmul.mubr.bf16.gmra.mrb[0].mxu0 %v1326
        %v1437 = vpop.f32.mrb[0].mxu0
        %v1438 = vadd.f32 0.0, %v1437
        %v1439 = vpop.f32.mrb[0].mxu0
        %v1440 = vpop.f32.mrb[0].mxu0
        %v1441 = vadd.f32 0.0, %v1440
        %v1442 = vpop.f32.mrb[0].mxu0
        %1443 = vmatprep.mubr.bf16.mxu0 0
        %1444 = vmatmul.mubr.bf16.gmra.mrb[0].mxu0 %v1329
        %v1445 = vpop.f32.mrb[0].mxu0
        %v1446 = vadd.f32 0.0, %v1445
        %v1447 = vpop.f32.mrb[0].mxu0
        %v1448 = vpop.f32.mrb[0].mxu0
        %v1449 = vadd.f32 0.0, %v1448
        %v1450 = vpop.f32.mrb[0].mxu0
        %1451 = vmatprep.mubr.bf16.mxu0 0
        %1452 = vmatmul.mubr.bf16.gmra.mrb[0].mxu0 %v1332
        %v1453 = vpop.f32.mrb[0].mxu0
        %v1454 = vadd.f32 0.0, %v1453
        %v1455 = vpop.f32.mrb[0].mxu0
        %v1456 = vpop.f32.mrb[0].mxu0
        %v1457 = vadd.f32 0.0, %v1456
        %v1458 = vpop.f32.mrb[0].mxu0
        %1459 = vmatprep.mubr.bf16.mxu0 0
        %1460 = vmatmul.mubr.bf16.gmra.mrb[0].mxu0 %v1335
        %v1461 = vpop.f32.mrb[0].mxu0
        %v1462 = vadd.f32 0.0, %v1461
        %v1463 = vpop.f32.mrb[0].mxu0
        %v1464 = vpop.f32.mrb[0].mxu0
        %v1465 = vadd.f32 0.0, %v1464
        %v1466 = vpop.f32.mrb[0].mxu0
        %1467 = vmatprep.mubr.bf16.mxu0 0
        %1468 = vmatmul.mubr.bf16.gmra.mrb[0].mxu0 %v1338
        %v1469 = vpop.f32.mrb[0].mxu0
        %v1470 = vadd.f32 0.0, %v1469
        %v1471 = vpop.f32.mrb[0].mxu0
        %v1472 = vpop.f32.mrb[0].mxu0
        %v1473 = vadd.f32 0.0, %v1472
        %v1474 = vpop.f32.mrb[0].mxu0
        %1475 = vmatprep.mubr.bf16.mxu0 0
        %1476 = vmatmul.mubr.bf16.gmra.mrb[0].mxu0 %v1341
        %v1477 = vpop.f32.mrb[0].mxu0
        %v1478 = vadd.f32 0.0, %v1477
        %v1479 = vpop.f32.mrb[0].mxu0
        %v1480 = vpop.f32.mrb[0].mxu0
        %v1481 = vadd.f32 0.0, %v1480
        %v1482 = vpop.f32.mrb[0].mxu0
        %1483 = vmatprep.mubr.bf16.mxu0 0
        %1484 = vmatmul.mubr.bf16.gmra.mrb[0].mxu0 %v1344
        %v1485 = vpop.f32.mrb[0].mxu0
        %v1486 = vadd.f32 0.0, %v1485
        %v1487 = vpop.f32.mrb[0].mxu0
        %v1488 = vpop.f32.mrb[0].mxu0
        %v1489 = vadd.f32 0.0, %v1488
        %v1490 = vpop.f32.mrb[0].mxu0
        %1491 = vmatprep.mubr.bf16.mxu0 0
        %1492 = vmatmul.mubr.bf16.gmra.mrb[0].mxu0 %v1347
        %v1493 = vpop.f32.mrb[0].mxu0
        %v1494 = vadd.f32 0.0, %v1493
        %v1495 = vpop.f32.mrb[0].mxu0
        %v1496 = vpop.f32.mrb[0].mxu0
        %v1497 = vadd.f32 0.0, %v1496
        %v1498 = vpop.f32.mrb[0].mxu0
        %1499 = vmatprep.mubr.bf16.mxu0 0
        %1500 = vmatmul.mubr.bf16.gmra.mrb[0].mxu0 %v1350
        %v1501 = vpop.f32.mrb[0].mxu0
        %v1502 = vadd.f32 0.0, %v1501
        %v1503 = vpop.f32.mrb[0].mxu0
        %v1504 = vpop.f32.mrb[0].mxu0
        %v1505 = vadd.f32 0.0, %v1504
        %v1506 = vpop.f32.mrb[0].mxu0
        %1507 = vmatprep.mubr.bf16.mxu0 0
        %1508 = vmatmul.mubr.bf16.gmra.mrb[0].mxu0 %v1353
        %v1509 = vpop.f32.mrb[0].mxu0
        %v1510 = vadd.f32 0.0, %v1509
        %v1511 = vpop.f32.mrb[0].mxu0
        %v1512 = vpop.f32.mrb[0].mxu0
        %v1513 = vadd.f32 0.0, %v1512
        %v1514 = vpop.f32.mrb[0].mxu0
        %1515 = vdwg.mxu0
        %v1548 = vunpack.c.l.b16 %v802
        %v1549 = vunpack.c.l.b16 %v803
        %v1550 = vunpack.c.l.b16 %v804
        %v1551 = vunpack.c.l.b16 %v805
        %v1552 = vunpack.c.l.b16 %v806
        %v1553 = vunpack.c.l.b16 %v807
        %v1554 = vunpack.c.l.b16 %v808
        %v1555 = vunpack.c.l.b16 %v809
        %v1556 = vunpack.c.l.b16 %v810
        %v1557 = vunpack.c.l.b16 %v811
        %v1558 = vunpack.c.l.b16 %v812
        %v1559 = vunpack.c.l.b16 %v813
        %v1560 = vunpack.c.l.b16 %v814
        %v1561 = vunpack.c.l.b16 %v815
        %v1562 = vunpack.c.l.b16 %v816
        %v1563 = vunpack.c.l.b16 %v817
        %v1564 = vunpack.c.l.b16 %v818
        %v1565 = vunpack.c.l.b16 %v819
        %v1566 = vunpack.c.l.b16 %v820
        %v1567 = vunpack.c.l.b16 %v821
        %v1568 = vunpack.c.l.b16 %v822
        %v1569 = vunpack.c.l.b16 %v823
        %v1570 = vunpack.c.l.b16 %v824
        %v1571 = vunpack.c.l.b16 %v825
        %v1572 = vunpack.c.l.b16 %v826
        %v1573 = vunpack.c.l.b16 %v827
        %v1574 = vunpack.c.l.b16 %v828
        %v1575 = vunpack.c.l.b16 %v829
        %v1576 = vunpack.c.l.b16 %v830
        %v1577 = vunpack.c.l.b16 %v831
        %v1578 = vunpack.c.l.b16 %v832
        %v1579 = vunpack.c.l.b16 %v833
        %v1580 = vpack.c.b16 %v1549, %v1548
        %v1581 = vpack.c.b16 %v1551, %v1550
        %v1582 = vpack.c.b16 %v1553, %v1552
        %v1583 = vpack.c.b16 %v1555, %v1554
        %v1584 = vpack.c.b16 %v1557, %v1556
        %v1585 = vpack.c.b16 %v1559, %v1558
        %v1586 = vpack.c.b16 %v1561, %v1560
        %v1587 = vpack.c.b16 %v1563, %v1562
        %v1588 = vpack.c.b16 %v1565, %v1564
        %v1589 = vpack.c.b16 %v1567, %v1566
        %v1590 = vpack.c.b16 %v1569, %v1568
        %v1591 = vpack.c.b16 %v1571, %v1570
        %v1592 = vpack.c.b16 %v1573, %v1572
        %v1593 = vpack.c.b16 %v1575, %v1574
        %v1594 = vpack.c.b16 %v1577, %v1576
        %v1595 = vpack.c.b16 %v1579, %v1578
        %v1600 = vunpack.c.l.b16 %v834
        %v1601 = vunpack.c.l.b16 %v835
        %v1602 = vunpack.c.l.b16 %v836
        %v1603 = vunpack.c.l.b16 %v837
        %v1604 = vpack.c.b16 %v1601, %v1600
        %v1605 = vpack.c.b16 %v1603, %v1602
        %v1609 = vsel %vm1306, %v1580, 0
        %v1612 = vsel %vm1306, %v1581, 0
        %v1615 = vsel %vm1306, %v1582, 0
        %v1618 = vsel %vm1306, %v1583, 0
        %v1621 = vsel %vm1306, %v1584, 0
        %v1624 = vsel %vm1306, %v1585, 0
        %v1627 = vsel %vm1306, %v1586, 0
        %v1630 = vsel %vm1306, %v1587, 0
        %v1633 = vsel %vm1306, %v1588, 0
        %v1636 = vsel %vm1306, %v1589, 0
        %v1639 = vsel %vm1306, %v1590, 0
        %v1642 = vsel %vm1306, %v1591, 0
        %v1645 = vsel %vm1306, %v1592, 0
        %v1648 = vsel %vm1306, %v1593, 0
        %v1651 = vsel %vm1306, %v1594, 0
        %v1654 = vsel %vm1306, %v1595, 0
        %1656 = vmatprep.subr.bf16.mxu0 0
        %1657 = vmatpush1.bf16.msra.mxu0 %v1604
        %1658 = vmatprep.subr.bf16.mxu0 0
        %1659 = vmatpush1.bf16.msra.mxu0 %v1605
        %1660 = vmatprep.subr.bf16.mxu0 0
        %1661 = vmatpush1.bf16.msra.mxu0 0
        %1662 = vmatprep.subr.bf16.mxu0 0
        %1663 = vmatpush1.bf16.msra.mxu0 0
        %1664 = vmatprep.subr.bf16.mxu0 0
        %1665 = vmatpush1.bf16.msra.mxu0 0
        %1666 = vmatprep.subr.bf16.mxu0 0
        %1667 = vmatpush1.bf16.msra.mxu0 0
        %1668 = vmatprep.subr.bf16.mxu0 0
        %1669 = vmatpush1.bf16.msra.mxu0 0
        %1670 = vmatprep.subr.bf16.mxu0 0
        %1671 = vmatpush1.bf16.msra.mxu0 0
        %1672 = vmatprep.subr.bf16.mxu0 0
        %1673 = vmatpush1.bf16.msra.mxu0 0
        %1674 = vmatprep.subr.bf16.mxu0 0
        %1675 = vmatpush1.bf16.msra.mxu0 0
        %1676 = vmatprep.subr.bf16.mxu0 0
        %1677 = vmatpush1.bf16.msra.mxu0 0
        %1678 = vmatprep.subr.bf16.mxu0 0
        %1679 = vmatpush1.bf16.msra.mxu0 0
        %1680 = vmatprep.subr.bf16.mxu0 0
        %1681 = vmatpush1.bf16.msra.mxu0 0
        %1682 = vmatprep.subr.bf16.mxu0 0
        %1683 = vmatpush1.bf16.msra.mxu0 0
        %1684 = vmatprep.subr.bf16.mxu0 0
        %1685 = vmatpush1.bf16.msra.mxu0 0
        %1686 = vmatprep.subr.bf16.mxu0 0
        %1687 = vmatpush1.bf16.msra.mxu0 0
        %1688 = vmatprep.mubr.bf16.mxu0 0
        %1689 = vmatmul.mubr.bf16.gmra.mrb[0].mxu0 %v1609
        %v1690 = vpop.f32.mrb[0].mxu0
        %v1691 = vadd.f32 %v1390, %v1690
        %v1692 = vpop.f32.mrb[0].mxu0
        %v1693 = vpop.f32.mrb[0].mxu0
        %v1694 = vadd.f32 %v1393, %v1693
        %v1695 = vpop.f32.mrb[0].mxu0
        %1696 = vmatprep.mubr.bf16.mxu0 0
        %1697 = vmatmul.mubr.bf16.gmra.mrb[0].mxu0 %v1612
        %v1698 = vpop.f32.mrb[0].mxu0
        %v1699 = vadd.f32 %v1398, %v1698
        %v1700 = vpop.f32.mrb[0].mxu0
        %v1701 = vpop.f32.mrb[0].mxu0
        %v1702 = vadd.f32 %v1401, %v1701
        %v1703 = vpop.f32.mrb[0].mxu0
        %1704 = vmatprep.mubr.bf16.mxu0 0
        %1705 = vmatmul.mubr.bf16.gmra.mrb[0].mxu0 %v1615
        %v1706 = vpop.f32.mrb[0].mxu0
        %v1707 = vadd.f32 %v1406, %v1706
        %v1708 = vpop.f32.mrb[0].mxu0
        %v1709 = vpop.f32.mrb[0].mxu0
        %v1710 = vadd.f32 %v1409, %v1709
        %v1711 = vpop.f32.mrb[0].mxu0
        %1712 = vmatprep.mubr.bf16.mxu0 0
        %1713 = vmatmul.mubr.bf16.gmra.mrb[0].mxu0 %v1618
        %v1714 = vpop.f32.mrb[0].mxu0
        %v1715 = vadd.f32 %v1414, %v1714
        %v1716 = vpop.f32.mrb[0].mxu0
        %v1717 = vpop.f32.mrb[0].mxu0
        %v1718 = vadd.f32 %v1417, %v1717
        %v1719 = vpop.f32.mrb[0].mxu0
        %1720 = vmatprep.mubr.bf16.mxu0 0
        %1721 = vmatmul.mubr.bf16.gmra.mrb[0].mxu0 %v1621
        %v1722 = vpop.f32.mrb[0].mxu0
        %v1723 = vadd.f32 %v1422, %v1722
        %v1724 = vpop.f32.mrb[0].mxu0
        %v1725 = vpop.f32.mrb[0].mxu0
        %v1726 = vadd.f32 %v1425, %v1725
        %v1727 = vpop.f32.mrb[0].mxu0
        %1728 = vmatprep.mubr.bf16.mxu0 0
        %1729 = vmatmul.mubr.bf16.gmra.mrb[0].mxu0 %v1624
        %v1730 = vpop.f32.mrb[0].mxu0
        %v1731 = vadd.f32 %v1430, %v1730
        %v1732 = vpop.f32.mrb[0].mxu0
        %v1733 = vpop.f32.mrb[0].mxu0
        %v1734 = vadd.f32 %v1433, %v1733
        %v1735 = vpop.f32.mrb[0].mxu0
        %1736 = vmatprep.mubr.bf16.mxu0 0
        %1737 = vmatmul.mubr.bf16.gmra.mrb[0].mxu0 %v1627
        %v1738 = vpop.f32.mrb[0].mxu0
        %v1739 = vadd.f32 %v1438, %v1738
        %v1740 = vpop.f32.mrb[0].mxu0
        %v1741 = vpop.f32.mrb[0].mxu0
        %v1742 = vadd.f32 %v1441, %v1741
        %v1743 = vpop.f32.mrb[0].mxu0
        %1744 = vmatprep.mubr.bf16.mxu0 0
        %1745 = vmatmul.mubr.bf16.gmra.mrb[0].mxu0 %v1630
        %v1746 = vpop.f32.mrb[0].mxu0
        %v1747 = vadd.f32 %v1446, %v1746
        %v1748 = vpop.f32.mrb[0].mxu0
        %v1749 = vpop.f32.mrb[0].mxu0
        %v1750 = vadd.f32 %v1449, %v1749
        %v1751 = vpop.f32.mrb[0].mxu0
        %1752 = vmatprep.mubr.bf16.mxu0 0
        %1753 = vmatmul.mubr.bf16.gmra.mrb[0].mxu0 %v1633
        %v1754 = vpop.f32.mrb[0].mxu0
        %v1755 = vadd.f32 %v1454, %v1754
        %v1756 = vpop.f32.mrb[0].mxu0
        %v1757 = vpop.f32.mrb[0].mxu0
        %v1758 = vadd.f32 %v1457, %v1757
        %v1759 = vpop.f32.mrb[0].mxu0
        %1760 = vmatprep.mubr.bf16.mxu0 0
        %1761 = vmatmul.mubr.bf16.gmra.mrb[0].mxu0 %v1636
        %v1762 = vpop.f32.mrb[0].mxu0
        %v1763 = vadd.f32 %v1462, %v1762
        %v1764 = vpop.f32.mrb[0].mxu0
        %v1765 = vpop.f32.mrb[0].mxu0
        %v1766 = vadd.f32 %v1465, %v1765
        %v1767 = vpop.f32.mrb[0].mxu0
        %1768 = vmatprep.mubr.bf16.mxu0 0
        %1769 = vmatmul.mubr.bf16.gmra.mrb[0].mxu0 %v1639
        %v1770 = vpop.f32.mrb[0].mxu0
        %v1771 = vadd.f32 %v1470, %v1770
        %v1772 = vpop.f32.mrb[0].mxu0
        %v1773 = vpop.f32.mrb[0].mxu0
        %v1774 = vadd.f32 %v1473, %v1773
        %v1775 = vpop.f32.mrb[0].mxu0
        %1776 = vmatprep.mubr.bf16.mxu0 0
        %1777 = vmatmul.mubr.bf16.gmra.mrb[0].mxu0 %v1642
        %v1778 = vpop.f32.mrb[0].mxu0
        %v1779 = vadd.f32 %v1478, %v1778
        %v1780 = vpop.f32.mrb[0].mxu0
        %v1781 = vpop.f32.mrb[0].mxu0
        %v1782 = vadd.f32 %v1481, %v1781
        %v1783 = vpop.f32.mrb[0].mxu0
        %1784 = vmatprep.mubr.bf16.mxu0 0
        %1785 = vmatmul.mubr.bf16.gmra.mrb[0].mxu0 %v1645
        %v1786 = vpop.f32.mrb[0].mxu0
        %v1787 = vadd.f32 %v1486, %v1786
        %v1788 = vpop.f32.mrb[0].mxu0
        %v1789 = vpop.f32.mrb[0].mxu0
        %v1790 = vadd.f32 %v1489, %v1789
        %v1791 = vpop.f32.mrb[0].mxu0
        %1792 = vmatprep.mubr.bf16.mxu0 0
        %1793 = vmatmul.mubr.bf16.gmra.mrb[0].mxu0 %v1648
        %v1794 = vpop.f32.mrb[0].mxu0
        %v1795 = vadd.f32 %v1494, %v1794
        %v1796 = vpop.f32.mrb[0].mxu0
        %v1797 = vpop.f32.mrb[0].mxu0
        %v1798 = vadd.f32 %v1497, %v1797
        %v1799 = vpop.f32.mrb[0].mxu0
        %1800 = vmatprep.mubr.bf16.mxu0 0
        %1801 = vmatmul.mubr.bf16.gmra.mrb[0].mxu0 %v1651
        %v1802 = vpop.f32.mrb[0].mxu0
        %v1803 = vadd.f32 %v1502, %v1802
        %v1804 = vpop.f32.mrb[0].mxu0
        %v1805 = vpop.f32.mrb[0].mxu0
        %v1806 = vadd.f32 %v1505, %v1805
        %v1807 = vpop.f32.mrb[0].mxu0
        %1808 = vmatprep.mubr.bf16.mxu0 0
        %1809 = vmatmul.mubr.bf16.gmra.mrb[0].mxu0 %v1654
        %v1810 = vpop.f32.mrb[0].mxu0
        %v1811 = vadd.f32 %v1510, %v1810
        %v1812 = vpop.f32.mrb[0].mxu0
        %v1813 = vpop.f32.mrb[0].mxu0
        %v1814 = vadd.f32 %v1513, %v1813
        %v1815 = vpop.f32.mrb[0].mxu0
        %1816 = vdwg.mxu0
        %v1817 = vld [vmem:[#allocation2] sm:$0xe]
        %v1818 = vld [vmem:[#allocation2 + $0xc] sm:$0xe]
        %v1819 = vld [vmem:[#allocation2 + $0x18] sm:$0xe]
        %v1820 = vld [vmem:[#allocation2 + $0x24] sm:$0xe]
        %v1821 = vld [vmem:[#allocation2 + $0x30] sm:$0xe]
        %v1822 = vld [vmem:[#allocation2 + $0x3c] sm:$0xe]
        %v1823 = vld [vmem:[#allocation2 + $0x48] sm:$0xe]
        %v1824 = vld [vmem:[#allocation2 + $0x54] sm:$0xe]
        %v1825 = vld [vmem:[#allocation2 + $0x60] sm:$0xe]
        %v1826 = vld [vmem:[#allocation2 + $0x6c] sm:$0xe]
        %v1827 = vld [vmem:[#allocation2 + $0x78] sm:$0xe]
        %v1828 = vld [vmem:[#allocation2 + $0x84] sm:$0xe]
        %v1829 = vld [vmem:[#allocation2 + $0x90] sm:$0xe]
        %v1830 = vld [vmem:[#allocation2 + $0x9c] sm:$0xe]
        %v1831 = vld [vmem:[#allocation2 + $0xa8] sm:$0xe]
        %v1832 = vld [vmem:[#allocation2 + $0xb4] sm:$0xe]
        %vm1865 = vcmask 1042432
        %vm1866 = vcmask 1046532
        %vm1867 = vmor %vm1865, %vm1866
        %v1868 = vrot.slane %v1817, 5
        %v1869 = vrot.slane %v1868, 4
        %v1870 = vrot.slane %v803, 5
        %v1871 = vsel %vm1867, %v1869, %v1870
        %v1872 = vrot.slane %v1870, 4
        %v1873 = vrot.slane %v838, 5
        %v1874 = vsel %vm1867, %v1872, %v1873
        %v1875 = vrot.slane %v1818, 5
        %v1876 = vrot.slane %v1875, 4
        %v1877 = vrot.slane %v805, 5
        %v1878 = vsel %vm1867, %v1876, %v1877
        %v1879 = vrot.slane %v1877, 4
        %v1880 = vrot.slane %v839, 5
        %v1881 = vsel %vm1867, %v1879, %v1880
        %v1882 = vrot.slane %v1819, 5
        %v1883 = vrot.slane %v1882, 4
        %v1884 = vrot.slane %v807, 5
        %v1885 = vsel %vm1867, %v1883, %v1884
        %v1886 = vrot.slane %v1884, 4
        %v1887 = vrot.slane %v840, 5
        %v1888 = vsel %vm1867, %v1886, %v1887
        %v1889 = vrot.slane %v1820, 5
        %v1890 = vrot.slane %v1889, 4
        %v1891 = vrot.slane %v809, 5
        %v1892 = vsel %vm1867, %v1890, %v1891
        %v1893 = vrot.slane %v1891, 4
        %v1894 = vrot.slane %v841, 5
        %v1895 = vsel %vm1867, %v1893, %v1894
        %v1896 = vrot.slane %v1821, 5
        %v1897 = vrot.slane %v1896, 4
        %v1898 = vrot.slane %v811, 5
        %v1899 = vsel %vm1867, %v1897, %v1898
        %v1900 = vrot.slane %v1898, 4
        %v1901 = vrot.slane %v842, 5
        %v1902 = vsel %vm1867, %v1900, %v1901
        %v1903 = vrot.slane %v1822, 5
        %v1904 = vrot.slane %v1903, 4
        %v1905 = vrot.slane %v813, 5
        %v1906 = vsel %vm1867, %v1904, %v1905
        %v1907 = vrot.slane %v1905, 4
        %v1908 = vrot.slane %v843, 5
        %v1909 = vsel %vm1867, %v1907, %v1908
        %v1910 = vrot.slane %v1823, 5
        %v1911 = vrot.slane %v1910, 4
        %v1912 = vrot.slane %v815, 5
        %v1913 = vsel %vm1867, %v1911, %v1912
        %v1914 = vrot.slane %v1912, 4
        %v1915 = vrot.slane %v844, 5
        %v1916 = vsel %vm1867, %v1914, %v1915
        %v1917 = vrot.slane %v1824, 5
        %v1918 = vrot.slane %v1917, 4
        %v1919 = vrot.slane %v817, 5
        %v1920 = vsel %vm1867, %v1918, %v1919
        %v1921 = vrot.slane %v1919, 4
        %v1922 = vrot.slane %v845, 5
        %v1923 = vsel %vm1867, %v1921, %v1922
        %v1924 = vrot.slane %v1825, 5
        %v1925 = vrot.slane %v1924, 4
        %v1926 = vrot.slane %v819, 5
        %v1927 = vsel %vm1867, %v1925, %v1926
        %v1928 = vrot.slane %v1926, 4
        %v1929 = vrot.slane %v846, 5
        %v1930 = vsel %vm1867, %v1928, %v1929
        %v1931 = vrot.slane %v1826, 5
        %v1932 = vrot.slane %v1931, 4
        %v1933 = vrot.slane %v821, 5
        %v1934 = vsel %vm1867, %v1932, %v1933
        %v1935 = vrot.slane %v1933, 4
        %v1936 = vrot.slane %v847, 5
        %v1937 = vsel %vm1867, %v1935, %v1936
        %v1938 = vrot.slane %v1827, 5
        %v1939 = vrot.slane %v1938, 4
        %v1940 = vrot.slane %v823, 5
        %v1941 = vsel %vm1867, %v1939, %v1940
        %v1942 = vrot.slane %v1940, 4
        %v1943 = vrot.slane %v848, 5
        %v1944 = vsel %vm1867, %v1942, %v1943
        %v1945 = vrot.slane %v1828, 5
        %v1946 = vrot.slane %v1945, 4
        %v1947 = vrot.slane %v825, 5
        %v1948 = vsel %vm1867, %v1946, %v1947
        %v1949 = vrot.slane %v1947, 4
        %v1950 = vrot.slane %v849, 5
        %v1951 = vsel %vm1867, %v1949, %v1950
        %v1952 = vrot.slane %v1829, 5
        %v1953 = vrot.slane %v1952, 4
        %v1954 = vrot.slane %v827, 5
        %v1955 = vsel %vm1867, %v1953, %v1954
        %v1956 = vrot.slane %v1954, 4
        %v1957 = vrot.slane %v850, 5
        %v1958 = vsel %vm1867, %v1956, %v1957
        %v1959 = vrot.slane %v1830, 5
        %v1960 = vrot.slane %v1959, 4
        %v1961 = vrot.slane %v829, 5
        %v1962 = vsel %vm1867, %v1960, %v1961
        %v1963 = vrot.slane %v1961, 4
        %v1964 = vrot.slane %v851, 5
        %v1965 = vsel %vm1867, %v1963, %v1964
        %v1966 = vrot.slane %v1831, 5
        %v1967 = vrot.slane %v1966, 4
        %v1968 = vrot.slane %v831, 5
        %v1969 = vsel %vm1867, %v1967, %v1968
        %v1970 = vrot.slane %v1968, 4
        %v1971 = vrot.slane %v852, 5
        %v1972 = vsel %vm1867, %v1970, %v1971
        %v1973 = vrot.slane %v1832, 5
        %v1974 = vrot.slane %v1973, 4
        %v1975 = vrot.slane %v833, 5
        %v1976 = vsel %vm1867, %v1974, %v1975
        %v1977 = vrot.slane %v1975, 4
        %v1978 = vrot.slane %v853, 5
        %v1979 = vsel %vm1867, %v1977, %v1978
        %s1980 = scalar_lea.vmem [#allocation6], 32
        %v1981 = vld [vmem:[%s1980] sm:$0xf]
        %v1982 = vld [vmem:[%s1980 + $0x4] sm:$0xf]
        %v1983 = vld [vmem:[%s1980 + $0x8] sm:$0xf]
        %v1984 = vld [vmem:[%s1980 + $0xc] sm:$0xf]
        %v1985 = vunpack.c.l.b16 %v1871
        %v1986 = vunpack.c.l.b16 %v1874
        %v1987 = vunpack.c.l.b16 %v1878
        %v1988 = vunpack.c.l.b16 %v1881
        %v1989 = vunpack.c.l.b16 %v1885
        %v1990 = vunpack.c.l.b16 %v1888
        %v1991 = vunpack.c.l.b16 %v1892
        %v1992 = vunpack.c.l.b16 %v1895
        %v1993 = vunpack.c.l.b16 %v1899
        %v1994 = vunpack.c.l.b16 %v1902
        %v1995 = vunpack.c.l.b16 %v1906
        %v1996 = vunpack.c.l.b16 %v1909
        %v1997 = vunpack.c.l.b16 %v1913
        %v1998 = vunpack.c.l.b16 %v1916
        %v1999 = vunpack.c.l.b16 %v1920
        %v2000 = vunpack.c.l.b16 %v1923
        %v2001 = vunpack.c.l.b16 %v1927
        %v2002 = vunpack.c.l.b16 %v1930
        %v2003 = vunpack.c.l.b16 %v1934
        %v2004 = vunpack.c.l.b16 %v1937
        %v2005 = vunpack.c.l.b16 %v1941
        %v2006 = vunpack.c.l.b16 %v1944
        %v2007 = vunpack.c.l.b16 %v1948
        %v2008 = vunpack.c.l.b16 %v1951
        %v2009 = vunpack.c.l.b16 %v1955
        %v2010 = vunpack.c.l.b16 %v1958
        %v2011 = vunpack.c.l.b16 %v1962
        %v2012 = vunpack.c.l.b16 %v1965
        %v2013 = vunpack.c.l.b16 %v1969
        %v2014 = vunpack.c.l.b16 %v1972
        %v2015 = vunpack.c.l.b16 %v1976
        %v2016 = vunpack.c.l.b16 %v1979
        %v2017 = vpack.c.b16 %v1986, %v1985
        %v2018 = vpack.c.b16 %v1988, %v1987
        %v2019 = vpack.c.b16 %v1990, %v1989
        %v2020 = vpack.c.b16 %v1992, %v1991
        %v2021 = vpack.c.b16 %v1994, %v1993
        %v2022 = vpack.c.b16 %v1996, %v1995
        %v2023 = vpack.c.b16 %v1998, %v1997
        %v2024 = vpack.c.b16 %v2000, %v1999
        %v2025 = vpack.c.b16 %v2002, %v2001
        %v2026 = vpack.c.b16 %v2004, %v2003
        %v2027 = vpack.c.b16 %v2006, %v2005
        %v2028 = vpack.c.b16 %v2008, %v2007
        %v2029 = vpack.c.b16 %v2010, %v2009
        %v2030 = vpack.c.b16 %v2012, %v2011
        %v2031 = vpack.c.b16 %v2014, %v2013
        %v2032 = vpack.c.b16 %v2016, %v2015
        %v2037 = vunpack.c.l.b16 %v1981
        %v2038 = vunpack.c.l.b16 %v1982
        %v2039 = vunpack.c.l.b16 %v1983
        %v2040 = vunpack.c.l.b16 %v1984
        %v2041 = vpack.c.b16 %v2038, %v2037
        %v2042 = vpack.c.b16 %v2040, %v2039
        %v2046 = vsel %vm1306, %v2017, 0
        %v2049 = vsel %vm1306, %v2018, 0
        %v2052 = vsel %vm1306, %v2019, 0
        %v2055 = vsel %vm1306, %v2020, 0
        %v2058 = vsel %vm1306, %v2021, 0
        %v2061 = vsel %vm1306, %v2022, 0
        %v2064 = vsel %vm1306, %v2023, 0
        %v2067 = vsel %vm1306, %v2024, 0
        %v2070 = vsel %vm1306, %v2025, 0
        %v2073 = vsel %vm1306, %v2026, 0
        %v2076 = vsel %vm1306, %v2027, 0
        %v2079 = vsel %vm1306, %v2028, 0
        %v2082 = vsel %vm1306, %v2029, 0
        %v2085 = vsel %vm1306, %v2030, 0
        %v2088 = vsel %vm1306, %v2031, 0
        %v2091 = vsel %vm1306, %v2032, 0
        %2093 = vmatprep.subr.bf16.mxu0 0
        %2094 = vmatpush1.bf16.msra.mxu0 %v2041
        %2095 = vmatprep.subr.bf16.mxu0 0
        %2096 = vmatpush1.bf16.msra.mxu0 %v2042
        %2097 = vmatprep.subr.bf16.mxu0 0
        %2098 = vmatpush1.bf16.msra.mxu0 0
        %2099 = vmatprep.subr.bf16.mxu0 0
        %2100 = vmatpush1.bf16.msra.mxu0 0
        %2101 = vmatprep.subr.bf16.mxu0 0
        %2102 = vmatpush1.bf16.msra.mxu0 0
        %2103 = vmatprep.subr.bf16.mxu0 0
        %2104 = vmatpush1.bf16.msra.mxu0 0
        %2105 = vmatprep.subr.bf16.mxu0 0
        %2106 = vmatpush1.bf16.msra.mxu0 0
        %2107 = vmatprep.subr.bf16.mxu0 0
        %2108 = vmatpush1.bf16.msra.mxu0 0
        %2109 = vmatprep.subr.bf16.mxu0 0
        %2110 = vmatpush1.bf16.msra.mxu0 0
        %2111 = vmatprep.subr.bf16.mxu0 0
        %2112 = vmatpush1.bf16.msra.mxu0 0
        %2113 = vmatprep.subr.bf16.mxu0 0
        %2114 = vmatpush1.bf16.msra.mxu0 0
        %2115 = vmatprep.subr.bf16.mxu0 0
        %2116 = vmatpush1.bf16.msra.mxu0 0
        %2117 = vmatprep.subr.bf16.mxu0 0
        %2118 = vmatpush1.bf16.msra.mxu0 0
        %2119 = vmatprep.subr.bf16.mxu0 0
        %2120 = vmatpush1.bf16.msra.mxu0 0
        %2121 = vmatprep.subr.bf16.mxu0 0
        %2122 = vmatpush1.bf16.msra.mxu0 0
        %2123 = vmatprep.subr.bf16.mxu0 0
        %2124 = vmatpush1.bf16.msra.mxu0 0
        %2125 = vmatprep.mubr.bf16.mxu0 0
        %2126 = vmatmul.mubr.bf16.gmra.mrb[0].mxu0 %v2046
        %v2127 = vpop.f32.mrb[0].mxu0
        %v2128 = vadd.f32 0.0, %v2127
        %v2129 = vpop.f32.mrb[0].mxu0
        %v2130 = vpop.f32.mrb[0].mxu0
        %v2131 = vadd.f32 0.0, %v2130
        %v2132 = vpop.f32.mrb[0].mxu0
        %2133 = vmatprep.mubr.bf16.mxu0 0
        %2134 = vmatmul.mubr.bf16.gmra.mrb[0].mxu0 %v2049
        %v2135 = vpop.f32.mrb[0].mxu0
        %v2136 = vadd.f32 0.0, %v2135
        %v2137 = vpop.f32.mrb[0].mxu0
        %v2138 = vpop.f32.mrb[0].mxu0
        %v2139 = vadd.f32 0.0, %v2138
        %v2140 = vpop.f32.mrb[0].mxu0
        %2141 = vmatprep.mubr.bf16.mxu0 0
        %2142 = vmatmul.mubr.bf16.gmra.mrb[0].mxu0 %v2052
        %v2143 = vpop.f32.mrb[0].mxu0
        %v2144 = vadd.f32 0.0, %v2143
        %v2145 = vpop.f32.mrb[0].mxu0
        %v2146 = vpop.f32.mrb[0].mxu0
        %v2147 = vadd.f32 0.0, %v2146
        %v2148 = vpop.f32.mrb[0].mxu0
        %2149 = vmatprep.mubr.bf16.mxu0 0
        %2150 = vmatmul.mubr.bf16.gmra.mrb[0].mxu0 %v2055
        %v2151 = vpop.f32.mrb[0].mxu0
        %v2152 = vadd.f32 0.0, %v2151
        %v2153 = vpop.f32.mrb[0].mxu0
        %v2154 = vpop.f32.mrb[0].mxu0
        %v2155 = vadd.f32 0.0, %v2154
        %v2156 = vpop.f32.mrb[0].mxu0
        %2157 = vmatprep.mubr.bf16.mxu0 0
        %2158 = vmatmul.mubr.bf16.gmra.mrb[0].mxu0 %v2058
        %v2159 = vpop.f32.mrb[0].mxu0
        %v2160 = vadd.f32 0.0, %v2159
        %v2161 = vpop.f32.mrb[0].mxu0
        %v2162 = vpop.f32.mrb[0].mxu0
        %v2163 = vadd.f32 0.0, %v2162
        %v2164 = vpop.f32.mrb[0].mxu0
        %2165 = vmatprep.mubr.bf16.mxu0 0
        %2166 = vmatmul.mubr.bf16.gmra.mrb[0].mxu0 %v2061
        %v2167 = vpop.f32.mrb[0].mxu0
        %v2168 = vadd.f32 0.0, %v2167
        %v2169 = vpop.f32.mrb[0].mxu0
        %v2170 = vpop.f32.mrb[0].mxu0
        %v2171 = vadd.f32 0.0, %v2170
        %v2172 = vpop.f32.mrb[0].mxu0
        %2173 = vmatprep.mubr.bf16.mxu0 0
        %2174 = vmatmul.mubr.bf16.gmra.mrb[0].mxu0 %v2064
        %v2175 = vpop.f32.mrb[0].mxu0
        %v2176 = vadd.f32 0.0, %v2175
        %v2177 = vpop.f32.mrb[0].mxu0
        %v2178 = vpop.f32.mrb[0].mxu0
        %v2179 = vadd.f32 0.0, %v2178
        %v2180 = vpop.f32.mrb[0].mxu0
        %2181 = vmatprep.mubr.bf16.mxu0 0
        %2182 = vmatmul.mubr.bf16.gmra.mrb[0].mxu0 %v2067
        %v2183 = vpop.f32.mrb[0].mxu0
        %v2184 = vadd.f32 0.0, %v2183
        %v2185 = vpop.f32.mrb[0].mxu0
        %v2186 = vpop.f32.mrb[0].mxu0
        %v2187 = vadd.f32 0.0, %v2186
        %v2188 = vpop.f32.mrb[0].mxu0
        %2189 = vmatprep.mubr.bf16.mxu0 0
        %2190 = vmatmul.mubr.bf16.gmra.mrb[0].mxu0 %v2070
        %v2191 = vpop.f32.mrb[0].mxu0
        %v2192 = vadd.f32 0.0, %v2191
        %v2193 = vpop.f32.mrb[0].mxu0
        %v2194 = vpop.f32.mrb[0].mxu0
        %v2195 = vadd.f32 0.0, %v2194
        %v2196 = vpop.f32.mrb[0].mxu0
        %2197 = vmatprep.mubr.bf16.mxu0 0
        %2198 = vmatmul.mubr.bf16.gmra.mrb[0].mxu0 %v2073
        %v2199 = vpop.f32.mrb[0].mxu0
        %v2200 = vadd.f32 0.0, %v2199
        %v2201 = vpop.f32.mrb[0].mxu0
        %v2202 = vpop.f32.mrb[0].mxu0
        %v2203 = vadd.f32 0.0, %v2202
        %v2204 = vpop.f32.mrb[0].mxu0
        %2205 = vmatprep.mubr.bf16.mxu0 0
        %2206 = vmatmul.mubr.bf16.gmra.mrb[0].mxu0 %v2076
        %v2207 = vpop.f32.mrb[0].mxu0
        %v2208 = vadd.f32 0.0, %v2207
        %v2209 = vpop.f32.mrb[0].mxu0
        %v2210 = vpop.f32.mrb[0].mxu0
        %v2211 = vadd.f32 0.0, %v2210
        %v2212 = vpop.f32.mrb[0].mxu0
        %2213 = vmatprep.mubr.bf16.mxu0 0
        %2214 = vmatmul.mubr.bf16.gmra.mrb[0].mxu0 %v2079
        %v2215 = vpop.f32.mrb[0].mxu0
        %v2216 = vadd.f32 0.0, %v2215
        %v2217 = vpop.f32.mrb[0].mxu0
        %v2218 = vpop.f32.mrb[0].mxu0
        %v2219 = vadd.f32 0.0, %v2218
        %v2220 = vpop.f32.mrb[0].mxu0
        %2221 = vmatprep.mubr.bf16.mxu0 0
        %2222 = vmatmul.mubr.bf16.gmra.mrb[0].mxu0 %v2082
        %v2223 = vpop.f32.mrb[0].mxu0
        %v2224 = vadd.f32 0.0, %v2223
        %v2225 = vpop.f32.mrb[0].mxu0
        %v2226 = vpop.f32.mrb[0].mxu0
        %v2227 = vadd.f32 0.0, %v2226
        %v2228 = vpop.f32.mrb[0].mxu0
        %2229 = vmatprep.mubr.bf16.mxu0 0
        %2230 = vmatmul.mubr.bf16.gmra.mrb[0].mxu0 %v2085
        %v2231 = vpop.f32.mrb[0].mxu0
        %v2232 = vadd.f32 0.0, %v2231
        %v2233 = vpop.f32.mrb[0].mxu0
        %v2234 = vpop.f32.mrb[0].mxu0
        %v2235 = vadd.f32 0.0, %v2234
        %v2236 = vpop.f32.mrb[0].mxu0
        %2237 = vmatprep.mubr.bf16.mxu0 0
        %2238 = vmatmul.mubr.bf16.gmra.mrb[0].mxu0 %v2088
        %v2239 = vpop.f32.mrb[0].mxu0
        %v2240 = vadd.f32 0.0, %v2239
        %v2241 = vpop.f32.mrb[0].mxu0
        %v2242 = vpop.f32.mrb[0].mxu0
        %v2243 = vadd.f32 0.0, %v2242
        %v2244 = vpop.f32.mrb[0].mxu0
        %2245 = vmatprep.mubr.bf16.mxu0 0
        %2246 = vmatmul.mubr.bf16.gmra.mrb[0].mxu0 %v2091
        %v2247 = vpop.f32.mrb[0].mxu0
        %v2248 = vadd.f32 0.0, %v2247
        %v2249 = vpop.f32.mrb[0].mxu0
        %v2250 = vpop.f32.mrb[0].mxu0
        %v2251 = vadd.f32 0.0, %v2250
        %v2252 = vpop.f32.mrb[0].mxu0
        %2253 = vdwg.mxu0
        %v2254 = vadd.f32 %v1691, %v2128
        %v2255 = vadd.f32 %v1694, %v2131
        %v2256 = vadd.f32 %v1699, %v2136
        %v2257 = vadd.f32 %v1702, %v2139
        %v2258 = vadd.f32 %v1707, %v2144
        %v2259 = vadd.f32 %v1710, %v2147
        %v2260 = vadd.f32 %v1715, %v2152
        %v2261 = vadd.f32 %v1718, %v2155
        %v2262 = vadd.f32 %v1723, %v2160
        %v2263 = vadd.f32 %v1726, %v2163
        %v2264 = vadd.f32 %v1731, %v2168
        %v2265 = vadd.f32 %v1734, %v2171
        %v2266 = vadd.f32 %v1739, %v2176
        %v2267 = vadd.f32 %v1742, %v2179
        %v2268 = vadd.f32 %v1747, %v2184
        %v2269 = vadd.f32 %v1750, %v2187
        %v2270 = vadd.f32 %v1755, %v2192
        %v2271 = vadd.f32 %v1758, %v2195
        %v2272 = vadd.f32 %v1763, %v2200
        %v2273 = vadd.f32 %v1766, %v2203
        %v2274 = vadd.f32 %v1771, %v2208
        %v2275 = vadd.f32 %v1774, %v2211
        %v2276 = vadd.f32 %v1779, %v2216
        %v2277 = vadd.f32 %v1782, %v2219
        %v2278 = vadd.f32 %v1787, %v2224
        %v2279 = vadd.f32 %v1790, %v2227
        %v2280 = vadd.f32 %v1795, %v2232
        %v2281 = vadd.f32 %v1798, %v2235
        %v2282 = vadd.f32 %v1803, %v2240
        %v2283 = vadd.f32 %v1806, %v2243
        %v2284 = vadd.f32 %v1811, %v2248
        %v2285 = vadd.f32 %v1814, %v2251
        %v2286 = vld [vmem:[%s684] sm:$0xf]
        %v2287 = vld [vmem:[%s684 + $0x4] sm:$0xf]
        %v2288 = vld [vmem:[%s684 + $0xc] sm:$0xf]
        %v2289 = vld [vmem:[%s684 + $0x10] sm:$0xf]
        %v2290 = vld [vmem:[%s684 + $0x18] sm:$0xf]
        %v2291 = vld [vmem:[%s684 + $0x1c] sm:$0xf]
        %v2292 = vld [vmem:[%s684 + $0x24] sm:$0xf]
        %v2293 = vld [vmem:[%s684 + $0x28] sm:$0xf]
        %v2294 = vld [vmem:[%s684 + $0x30] sm:$0xf]
        %v2295 = vld [vmem:[%s684 + $0x34] sm:$0xf]
        %v2296 = vld [vmem:[%s684 + $0x3c] sm:$0xf]
        %v2297 = vld [vmem:[%s684 + $0x40] sm:$0xf]
        %v2298 = vld [vmem:[%s684 + $0x48] sm:$0xf]
        %v2299 = vld [vmem:[%s684 + $0x4c] sm:$0xf]
        %v2300 = vld [vmem:[%s684 + $0x54] sm:$0xf]
        %v2301 = vld [vmem:[%s684 + $0x58] sm:$0xf]
        %v2302 = vld [vmem:[%s684 + $0x60] sm:$0xf]
        %v2303 = vld [vmem:[%s684 + $0x64] sm:$0xf]
        %v2304 = vld [vmem:[%s684 + $0x6c] sm:$0xf]
        %v2305 = vld [vmem:[%s684 + $0x70] sm:$0xf]
        %v2306 = vld [vmem:[%s684 + $0x78] sm:$0xf]
        %v2307 = vld [vmem:[%s684 + $0x7c] sm:$0xf]
        %v2308 = vld [vmem:[%s684 + $0x84] sm:$0xf]
        %v2309 = vld [vmem:[%s684 + $0x88] sm:$0xf]
        %v2310 = vld [vmem:[%s684 + $0x90] sm:$0xf]
        %v2311 = vld [vmem:[%s684 + $0x94] sm:$0xf]
        %v2312 = vld [vmem:[%s684 + $0x9c] sm:$0xf]
        %v2313 = vld [vmem:[%s684 + $0xa0] sm:$0xf]
        %v2314 = vld [vmem:[%s684 + $0xa8] sm:$0xf]
        %v2315 = vld [vmem:[%s684 + $0xac] sm:$0xf]
        %v2316 = vld [vmem:[%s684 + $0xb4] sm:$0xf]
        %v2317 = vld [vmem:[%s684 + $0xb8] sm:$0xf]
        %s2318 = scalar_lea.vmem [#allocation6], 48
        %v2319 = vld [vmem:[%s2318] sm:$0xf]
        %v2320 = vld [vmem:[%s2318 + $0x4] sm:$0xf]
        %v2321 = vld [vmem:[%s2318 + $0x8] sm:$0xf]
        %v2322 = vld [vmem:[%s2318 + $0xc] sm:$0xf]
        %v2355 = vunpack.c.l.b16 %v2286
        %v2356 = vunpack.c.l.b16 %v2287
        %v2357 = vunpack.c.l.b16 %v2288
        %v2358 = vunpack.c.l.b16 %v2289
        %v2359 = vunpack.c.l.b16 %v2290
        %v2360 = vunpack.c.l.b16 %v2291
        %v2361 = vunpack.c.l.b16 %v2292
        %v2362 = vunpack.c.l.b16 %v2293
        %v2363 = vunpack.c.l.b16 %v2294
        %v2364 = vunpack.c.l.b16 %v2295
        %v2365 = vunpack.c.l.b16 %v2296
        %v2366 = vunpack.c.l.b16 %v2297
        %v2367 = vunpack.c.l.b16 %v2298
        %v2368 = vunpack.c.l.b16 %v2299
        %v2369 = vunpack.c.l.b16 %v2300
        %v2370 = vunpack.c.l.b16 %v2301
        %v2371 = vunpack.c.l.b16 %v2302
        %v2372 = vunpack.c.l.b16 %v2303
        %v2373 = vunpack.c.l.b16 %v2304
        %v2374 = vunpack.c.l.b16 %v2305
        %v2375 = vunpack.c.l.b16 %v2306
        %v2376 = vunpack.c.l.b16 %v2307
        %v2377 = vunpack.c.l.b16 %v2308
        %v2378 = vunpack.c.l.b16 %v2309
        %v2379 = vunpack.c.l.b16 %v2310
        %v2380 = vunpack.c.l.b16 %v2311
        %v2381 = vunpack.c.l.b16 %v2312
        %v2382 = vunpack.c.l.b16 %v2313
        %v2383 = vunpack.c.l.b16 %v2314
        %v2384 = vunpack.c.l.b16 %v2315
        %v2385 = vunpack.c.l.b16 %v2316
        %v2386 = vunpack.c.l.b16 %v2317
        %v2387 = vpack.c.b16 %v2356, %v2355
        %v2388 = vpack.c.b16 %v2358, %v2357
        %v2389 = vpack.c.b16 %v2360, %v2359
        %v2390 = vpack.c.b16 %v2362, %v2361
        %v2391 = vpack.c.b16 %v2364, %v2363
        %v2392 = vpack.c.b16 %v2366, %v2365
        %v2393 = vpack.c.b16 %v2368, %v2367
        %v2394 = vpack.c.b16 %v2370, %v2369
        %v2395 = vpack.c.b16 %v2372, %v2371
        %v2396 = vpack.c.b16 %v2374, %v2373
        %v2397 = vpack.c.b16 %v2376, %v2375
        %v2398 = vpack.c.b16 %v2378, %v2377
        %v2399 = vpack.c.b16 %v2380, %v2379
        %v2400 = vpack.c.b16 %v2382, %v2381
        %v2401 = vpack.c.b16 %v2384, %v2383
        %v2402 = vpack.c.b16 %v2386, %v2385
        %v2407 = vunpack.c.l.b16 %v2319
        %v2408 = vunpack.c.l.b16 %v2320
        %v2409 = vunpack.c.l.b16 %v2321
        %v2410 = vunpack.c.l.b16 %v2322
        %v2411 = vpack.c.b16 %v2408, %v2407
        %v2412 = vpack.c.b16 %v2410, %v2409
        %v2416 = vsel %vm1306, %v2387, 0
        %v2419 = vsel %vm1306, %v2388, 0
        %v2422 = vsel %vm1306, %v2389, 0
        %v2425 = vsel %vm1306, %v2390, 0
        %v2428 = vsel %vm1306, %v2391, 0
        %v2431 = vsel %vm1306, %v2392, 0
        %v2434 = vsel %vm1306, %v2393, 0
        %v2437 = vsel %vm1306, %v2394, 0
        %v2440 = vsel %vm1306, %v2395, 0
        %v2443 = vsel %vm1306, %v2396, 0
        %v2446 = vsel %vm1306, %v2397, 0
        %v2449 = vsel %vm1306, %v2398, 0
        %v2452 = vsel %vm1306, %v2399, 0
        %v2455 = vsel %vm1306, %v2400, 0
        %v2458 = vsel %vm1306, %v2401, 0
        %v2461 = vsel %vm1306, %v2402, 0
        %2463 = vmatprep.subr.bf16.mxu0 0
        %2464 = vmatpush1.bf16.msra.mxu0 %v2411
        %2465 = vmatprep.subr.bf16.mxu0 0
        %2466 = vmatpush1.bf16.msra.mxu0 %v2412
        %2467 = vmatprep.subr.bf16.mxu0 0
        %2468 = vmatpush1.bf16.msra.mxu0 0
        %2469 = vmatprep.subr.bf16.mxu0 0
        %2470 = vmatpush1.bf16.msra.mxu0 0
        %2471 = vmatprep.subr.bf16.mxu0 0
        %2472 = vmatpush1.bf16.msra.mxu0 0
        %2473 = vmatprep.subr.bf16.mxu0 0
        %2474 = vmatpush1.bf16.msra.mxu0 0
        %2475 = vmatprep.subr.bf16.mxu0 0
        %2476 = vmatpush1.bf16.msra.mxu0 0
        %2477 = vmatprep.subr.bf16.mxu0 0
        %2478 = vmatpush1.bf16.msra.mxu0 0
        %2479 = vmatprep.subr.bf16.mxu0 0
        %2480 = vmatpush1.bf16.msra.mxu0 0
        %2481 = vmatprep.subr.bf16.mxu0 0
        %2482 = vmatpush1.bf16.msra.mxu0 0
        %2483 = vmatprep.subr.bf16.mxu0 0
        %2484 = vmatpush1.bf16.msra.mxu0 0
        %2485 = vmatprep.subr.bf16.mxu0 0
        %2486 = vmatpush1.bf16.msra.mxu0 0
        %2487 = vmatprep.subr.bf16.mxu0 0
        %2488 = vmatpush1.bf16.msra.mxu0 0
        %2489 = vmatprep.subr.bf16.mxu0 0
        %2490 = vmatpush1.bf16.msra.mxu0 0
        %2491 = vmatprep.subr.bf16.mxu0 0
        %2492 = vmatpush1.bf16.msra.mxu0 0
        %2493 = vmatprep.subr.bf16.mxu0 0
        %2494 = vmatpush1.bf16.msra.mxu0 0
        %2495 = vmatprep.mubr.bf16.mxu0 0
        %2496 = vmatmul.mubr.bf16.gmra.mrb[0].mxu0 %v2416
        %v2497 = vpop.f32.mrb[0].mxu0
        %v2498 = vadd.f32 0.0, %v2497
        %v2499 = vpop.f32.mrb[0].mxu0
        %v2500 = vpop.f32.mrb[0].mxu0
        %v2501 = vadd.f32 0.0, %v2500
        %v2502 = vpop.f32.mrb[0].mxu0
        %2503 = vmatprep.mubr.bf16.mxu0 0
        %2504 = vmatmul.mubr.bf16.gmra.mrb[0].mxu0 %v2419
        %v2505 = vpop.f32.mrb[0].mxu0
        %v2506 = vadd.f32 0.0, %v2505
        %v2507 = vpop.f32.mrb[0].mxu0
        %v2508 = vpop.f32.mrb[0].mxu0
        %v2509 = vadd.f32 0.0, %v2508
        %v2510 = vpop.f32.mrb[0].mxu0
        %2511 = vmatprep.mubr.bf16.mxu0 0
        %2512 = vmatmul.mubr.bf16.gmra.mrb[0].mxu0 %v2422
        %v2513 = vpop.f32.mrb[0].mxu0
        %v2514 = vadd.f32 0.0, %v2513
        %v2515 = vpop.f32.mrb[0].mxu0
        %v2516 = vpop.f32.mrb[0].mxu0
        %v2517 = vadd.f32 0.0, %v2516
        %v2518 = vpop.f32.mrb[0].mxu0
        %2519 = vmatprep.mubr.bf16.mxu0 0
        %2520 = vmatmul.mubr.bf16.gmra.mrb[0].mxu0 %v2425
        %v2521 = vpop.f32.mrb[0].mxu0
        %v2522 = vadd.f32 0.0, %v2521
        %v2523 = vpop.f32.mrb[0].mxu0
        %v2524 = vpop.f32.mrb[0].mxu0
        %v2525 = vadd.f32 0.0, %v2524
        %v2526 = vpop.f32.mrb[0].mxu0
        %2527 = vmatprep.mubr.bf16.mxu0 0
        %2528 = vmatmul.mubr.bf16.gmra.mrb[0].mxu0 %v2428
        %v2529 = vpop.f32.mrb[0].mxu0
        %v2530 = vadd.f32 0.0, %v2529
        %v2531 = vpop.f32.mrb[0].mxu0
        %v2532 = vpop.f32.mrb[0].mxu0
        %v2533 = vadd.f32 0.0, %v2532
        %v2534 = vpop.f32.mrb[0].mxu0
        %2535 = vmatprep.mubr.bf16.mxu0 0
        %2536 = vmatmul.mubr.bf16.gmra.mrb[0].mxu0 %v2431
        %v2537 = vpop.f32.mrb[0].mxu0
        %v2538 = vadd.f32 0.0, %v2537
        %v2539 = vpop.f32.mrb[0].mxu0
        %v2540 = vpop.f32.mrb[0].mxu0
        %v2541 = vadd.f32 0.0, %v2540
        %v2542 = vpop.f32.mrb[0].mxu0
        %2543 = vmatprep.mubr.bf16.mxu0 0
        %2544 = vmatmul.mubr.bf16.gmra.mrb[0].mxu0 %v2434
        %v2545 = vpop.f32.mrb[0].mxu0
        %v2546 = vadd.f32 0.0, %v2545
        %v2547 = vpop.f32.mrb[0].mxu0
        %v2548 = vpop.f32.mrb[0].mxu0
        %v2549 = vadd.f32 0.0, %v2548
        %v2550 = vpop.f32.mrb[0].mxu0
        %2551 = vmatprep.mubr.bf16.mxu0 0
        %2552 = vmatmul.mubr.bf16.gmra.mrb[0].mxu0 %v2437
        %v2553 = vpop.f32.mrb[0].mxu0
        %v2554 = vadd.f32 0.0, %v2553
        %v2555 = vpop.f32.mrb[0].mxu0
        %v2556 = vpop.f32.mrb[0].mxu0
        %v2557 = vadd.f32 0.0, %v2556
        %v2558 = vpop.f32.mrb[0].mxu0
        %2559 = vmatprep.mubr.bf16.mxu0 0
        %2560 = vmatmul.mubr.bf16.gmra.mrb[0].mxu0 %v2440
        %v2561 = vpop.f32.mrb[0].mxu0
        %v2562 = vadd.f32 0.0, %v2561
        %v2563 = vpop.f32.mrb[0].mxu0
        %v2564 = vpop.f32.mrb[0].mxu0
        %v2565 = vadd.f32 0.0, %v2564
        %v2566 = vpop.f32.mrb[0].mxu0
        %2567 = vmatprep.mubr.bf16.mxu0 0
        %2568 = vmatmul.mubr.bf16.gmra.mrb[0].mxu0 %v2443
        %v2569 = vpop.f32.mrb[0].mxu0
        %v2570 = vadd.f32 0.0, %v2569
        %v2571 = vpop.f32.mrb[0].mxu0
        %v2572 = vpop.f32.mrb[0].mxu0
        %v2573 = vadd.f32 0.0, %v2572
        %v2574 = vpop.f32.mrb[0].mxu0
        %2575 = vmatprep.mubr.bf16.mxu0 0
        %2576 = vmatmul.mubr.bf16.gmra.mrb[0].mxu0 %v2446
        %v2577 = vpop.f32.mrb[0].mxu0
        %v2578 = vadd.f32 0.0, %v2577
        %v2579 = vpop.f32.mrb[0].mxu0
        %v2580 = vpop.f32.mrb[0].mxu0
        %v2581 = vadd.f32 0.0, %v2580
        %v2582 = vpop.f32.mrb[0].mxu0
        %2583 = vmatprep.mubr.bf16.mxu0 0
        %2584 = vmatmul.mubr.bf16.gmra.mrb[0].mxu0 %v2449
        %v2585 = vpop.f32.mrb[0].mxu0
        %v2586 = vadd.f32 0.0, %v2585
        %v2587 = vpop.f32.mrb[0].mxu0
        %v2588 = vpop.f32.mrb[0].mxu0
        %v2589 = vadd.f32 0.0, %v2588
        %v2590 = vpop.f32.mrb[0].mxu0
        %2591 = vmatprep.mubr.bf16.mxu0 0
        %2592 = vmatmul.mubr.bf16.gmra.mrb[0].mxu0 %v2452
        %v2593 = vpop.f32.mrb[0].mxu0
        %v2594 = vadd.f32 0.0, %v2593
        %v2595 = vpop.f32.mrb[0].mxu0
        %v2596 = vpop.f32.mrb[0].mxu0
        %v2597 = vadd.f32 0.0, %v2596
        %v2598 = vpop.f32.mrb[0].mxu0
        %2599 = vmatprep.mubr.bf16.mxu0 0
        %2600 = vmatmul.mubr.bf16.gmra.mrb[0].mxu0 %v2455
        %v2601 = vpop.f32.mrb[0].mxu0
        %v2602 = vadd.f32 0.0, %v2601
        %v2603 = vpop.f32.mrb[0].mxu0
        %v2604 = vpop.f32.mrb[0].mxu0
        %v2605 = vadd.f32 0.0, %v2604
        %v2606 = vpop.f32.mrb[0].mxu0
        %2607 = vmatprep.mubr.bf16.mxu0 0
        %2608 = vmatmul.mubr.bf16.gmra.mrb[0].mxu0 %v2458
        %v2609 = vpop.f32.mrb[0].mxu0
        %v2610 = vadd.f32 0.0, %v2609
        %v2611 = vpop.f32.mrb[0].mxu0
        %v2612 = vpop.f32.mrb[0].mxu0
        %v2613 = vadd.f32 0.0, %v2612
        %v2614 = vpop.f32.mrb[0].mxu0
        %2615 = vmatprep.mubr.bf16.mxu0 0
        %2616 = vmatmul.mubr.bf16.gmra.mrb[0].mxu0 %v2461
        %v2617 = vpop.f32.mrb[0].mxu0
        %v2618 = vadd.f32 0.0, %v2617
        %v2619 = vpop.f32.mrb[0].mxu0
        %v2620 = vpop.f32.mrb[0].mxu0
        %v2621 = vadd.f32 0.0, %v2620
        %v2622 = vpop.f32.mrb[0].mxu0
        %2623 = vdwg.mxu0
        %v2624 = vadd.f32 %v2254, %v2498
        %v2625 = vadd.f32 %v2255, %v2501
        %v2626 = vadd.f32 %v2256, %v2506
        %v2627 = vadd.f32 %v2257, %v2509
        %v2628 = vadd.f32 %v2258, %v2514
        %v2629 = vadd.f32 %v2259, %v2517
        %v2630 = vadd.f32 %v2260, %v2522
        %v2631 = vadd.f32 %v2261, %v2525
        %v2632 = vadd.f32 %v2262, %v2530
        %v2633 = vadd.f32 %v2263, %v2533
        %v2634 = vadd.f32 %v2264, %v2538
        %v2635 = vadd.f32 %v2265, %v2541
        %v2636 = vadd.f32 %v2266, %v2546
        %v2637 = vadd.f32 %v2267, %v2549
        %v2638 = vadd.f32 %v2268, %v2554
        %v2639 = vadd.f32 %v2269, %v2557
        %v2640 = vadd.f32 %v2270, %v2562
        %v2641 = vadd.f32 %v2271, %v2565
        %v2642 = vadd.f32 %v2272, %v2570
        %v2643 = vadd.f32 %v2273, %v2573
        %v2644 = vadd.f32 %v2274, %v2578
        %v2645 = vadd.f32 %v2275, %v2581
        %v2646 = vadd.f32 %v2276, %v2586
        %v2647 = vadd.f32 %v2277, %v2589
        %v2648 = vadd.f32 %v2278, %v2594
        %v2649 = vadd.f32 %v2279, %v2597
        %v2650 = vadd.f32 %v2280, %v2602
        %v2651 = vadd.f32 %v2281, %v2605
        %v2652 = vadd.f32 %v2282, %v2610
        %v2653 = vadd.f32 %v2283, %v2613
        %v2654 = vadd.f32 %v2284, %v2618
        %v2655 = vadd.f32 %v2285, %v2621
        %v2656 = vld [vmem:[%s684] sm:$0xf]
        %v2657 = vld [vmem:[%s684 + $0x4] sm:$0xf]
        %v2658 = vld [vmem:[%s684 + $0x8] sm:$0x1]
        %v2659 = vld [vmem:[%s684 + $0xc] sm:$0xf]
        %v2660 = vld [vmem:[%s684 + $0x10] sm:$0xf]
        %v2661 = vld [vmem:[%s684 + $0x14] sm:$0x1]
        %v2662 = vld [vmem:[%s684 + $0x18] sm:$0xf]
        %v2663 = vld [vmem:[%s684 + $0x1c] sm:$0xf]
        %v2664 = vld [vmem:[%s684 + $0x20] sm:$0x1]
        %v2665 = vld [vmem:[%s684 + $0x24] sm:$0xf]
        %v2666 = vld [vmem:[%s684 + $0x28] sm:$0xf]
        %v2667 = vld [vmem:[%s684 + $0x2c] sm:$0x1]
        %v2668 = vld [vmem:[%s684 + $0x30] sm:$0xf]
        %v2669 = vld [vmem:[%s684 + $0x34] sm:$0xf]
        %v2670 = vld [vmem:[%s684 + $0x38] sm:$0x1]
        %v2671 = vld [vmem:[%s684 + $0x3c] sm:$0xf]
        %v2672 = vld [vmem:[%s684 + $0x40] sm:$0xf]
        %v2673 = vld [vmem:[%s684 + $0x44] sm:$0x1]
        %v2674 = vld [vmem:[%s684 + $0x48] sm:$0xf]
        %v2675 = vld [vmem:[%s684 + $0x4c] sm:$0xf]
        %v2676 = vld [vmem:[%s684 + $0x50] sm:$0x1]
        %v2677 = vld [vmem:[%s684 + $0x54] sm:$0xf]
        %v2678 = vld [vmem:[%s684 + $0x58] sm:$0xf]
        %v2679 = vld [vmem:[%s684 + $0x5c] sm:$0x1]
        %v2680 = vld [vmem:[%s684 + $0x60] sm:$0xf]
        %v2681 = vld [vmem:[%s684 + $0x64] sm:$0xf]
        %v2682 = vld [vmem:[%s684 + $0x68] sm:$0x1]
        %v2683 = vld [vmem:[%s684 + $0x6c] sm:$0xf]
        %v2684 = vld [vmem:[%s684 + $0x70] sm:$0xf]
        %v2685 = vld [vmem:[%s684 + $0x74] sm:$0x1]
        %v2686 = vld [vmem:[%s684 + $0x78] sm:$0xf]
        %v2687 = vld [vmem:[%s684 + $0x7c] sm:$0xf]
        %v2688 = vld [vmem:[%s684 + $0x80] sm:$0x1]
        %v2689 = vld [vmem:[%s684 + $0x84] sm:$0xf]
        %v2690 = vld [vmem:[%s684 + $0x88] sm:$0xf]
        %v2691 = vld [vmem:[%s684 + $0x8c] sm:$0x1]
        %v2692 = vld [vmem:[%s684 + $0x90] sm:$0xf]
        %v2693 = vld [vmem:[%s684 + $0x94] sm:$0xf]
        %v2694 = vld [vmem:[%s684 + $0x98] sm:$0x1]
        %v2695 = vld [vmem:[%s684 + $0x9c] sm:$0xf]
        %v2696 = vld [vmem:[%s684 + $0xa0] sm:$0xf]
        %v2697 = vld [vmem:[%s684 + $0xa4] sm:$0x1]
        %v2698 = vld [vmem:[%s684 + $0xa8] sm:$0xf]
        %v2699 = vld [vmem:[%s684 + $0xac] sm:$0xf]
        %v2700 = vld [vmem:[%s684 + $0xb0] sm:$0x1]
        %v2701 = vld [vmem:[%s684 + $0xb4] sm:$0xf]
        %v2702 = vld [vmem:[%s684 + $0xb8] sm:$0xf]
        %v2703 = vld [vmem:[%s684 + $0xbc] sm:$0x1]
        %v2705 = vshrl.u32 %v2656, 16
        %v2707 = vrot.slane %v2705, 4
        %v2708 = vshll.u32 %v2656, 16
        %v2710 = vrot.slane %v2708, 5
        %v2711 = vor.u32 %v2707, %v2710
        %v2712 = vrot.slane %v2711, 4
        %v2714 = vshll.u32 %v2657, 16
        %v2716 = vrot.slane %v2714, 5
        %v2717 = vsel %vm856, %v2712, %v2716
        %v2718 = vshrl.u32 %v2657, 16
        %v2720 = vrot.slane %v2718, 4
        %v2721 = vor.u32 %v2720, %v2716
        %v2722 = vrot.slane %v2721, 4
        %v2724 = vshll.u32 %v2658, 16
        %v2726 = vrot.slane %v2724, 5
        %v2727 = vsel %vm856, %v2722, %v2726
        %v2729 = vshrl.u32 %v2659, 16
        %v2731 = vrot.slane %v2729, 4
        %v2732 = vshll.u32 %v2659, 16
        %v2734 = vrot.slane %v2732, 5
        %v2735 = vor.u32 %v2731, %v2734
        %v2736 = vrot.slane %v2735, 4
        %v2738 = vshll.u32 %v2660, 16
        %v2740 = vrot.slane %v2738, 5
        %v2741 = vsel %vm856, %v2736, %v2740
        %v2742 = vshrl.u32 %v2660, 16
        %v2744 = vrot.slane %v2742, 4
        %v2745 = vor.u32 %v2744, %v2740
        %v2746 = vrot.slane %v2745, 4
        %v2748 = vshll.u32 %v2661, 16
        %v2750 = vrot.slane %v2748, 5
        %v2751 = vsel %vm856, %v2746, %v2750
        %v2753 = vshrl.u32 %v2662, 16
        %v2755 = vrot.slane %v2753, 4
        %v2756 = vshll.u32 %v2662, 16
        %v2758 = vrot.slane %v2756, 5
        %v2759 = vor.u32 %v2755, %v2758
        %v2760 = vrot.slane %v2759, 4
        %v2762 = vshll.u32 %v2663, 16
        %v2764 = vrot.slane %v2762, 5
        %v2765 = vsel %vm856, %v2760, %v2764
        %v2766 = vshrl.u32 %v2663, 16
        %v2768 = vrot.slane %v2766, 4
        %v2769 = vor.u32 %v2768, %v2764
        %v2770 = vrot.slane %v2769, 4
        %v2772 = vshll.u32 %v2664, 16
        %v2774 = vrot.slane %v2772, 5
        %v2775 = vsel %vm856, %v2770, %v2774
        %v2777 = vshrl.u32 %v2665, 16
        %v2779 = vrot.slane %v2777, 4
        %v2780 = vshll.u32 %v2665, 16
        %v2782 = vrot.slane %v2780, 5
        %v2783 = vor.u32 %v2779, %v2782
        %v2784 = vrot.slane %v2783, 4
        %v2786 = vshll.u32 %v2666, 16
        %v2788 = vrot.slane %v2786, 5
        %v2789 = vsel %vm856, %v2784, %v2788
        %v2790 = vshrl.u32 %v2666, 16
        %v2792 = vrot.slane %v2790, 4
        %v2793 = vor.u32 %v2792, %v2788
        %v2794 = vrot.slane %v2793, 4
        %v2796 = vshll.u32 %v2667, 16
        %v2798 = vrot.slane %v2796, 5
        %v2799 = vsel %vm856, %v2794, %v2798
        %v2801 = vshrl.u32 %v2668, 16
        %v2803 = vrot.slane %v2801, 4
        %v2804 = vshll.u32 %v2668, 16
        %v2806 = vrot.slane %v2804, 5
        %v2807 = vor.u32 %v2803, %v2806
        %v2808 = vrot.slane %v2807, 4
        %v2810 = vshll.u32 %v2669, 16
        %v2812 = vrot.slane %v2810, 5
        %v2813 = vsel %vm856, %v2808, %v2812
        %v2814 = vshrl.u32 %v2669, 16
        %v2816 = vrot.slane %v2814, 4
        %v2817 = vor.u32 %v2816, %v2812
        %v2818 = vrot.slane %v2817, 4
        %v2820 = vshll.u32 %v2670, 16
        %v2822 = vrot.slane %v2820, 5
        %v2823 = vsel %vm856, %v2818, %v2822
        %v2825 = vshrl.u32 %v2671, 16
        %v2827 = vrot.slane %v2825, 4
        %v2828 = vshll.u32 %v2671, 16
        %v2830 = vrot.slane %v2828, 5
        %v2831 = vor.u32 %v2827, %v2830
        %v2832 = vrot.slane %v2831, 4
        %v2834 = vshll.u32 %v2672, 16
        %v2836 = vrot.slane %v2834, 5
        %v2837 = vsel %vm856, %v2832, %v2836
        %v2838 = vshrl.u32 %v2672, 16
        %v2840 = vrot.slane %v2838, 4
        %v2841 = vor.u32 %v2840, %v2836
        %v2842 = vrot.slane %v2841, 4
        %v2844 = vshll.u32 %v2673, 16
        %v2846 = vrot.slane %v2844, 5
        %v2847 = vsel %vm856, %v2842, %v2846
        %v2849 = vshrl.u32 %v2674, 16
        %v2851 = vrot.slane %v2849, 4
        %v2852 = vshll.u32 %v2674, 16
        %v2854 = vrot.slane %v2852, 5
        %v2855 = vor.u32 %v2851, %v2854
        %v2856 = vrot.slane %v2855, 4
        %v2858 = vshll.u32 %v2675, 16
        %v2860 = vrot.slane %v2858, 5
        %v2861 = vsel %vm856, %v2856, %v2860
        %v2862 = vshrl.u32 %v2675, 16
        %v2864 = vrot.slane %v2862, 4
        %v2865 = vor.u32 %v2864, %v2860
        %v2866 = vrot.slane %v2865, 4
        %v2868 = vshll.u32 %v2676, 16
        %v2870 = vrot.slane %v2868, 5
        %v2871 = vsel %vm856, %v2866, %v2870
        %v2873 = vshrl.u32 %v2677, 16
        %v2875 = vrot.slane %v2873, 4
        %v2876 = vshll.u32 %v2677, 16
        %v2878 = vrot.slane %v2876, 5
        %v2879 = vor.u32 %v2875, %v2878
        %v2880 = vrot.slane %v2879, 4
        %v2882 = vshll.u32 %v2678, 16
        %v2884 = vrot.slane %v2882, 5
        %v2885 = vsel %vm856, %v2880, %v2884
        %v2886 = vshrl.u32 %v2678, 16
        %v2888 = vrot.slane %v2886, 4
        %v2889 = vor.u32 %v2888, %v2884
        %v2890 = vrot.slane %v2889, 4
        %v2892 = vshll.u32 %v2679, 16
        %v2894 = vrot.slane %v2892, 5
        %v2895 = vsel %vm856, %v2890, %v2894
        %v2897 = vshrl.u32 %v2680, 16
        %v2899 = vrot.slane %v2897, 4
        %v2900 = vshll.u32 %v2680, 16
        %v2902 = vrot.slane %v2900, 5
        %v2903 = vor.u32 %v2899, %v2902
        %v2904 = vrot.slane %v2903, 4
        %v2906 = vshll.u32 %v2681, 16
        %v2908 = vrot.slane %v2906, 5
        %v2909 = vsel %vm856, %v2904, %v2908
        %v2910 = vshrl.u32 %v2681, 16
        %v2912 = vrot.slane %v2910, 4
        %v2913 = vor.u32 %v2912, %v2908
        %v2914 = vrot.slane %v2913, 4
        %v2916 = vshll.u32 %v2682, 16
        %v2918 = vrot.slane %v2916, 5
        %v2919 = vsel %vm856, %v2914, %v2918
        %v2921 = vshrl.u32 %v2683, 16
        %v2923 = vrot.slane %v2921, 4
        %v2924 = vshll.u32 %v2683, 16
        %v2926 = vrot.slane %v2924, 5
        %v2927 = vor.u32 %v2923, %v2926
        %v2928 = vrot.slane %v2927, 4
        %v2930 = vshll.u32 %v2684, 16
        %v2932 = vrot.slane %v2930, 5
        %v2933 = vsel %vm856, %v2928, %v2932
        %v2934 = vshrl.u32 %v2684, 16
        %v2936 = vrot.slane %v2934, 4
        %v2937 = vor.u32 %v2936, %v2932
        %v2938 = vrot.slane %v2937, 4
        %v2940 = vshll.u32 %v2685, 16
        %v2942 = vrot.slane %v2940, 5
        %v2943 = vsel %vm856, %v2938, %v2942
        %v2945 = vshrl.u32 %v2686, 16
        %v2947 = vrot.slane %v2945, 4
        %v2948 = vshll.u32 %v2686, 16
        %v2950 = vrot.slane %v2948, 5
        %v2951 = vor.u32 %v2947, %v2950
        %v2952 = vrot.slane %v2951, 4
        %v2954 = vshll.u32 %v2687, 16
        %v2956 = vrot.slane %v2954, 5
        %v2957 = vsel %vm856, %v2952, %v2956
        %v2958 = vshrl.u32 %v2687, 16
        %v2960 = vrot.slane %v2958, 4
        %v2961 = vor.u32 %v2960, %v2956
        %v2962 = vrot.slane %v2961, 4
        %v2964 = vshll.u32 %v2688, 16
        %v2966 = vrot.slane %v2964, 5
        %v2967 = vsel %vm856, %v2962, %v2966
        %v2969 = vshrl.u32 %v2689, 16
        %v2971 = vrot.slane %v2969, 4
        %v2972 = vshll.u32 %v2689, 16
        %v2974 = vrot.slane %v2972, 5
        %v2975 = vor.u32 %v2971, %v2974
        %v2976 = vrot.slane %v2975, 4
        %v2978 = vshll.u32 %v2690, 16
        %v2980 = vrot.slane %v2978, 5
        %v2981 = vsel %vm856, %v2976, %v2980
        %v2982 = vshrl.u32 %v2690, 16
        %v2984 = vrot.slane %v2982, 4
        %v2985 = vor.u32 %v2984, %v2980
        %v2986 = vrot.slane %v2985, 4
        %v2988 = vshll.u32 %v2691, 16
        %v2990 = vrot.slane %v2988, 5
        %v2991 = vsel %vm856, %v2986, %v2990
        %v2993 = vshrl.u32 %v2692, 16
        %v2995 = vrot.slane %v2993, 4
        %v2996 = vshll.u32 %v2692, 16
        %v2998 = vrot.slane %v2996, 5
        %v2999 = vor.u32 %v2995, %v2998
        %v3000 = vrot.slane %v2999, 4
        %v3002 = vshll.u32 %v2693, 16
        %v3004 = vrot.slane %v3002, 5
        %v3005 = vsel %vm856, %v3000, %v3004
        %v3006 = vshrl.u32 %v2693, 16
        %v3008 = vrot.slane %v3006, 4
        %v3009 = vor.u32 %v3008, %v3004
        %v3010 = vrot.slane %v3009, 4
        %v3012 = vshll.u32 %v2694, 16
        %v3014 = vrot.slane %v3012, 5
        %v3015 = vsel %vm856, %v3010, %v3014
        %v3017 = vshrl.u32 %v2695, 16
        %v3019 = vrot.slane %v3017, 4
        %v3020 = vshll.u32 %v2695, 16
        %v3022 = vrot.slane %v3020, 5
        %v3023 = vor.u32 %v3019, %v3022
        %v3024 = vrot.slane %v3023, 4
        %v3026 = vshll.u32 %v2696, 16
        %v3028 = vrot.slane %v3026, 5
        %v3029 = vsel %vm856, %v3024, %v3028
        %v3030 = vshrl.u32 %v2696, 16
        %v3032 = vrot.slane %v3030, 4
        %v3033 = vor.u32 %v3032, %v3028
        %v3034 = vrot.slane %v3033, 4
        %v3036 = vshll.u32 %v2697, 16
        %v3038 = vrot.slane %v3036, 5
        %v3039 = vsel %vm856, %v3034, %v3038
        %v3041 = vshrl.u32 %v2698, 16
        %v3043 = vrot.slane %v3041, 4
        %v3044 = vshll.u32 %v2698, 16
        %v3046 = vrot.slane %v3044, 5
        %v3047 = vor.u32 %v3043, %v3046
        %v3048 = vrot.slane %v3047, 4
        %v3050 = vshll.u32 %v2699, 16
        %v3052 = vrot.slane %v3050, 5
        %v3053 = vsel %vm856, %v3048, %v3052
        %v3054 = vshrl.u32 %v2699, 16
        %v3056 = vrot.slane %v3054, 4
        %v3057 = vor.u32 %v3056, %v3052
        %v3058 = vrot.slane %v3057, 4
        %v3060 = vshll.u32 %v2700, 16
        %v3062 = vrot.slane %v3060, 5
        %v3063 = vsel %vm856, %v3058, %v3062
        %v3065 = vshrl.u32 %v2701, 16
        %v3067 = vrot.slane %v3065, 4
        %v3068 = vshll.u32 %v2701, 16
        %v3070 = vrot.slane %v3068, 5
        %v3071 = vor.u32 %v3067, %v3070
        %v3072 = vrot.slane %v3071, 4
        %v3074 = vshll.u32 %v2702, 16
        %v3076 = vrot.slane %v3074, 5
        %v3077 = vsel %vm856, %v3072, %v3076
        %v3078 = vshrl.u32 %v2702, 16
        %v3080 = vrot.slane %v3078, 4
        %v3081 = vor.u32 %v3080, %v3076
        %v3082 = vrot.slane %v3081, 4
        %v3084 = vshll.u32 %v2703, 16
        %v3086 = vrot.slane %v3084, 5
        %v3087 = vsel %vm856, %v3082, %v3086
        %s3088 = scalar_lea.vmem [#allocation6], 64
        %v3089 = vld [vmem:[%s3088] sm:$0xf]
        %v3090 = vld [vmem:[%s3088 + $0x4] sm:$0xf]
        %v3091 = vld [vmem:[%s3088 + $0x8] sm:$0xf]
        %v3092 = vld [vmem:[%s3088 + $0xc] sm:$0xf]
        %v3093 = vunpack.c.l.b16 %v2717
        %v3094 = vunpack.c.l.b16 %v2727
        %v3095 = vunpack.c.l.b16 %v2741
        %v3096 = vunpack.c.l.b16 %v2751
        %v3097 = vunpack.c.l.b16 %v2765
        %v3098 = vunpack.c.l.b16 %v2775
        %v3099 = vunpack.c.l.b16 %v2789
        %v3100 = vunpack.c.l.b16 %v2799
        %v3101 = vunpack.c.l.b16 %v2813
        %v3102 = vunpack.c.l.b16 %v2823
        %v3103 = vunpack.c.l.b16 %v2837
        %v3104 = vunpack.c.l.b16 %v2847
        %v3105 = vunpack.c.l.b16 %v2861
        %v3106 = vunpack.c.l.b16 %v2871
        %v3107 = vunpack.c.l.b16 %v2885
        %v3108 = vunpack.c.l.b16 %v2895
        %v3109 = vunpack.c.l.b16 %v2909
        %v3110 = vunpack.c.l.b16 %v2919
        %v3111 = vunpack.c.l.b16 %v2933
        %v3112 = vunpack.c.l.b16 %v2943
        %v3113 = vunpack.c.l.b16 %v2957
        %v3114 = vunpack.c.l.b16 %v2967
        %v3115 = vunpack.c.l.b16 %v2981
        %v3116 = vunpack.c.l.b16 %v2991
        %v3117 = vunpack.c.l.b16 %v3005
        %v3118 = vunpack.c.l.b16 %v3015
        %v3119 = vunpack.c.l.b16 %v3029
        %v3120 = vunpack.c.l.b16 %v3039
        %v3121 = vunpack.c.l.b16 %v3053
        %v3122 = vunpack.c.l.b16 %v3063
        %v3123 = vunpack.c.l.b16 %v3077
        %v3124 = vunpack.c.l.b16 %v3087
        %v3125 = vpack.c.b16 %v3094, %v3093
        %v3126 = vpack.c.b16 %v3096, %v3095
        %v3127 = vpack.c.b16 %v3098, %v3097
        %v3128 = vpack.c.b16 %v3100, %v3099
        %v3129 = vpack.c.b16 %v3102, %v3101
        %v3130 = vpack.c.b16 %v3104, %v3103
        %v3131 = vpack.c.b16 %v3106, %v3105
        %v3132 = vpack.c.b16 %v3108, %v3107
        %v3133 = vpack.c.b16 %v3110, %v3109
        %v3134 = vpack.c.b16 %v3112, %v3111
        %v3135 = vpack.c.b16 %v3114, %v3113
        %v3136 = vpack.c.b16 %v3116, %v3115
        %v3137 = vpack.c.b16 %v3118, %v3117
        %v3138 = vpack.c.b16 %v3120, %v3119
        %v3139 = vpack.c.b16 %v3122, %v3121
        %v3140 = vpack.c.b16 %v3124, %v3123
        %v3145 = vunpack.c.l.b16 %v3089
        %v3146 = vunpack.c.l.b16 %v3090
        %v3147 = vunpack.c.l.b16 %v3091
        %v3148 = vunpack.c.l.b16 %v3092
        %v3149 = vpack.c.b16 %v3146, %v3145
        %v3150 = vpack.c.b16 %v3148, %v3147
        %v3154 = vsel %vm1306, %v3125, 0
        %v3157 = vsel %vm1306, %v3126, 0
        %v3160 = vsel %vm1306, %v3127, 0
        %v3163 = vsel %vm1306, %v3128, 0
        %v3166 = vsel %vm1306, %v3129, 0
        %v3169 = vsel %vm1306, %v3130, 0
        %v3172 = vsel %vm1306, %v3131, 0
        %v3175 = vsel %vm1306, %v3132, 0
        %v3178 = vsel %vm1306, %v3133, 0
        %v3181 = vsel %vm1306, %v3134, 0
        %v3184 = vsel %vm1306, %v3135, 0
        %v3187 = vsel %vm1306, %v3136, 0
        %v3190 = vsel %vm1306, %v3137, 0
        %v3193 = vsel %vm1306, %v3138, 0
        %v3196 = vsel %vm1306, %v3139, 0
        %v3199 = vsel %vm1306, %v3140, 0
        %3201 = vmatprep.subr.bf16.mxu0 0
        %3202 = vmatpush1.bf16.msra.mxu0 %v3149
        %3203 = vmatprep.subr.bf16.mxu0 0
        %3204 = vmatpush1.bf16.msra.mxu0 %v3150
        %3205 = vmatprep.subr.bf16.mxu0 0
        %3206 = vmatpush1.bf16.msra.mxu0 0
        %3207 = vmatprep.subr.bf16.mxu0 0
        %3208 = vmatpush1.bf16.msra.mxu0 0
        %3209 = vmatprep.subr.bf16.mxu0 0
        %3210 = vmatpush1.bf16.msra.mxu0 0
        %3211 = vmatprep.subr.bf16.mxu0 0
        %3212 = vmatpush1.bf16.msra.mxu0 0
        %3213 = vmatprep.subr.bf16.mxu0 0
        %3214 = vmatpush1.bf16.msra.mxu0 0
        %3215 = vmatprep.subr.bf16.mxu0 0
        %3216 = vmatpush1.bf16.msra.mxu0 0
        %3217 = vmatprep.subr.bf16.mxu0 0
        %3218 = vmatpush1.bf16.msra.mxu0 0
        %3219 = vmatprep.subr.bf16.mxu0 0
        %3220 = vmatpush1.bf16.msra.mxu0 0
        %3221 = vmatprep.subr.bf16.mxu0 0
        %3222 = vmatpush1.bf16.msra.mxu0 0
        %3223 = vmatprep.subr.bf16.mxu0 0
        %3224 = vmatpush1.bf16.msra.mxu0 0
        %3225 = vmatprep.subr.bf16.mxu0 0
        %3226 = vmatpush1.bf16.msra.mxu0 0
        %3227 = vmatprep.subr.bf16.mxu0 0
        %3228 = vmatpush1.bf16.msra.mxu0 0
        %3229 = vmatprep.subr.bf16.mxu0 0
        %3230 = vmatpush1.bf16.msra.mxu0 0
        %3231 = vmatprep.subr.bf16.mxu0 0
        %3232 = vmatpush1.bf16.msra.mxu0 0
        %3233 = vmatprep.mubr.bf16.mxu0 0
        %3234 = vmatmul.mubr.bf16.gmra.mrb[0].mxu0 %v3154
        %v3235 = vpop.f32.mrb[0].mxu0
        %v3236 = vadd.f32 0.0, %v3235
        %v3237 = vpop.f32.mrb[0].mxu0
        %v3238 = vpop.f32.mrb[0].mxu0
        %v3239 = vadd.f32 0.0, %v3238
        %v3240 = vpop.f32.mrb[0].mxu0
        %3241 = vmatprep.mubr.bf16.mxu0 0
        %3242 = vmatmul.mubr.bf16.gmra.mrb[0].mxu0 %v3157
        %v3243 = vpop.f32.mrb[0].mxu0
        %v3244 = vadd.f32 0.0, %v3243
        %v3245 = vpop.f32.mrb[0].mxu0
        %v3246 = vpop.f32.mrb[0].mxu0
        %v3247 = vadd.f32 0.0, %v3246
        %v3248 = vpop.f32.mrb[0].mxu0
        %3249 = vmatprep.mubr.bf16.mxu0 0
        %3250 = vmatmul.mubr.bf16.gmra.mrb[0].mxu0 %v3160
        %v3251 = vpop.f32.mrb[0].mxu0
        %v3252 = vadd.f32 0.0, %v3251
        %v3253 = vpop.f32.mrb[0].mxu0
        %v3254 = vpop.f32.mrb[0].mxu0
        %v3255 = vadd.f32 0.0, %v3254
        %v3256 = vpop.f32.mrb[0].mxu0
        %3257 = vmatprep.mubr.bf16.mxu0 0
        %3258 = vmatmul.mubr.bf16.gmra.mrb[0].mxu0 %v3163
        %v3259 = vpop.f32.mrb[0].mxu0
        %v3260 = vadd.f32 0.0, %v3259
        %v3261 = vpop.f32.mrb[0].mxu0
        %v3262 = vpop.f32.mrb[0].mxu0
        %v3263 = vadd.f32 0.0, %v3262
        %v3264 = vpop.f32.mrb[0].mxu0
        %3265 = vmatprep.mubr.bf16.mxu0 0
        %3266 = vmatmul.mubr.bf16.gmra.mrb[0].mxu0 %v3166
        %v3267 = vpop.f32.mrb[0].mxu0
        %v3268 = vadd.f32 0.0, %v3267
        %v3269 = vpop.f32.mrb[0].mxu0
        %v3270 = vpop.f32.mrb[0].mxu0
        %v3271 = vadd.f32 0.0, %v3270
        %v3272 = vpop.f32.mrb[0].mxu0
        %3273 = vmatprep.mubr.bf16.mxu0 0
        %3274 = vmatmul.mubr.bf16.gmra.mrb[0].mxu0 %v3169
        %v3275 = vpop.f32.mrb[0].mxu0
        %v3276 = vadd.f32 0.0, %v3275
        %v3277 = vpop.f32.mrb[0].mxu0
        %v3278 = vpop.f32.mrb[0].mxu0
        %v3279 = vadd.f32 0.0, %v3278
        %v3280 = vpop.f32.mrb[0].mxu0
        %3281 = vmatprep.mubr.bf16.mxu0 0
        %3282 = vmatmul.mubr.bf16.gmra.mrb[0].mxu0 %v3172
        %v3283 = vpop.f32.mrb[0].mxu0
        %v3284 = vadd.f32 0.0, %v3283
        %v3285 = vpop.f32.mrb[0].mxu0
        %v3286 = vpop.f32.mrb[0].mxu0
        %v3287 = vadd.f32 0.0, %v3286
        %v3288 = vpop.f32.mrb[0].mxu0
        %3289 = vmatprep.mubr.bf16.mxu0 0
        %3290 = vmatmul.mubr.bf16.gmra.mrb[0].mxu0 %v3175
        %v3291 = vpop.f32.mrb[0].mxu0
        %v3292 = vadd.f32 0.0, %v3291
        %v3293 = vpop.f32.mrb[0].mxu0
        %v3294 = vpop.f32.mrb[0].mxu0
        %v3295 = vadd.f32 0.0, %v3294
        %v3296 = vpop.f32.mrb[0].mxu0
        %3297 = vmatprep.mubr.bf16.mxu0 0
        %3298 = vmatmul.mubr.bf16.gmra.mrb[0].mxu0 %v3178
        %v3299 = vpop.f32.mrb[0].mxu0
        %v3300 = vadd.f32 0.0, %v3299
        %v3301 = vpop.f32.mrb[0].mxu0
        %v3302 = vpop.f32.mrb[0].mxu0
        %v3303 = vadd.f32 0.0, %v3302
        %v3304 = vpop.f32.mrb[0].mxu0
        %3305 = vmatprep.mubr.bf16.mxu0 0
        %3306 = vmatmul.mubr.bf16.gmra.mrb[0].mxu0 %v3181
        %v3307 = vpop.f32.mrb[0].mxu0
        %v3308 = vadd.f32 0.0, %v3307
        %v3309 = vpop.f32.mrb[0].mxu0
        %v3310 = vpop.f32.mrb[0].mxu0
        %v3311 = vadd.f32 0.0, %v3310
        %v3312 = vpop.f32.mrb[0].mxu0
        %3313 = vmatprep.mubr.bf16.mxu0 0
        %3314 = vmatmul.mubr.bf16.gmra.mrb[0].mxu0 %v3184
        %v3315 = vpop.f32.mrb[0].mxu0
        %v3316 = vadd.f32 0.0, %v3315
        %v3317 = vpop.f32.mrb[0].mxu0
        %v3318 = vpop.f32.mrb[0].mxu0
        %v3319 = vadd.f32 0.0, %v3318
        %v3320 = vpop.f32.mrb[0].mxu0
        %3321 = vmatprep.mubr.bf16.mxu0 0
        %3322 = vmatmul.mubr.bf16.gmra.mrb[0].mxu0 %v3187
        %v3323 = vpop.f32.mrb[0].mxu0
        %v3324 = vadd.f32 0.0, %v3323
        %v3325 = vpop.f32.mrb[0].mxu0
        %v3326 = vpop.f32.mrb[0].mxu0
        %v3327 = vadd.f32 0.0, %v3326
        %v3328 = vpop.f32.mrb[0].mxu0
        %3329 = vmatprep.mubr.bf16.mxu0 0
        %3330 = vmatmul.mubr.bf16.gmra.mrb[0].mxu0 %v3190
        %v3331 = vpop.f32.mrb[0].mxu0
        %v3332 = vadd.f32 0.0, %v3331
        %v3333 = vpop.f32.mrb[0].mxu0
        %v3334 = vpop.f32.mrb[0].mxu0
        %v3335 = vadd.f32 0.0, %v3334
        %v3336 = vpop.f32.mrb[0].mxu0
        %3337 = vmatprep.mubr.bf16.mxu0 0
        %3338 = vmatmul.mubr.bf16.gmra.mrb[0].mxu0 %v3193
        %v3339 = vpop.f32.mrb[0].mxu0
        %v3340 = vadd.f32 0.0, %v3339
        %v3341 = vpop.f32.mrb[0].mxu0
        %v3342 = vpop.f32.mrb[0].mxu0
        %v3343 = vadd.f32 0.0, %v3342
        %v3344 = vpop.f32.mrb[0].mxu0
        %3345 = vmatprep.mubr.bf16.mxu0 0
        %3346 = vmatmul.mubr.bf16.gmra.mrb[0].mxu0 %v3196
        %v3347 = vpop.f32.mrb[0].mxu0
        %v3348 = vadd.f32 0.0, %v3347
        %v3349 = vpop.f32.mrb[0].mxu0
        %v3350 = vpop.f32.mrb[0].mxu0
        %v3351 = vadd.f32 0.0, %v3350
        %v3352 = vpop.f32.mrb[0].mxu0
        %3353 = vmatprep.mubr.bf16.mxu0 0
        %3354 = vmatmul.mubr.bf16.gmra.mrb[0].mxu0 %v3199
        %v3355 = vpop.f32.mrb[0].mxu0
        %v3356 = vadd.f32 0.0, %v3355
        %v3357 = vpop.f32.mrb[0].mxu0
        %v3358 = vpop.f32.mrb[0].mxu0
        %v3359 = vadd.f32 0.0, %v3358
        %v3360 = vpop.f32.mrb[0].mxu0
        %3361 = vdwg.mxu0
        %v3362 = vadd.f32 %v2624, %v3236
        %v3363 = vadd.f32 %v2625, %v3239
        %v3364 = vadd.f32 %v2626, %v3244
        %v3365 = vadd.f32 %v2627, %v3247
        %v3366 = vadd.f32 %v2628, %v3252
        %v3367 = vadd.f32 %v2629, %v3255
        %v3368 = vadd.f32 %v2630, %v3260
        %v3369 = vadd.f32 %v2631, %v3263
        %v3370 = vadd.f32 %v2632, %v3268
        %v3371 = vadd.f32 %v2633, %v3271
        %v3372 = vadd.f32 %v2634, %v3276
        %v3373 = vadd.f32 %v2635, %v3279
        %v3374 = vadd.f32 %v2636, %v3284
        %v3375 = vadd.f32 %v2637, %v3287
        %v3376 = vadd.f32 %v2638, %v3292
        %v3377 = vadd.f32 %v2639, %v3295
        %v3378 = vadd.f32 %v2640, %v3300
        %v3379 = vadd.f32 %v2641, %v3303
        %v3380 = vadd.f32 %v2642, %v3308
        %v3381 = vadd.f32 %v2643, %v3311
        %v3382 = vadd.f32 %v2644, %v3316
        %v3383 = vadd.f32 %v2645, %v3319
        %v3384 = vadd.f32 %v2646, %v3324
        %v3385 = vadd.f32 %v2647, %v3327
        %v3386 = vadd.f32 %v2648, %v3332
        %v3387 = vadd.f32 %v2649, %v3335
        %v3388 = vadd.f32 %v2650, %v3340
        %v3389 = vadd.f32 %v2651, %v3343
        %v3390 = vadd.f32 %v2652, %v3348
        %v3391 = vadd.f32 %v2653, %v3351
        %v3392 = vadd.f32 %v2654, %v3356
        %v3393 = vadd.f32 %v2655, %v3359
        %v3394 = vld [vmem:[%s684] sm:$0xe]
        %v3395 = vld [vmem:[%s684 + $0xc] sm:$0xe]
        %v3396 = vld [vmem:[%s684 + $0x18] sm:$0xe]
        %v3397 = vld [vmem:[%s684 + $0x24] sm:$0xe]
        %v3398 = vld [vmem:[%s684 + $0x30] sm:$0xe]
        %v3399 = vld [vmem:[%s684 + $0x3c] sm:$0xe]
        %v3400 = vld [vmem:[%s684 + $0x48] sm:$0xe]
        %v3401 = vld [vmem:[%s684 + $0x54] sm:$0xe]
        %v3402 = vld [vmem:[%s684 + $0x60] sm:$0xe]
        %v3403 = vld [vmem:[%s684 + $0x6c] sm:$0xe]
        %v3404 = vld [vmem:[%s684 + $0x78] sm:$0xe]
        %v3405 = vld [vmem:[%s684 + $0x84] sm:$0xe]
        %v3406 = vld [vmem:[%s684 + $0x90] sm:$0xe]
        %v3407 = vld [vmem:[%s684 + $0x9c] sm:$0xe]
        %v3408 = vld [vmem:[%s684 + $0xa8] sm:$0xe]
        %v3409 = vld [vmem:[%s684 + $0xb4] sm:$0xe]
        %v3458 = vrot.slane %v3394, 5
        %v3459 = vrot.slane %v3458, 4
        %v3460 = vrot.slane %v2657, 5
        %v3461 = vsel %vm1867, %v3459, %v3460
        %v3462 = vrot.slane %v3460, 4
        %v3463 = vrot.slane %v2658, 5
        %v3464 = vsel %vm1867, %v3462, %v3463
        %v3465 = vrot.slane %v3395, 5
        %v3466 = vrot.slane %v3465, 4
        %v3467 = vrot.slane %v2660, 5
        %v3468 = vsel %vm1867, %v3466, %v3467
        %v3469 = vrot.slane %v3467, 4
        %v3470 = vrot.slane %v2661, 5
        %v3471 = vsel %vm1867, %v3469, %v3470
        %v3472 = vrot.slane %v3396, 5
        %v3473 = vrot.slane %v3472, 4
        %v3474 = vrot.slane %v2663, 5
        %v3475 = vsel %vm1867, %v3473, %v3474
        %v3476 = vrot.slane %v3474, 4
        %v3477 = vrot.slane %v2664, 5
        %v3478 = vsel %vm1867, %v3476, %v3477
        %v3479 = vrot.slane %v3397, 5
        %v3480 = vrot.slane %v3479, 4
        %v3481 = vrot.slane %v2666, 5
        %v3482 = vsel %vm1867, %v3480, %v3481
        %v3483 = vrot.slane %v3481, 4
        %v3484 = vrot.slane %v2667, 5
        %v3485 = vsel %vm1867, %v3483, %v3484
        %v3486 = vrot.slane %v3398, 5
        %v3487 = vrot.slane %v3486, 4
        %v3488 = vrot.slane %v2669, 5
        %v3489 = vsel %vm1867, %v3487, %v3488
        %v3490 = vrot.slane %v3488, 4
        %v3491 = vrot.slane %v2670, 5
        %v3492 = vsel %vm1867, %v3490, %v3491
        %v3493 = vrot.slane %v3399, 5
        %v3494 = vrot.slane %v3493, 4
        %v3495 = vrot.slane %v2672, 5
        %v3496 = vsel %vm1867, %v3494, %v3495
        %v3497 = vrot.slane %v3495, 4
        %v3498 = vrot.slane %v2673, 5
        %v3499 = vsel %vm1867, %v3497, %v3498
        %v3500 = vrot.slane %v3400, 5
        %v3501 = vrot.slane %v3500, 4
        %v3502 = vrot.slane %v2675, 5
        %v3503 = vsel %vm1867, %v3501, %v3502
        %v3504 = vrot.slane %v3502, 4
        %v3505 = vrot.slane %v2676, 5
        %v3506 = vsel %vm1867, %v3504, %v3505
        %v3507 = vrot.slane %v3401, 5
        %v3508 = vrot.slane %v3507, 4
        %v3509 = vrot.slane %v2678, 5
        %v3510 = vsel %vm1867, %v3508, %v3509
        %v3511 = vrot.slane %v3509, 4
        %v3512 = vrot.slane %v2679, 5
        %v3513 = vsel %vm1867, %v3511, %v3512
        %v3514 = vrot.slane %v3402, 5
        %v3515 = vrot.slane %v3514, 4
        %v3516 = vrot.slane %v2681, 5
        %v3517 = vsel %vm1867, %v3515, %v3516
        %v3518 = vrot.slane %v3516, 4
        %v3519 = vrot.slane %v2682, 5
        %v3520 = vsel %vm1867, %v3518, %v3519
        %v3521 = vrot.slane %v3403, 5
        %v3522 = vrot.slane %v3521, 4
        %v3523 = vrot.slane %v2684, 5
        %v3524 = vsel %vm1867, %v3522, %v3523
        %v3525 = vrot.slane %v3523, 4
        %v3526 = vrot.slane %v2685, 5
        %v3527 = vsel %vm1867, %v3525, %v3526
        %v3528 = vrot.slane %v3404, 5
        %v3529 = vrot.slane %v3528, 4
        %v3530 = vrot.slane %v2687, 5
        %v3531 = vsel %vm1867, %v3529, %v3530
        %v3532 = vrot.slane %v3530, 4
        %v3533 = vrot.slane %v2688, 5
        %v3534 = vsel %vm1867, %v3532, %v3533
        %v3535 = vrot.slane %v3405, 5
        %v3536 = vrot.slane %v3535, 4
        %v3537 = vrot.slane %v2690, 5
        %v3538 = vsel %vm1867, %v3536, %v3537
        %v3539 = vrot.slane %v3537, 4
        %v3540 = vrot.slane %v2691, 5
        %v3541 = vsel %vm1867, %v3539, %v3540
        %v3542 = vrot.slane %v3406, 5
        %v3543 = vrot.slane %v3542, 4
        %v3544 = vrot.slane %v2693, 5
        %v3545 = vsel %vm1867, %v3543, %v3544
        %v3546 = vrot.slane %v3544, 4
        %v3547 = vrot.slane %v2694, 5
        %v3548 = vsel %vm1867, %v3546, %v3547
        %v3549 = vrot.slane %v3407, 5
        %v3550 = vrot.slane %v3549, 4
        %v3551 = vrot.slane %v2696, 5
        %v3552 = vsel %vm1867, %v3550, %v3551
        %v3553 = vrot.slane %v3551, 4
        %v3554 = vrot.slane %v2697, 5
        %v3555 = vsel %vm1867, %v3553, %v3554
        %v3556 = vrot.slane %v3408, 5
        %v3557 = vrot.slane %v3556, 4
        %v3558 = vrot.slane %v2699, 5
        %v3559 = vsel %vm1867, %v3557, %v3558
        %v3560 = vrot.slane %v3558, 4
        %v3561 = vrot.slane %v2700, 5
        %v3562 = vsel %vm1867, %v3560, %v3561
        %v3563 = vrot.slane %v3409, 5
        %v3564 = vrot.slane %v3563, 4
        %v3565 = vrot.slane %v2702, 5
        %v3566 = vsel %vm1867, %v3564, %v3565
        %v3567 = vrot.slane %v3565, 4
        %v3568 = vrot.slane %v2703, 5
        %v3569 = vsel %vm1867, %v3567, %v3568
        %s3570 = scalar_lea.vmem [#allocation6], 80
        %v3571 = vld [vmem:[%s3570] sm:$0xf]
        %v3572 = vld [vmem:[%s3570 + $0x4] sm:$0xf]
        %v3573 = vld [vmem:[%s3570 + $0x8] sm:$0xf]
        %v3574 = vld [vmem:[%s3570 + $0xc] sm:$0xf]
        %v3575 = vunpack.c.l.b16 %v3461
        %v3576 = vunpack.c.l.b16 %v3464
        %v3577 = vunpack.c.l.b16 %v3468
        %v3578 = vunpack.c.l.b16 %v3471
        %v3579 = vunpack.c.l.b16 %v3475
        %v3580 = vunpack.c.l.b16 %v3478
        %v3581 = vunpack.c.l.b16 %v3482
        %v3582 = vunpack.c.l.b16 %v3485
        %v3583 = vunpack.c.l.b16 %v3489
        %v3584 = vunpack.c.l.b16 %v3492
        %v3585 = vunpack.c.l.b16 %v3496
        %v3586 = vunpack.c.l.b16 %v3499
        %v3587 = vunpack.c.l.b16 %v3503
        %v3588 = vunpack.c.l.b16 %v3506
        %v3589 = vunpack.c.l.b16 %v3510
        %v3590 = vunpack.c.l.b16 %v3513
        %v3591 = vunpack.c.l.b16 %v3517
        %v3592 = vunpack.c.l.b16 %v3520
        %v3593 = vunpack.c.l.b16 %v3524
        %v3594 = vunpack.c.l.b16 %v3527
        %v3595 = vunpack.c.l.b16 %v3531
        %v3596 = vunpack.c.l.b16 %v3534
        %v3597 = vunpack.c.l.b16 %v3538
        %v3598 = vunpack.c.l.b16 %v3541
        %v3599 = vunpack.c.l.b16 %v3545
        %v3600 = vunpack.c.l.b16 %v3548
        %v3601 = vunpack.c.l.b16 %v3552
        %v3602 = vunpack.c.l.b16 %v3555
        %v3603 = vunpack.c.l.b16 %v3559
        %v3604 = vunpack.c.l.b16 %v3562
        %v3605 = vunpack.c.l.b16 %v3566
        %v3606 = vunpack.c.l.b16 %v3569
        %v3607 = vpack.c.b16 %v3576, %v3575
        %v3608 = vpack.c.b16 %v3578, %v3577
        %v3609 = vpack.c.b16 %v3580, %v3579
        %v3610 = vpack.c.b16 %v3582, %v3581
        %v3611 = vpack.c.b16 %v3584, %v3583
        %v3612 = vpack.c.b16 %v3586, %v3585
        %v3613 = vpack.c.b16 %v3588, %v3587
        %v3614 = vpack.c.b16 %v3590, %v3589
        %v3615 = vpack.c.b16 %v3592, %v3591
        %v3616 = vpack.c.b16 %v3594, %v3593
        %v3617 = vpack.c.b16 %v3596, %v3595
        %v3618 = vpack.c.b16 %v3598, %v3597
        %v3619 = vpack.c.b16 %v3600, %v3599
        %v3620 = vpack.c.b16 %v3602, %v3601
        %v3621 = vpack.c.b16 %v3604, %v3603
        %v3622 = vpack.c.b16 %v3606, %v3605
        %v3627 = vunpack.c.l.b16 %v3571
        %v3628 = vunpack.c.l.b16 %v3572
        %v3629 = vunpack.c.l.b16 %v3573
        %v3630 = vunpack.c.l.b16 %v3574
        %v3631 = vpack.c.b16 %v3628, %v3627
        %v3632 = vpack.c.b16 %v3630, %v3629
        %v3636 = vsel %vm1306, %v3607, 0
        %v3639 = vsel %vm1306, %v3608, 0
        %v3642 = vsel %vm1306, %v3609, 0
        %v3645 = vsel %vm1306, %v3610, 0
        %v3648 = vsel %vm1306, %v3611, 0
        %v3651 = vsel %vm1306, %v3612, 0
        %v3654 = vsel %vm1306, %v3613, 0
        %v3657 = vsel %vm1306, %v3614, 0
        %v3660 = vsel %vm1306, %v3615, 0
        %v3663 = vsel %vm1306, %v3616, 0
        %v3666 = vsel %vm1306, %v3617, 0
        %v3669 = vsel %vm1306, %v3618, 0
        %v3672 = vsel %vm1306, %v3619, 0
        %v3675 = vsel %vm1306, %v3620, 0
        %v3678 = vsel %vm1306, %v3621, 0
        %v3681 = vsel %vm1306, %v3622, 0
        %3683 = vmatprep.subr.bf16.mxu0 0
        %3684 = vmatpush1.bf16.msra.mxu0 %v3631
        %3685 = vmatprep.subr.bf16.mxu0 0
        %3686 = vmatpush1.bf16.msra.mxu0 %v3632
        %3687 = vmatprep.subr.bf16.mxu0 0
        %3688 = vmatpush1.bf16.msra.mxu0 0
        %3689 = vmatprep.subr.bf16.mxu0 0
        %3690 = vmatpush1.bf16.msra.mxu0 0
        %3691 = vmatprep.subr.bf16.mxu0 0
        %3692 = vmatpush1.bf16.msra.mxu0 0
        %3693 = vmatprep.subr.bf16.mxu0 0
        %3694 = vmatpush1.bf16.msra.mxu0 0
        %3695 = vmatprep.subr.bf16.mxu0 0
        %3696 = vmatpush1.bf16.msra.mxu0 0
        %3697 = vmatprep.subr.bf16.mxu0 0
        %3698 = vmatpush1.bf16.msra.mxu0 0
        %3699 = vmatprep.subr.bf16.mxu0 0
        %3700 = vmatpush1.bf16.msra.mxu0 0
        %3701 = vmatprep.subr.bf16.mxu0 0
        %3702 = vmatpush1.bf16.msra.mxu0 0
        %3703 = vmatprep.subr.bf16.mxu0 0
        %3704 = vmatpush1.bf16.msra.mxu0 0
        %3705 = vmatprep.subr.bf16.mxu0 0
        %3706 = vmatpush1.bf16.msra.mxu0 0
        %3707 = vmatprep.subr.bf16.mxu0 0
        %3708 = vmatpush1.bf16.msra.mxu0 0
        %3709 = vmatprep.subr.bf16.mxu0 0
        %3710 = vmatpush1.bf16.msra.mxu0 0
        %3711 = vmatprep.subr.bf16.mxu0 0
        %3712 = vmatpush1.bf16.msra.mxu0 0
        %3713 = vmatprep.subr.bf16.mxu0 0
        %3714 = vmatpush1.bf16.msra.mxu0 0
        %3715 = vmatprep.mubr.bf16.mxu0 0
        %3716 = vmatmul.mubr.bf16.gmra.mrb[0].mxu0 %v3636
        %v3717 = vpop.f32.mrb[0].mxu0
        %v3718 = vadd.f32 0.0, %v3717
        %v3719 = vpop.f32.mrb[0].mxu0
        %v3720 = vpop.f32.mrb[0].mxu0
        %v3721 = vadd.f32 0.0, %v3720
        %v3722 = vpop.f32.mrb[0].mxu0
        %3723 = vmatprep.mubr.bf16.mxu0 0
        %3724 = vmatmul.mubr.bf16.gmra.mrb[0].mxu0 %v3639
        %v3725 = vpop.f32.mrb[0].mxu0
        %v3726 = vadd.f32 0.0, %v3725
        %v3727 = vpop.f32.mrb[0].mxu0
        %v3728 = vpop.f32.mrb[0].mxu0
        %v3729 = vadd.f32 0.0, %v3728
        %v3730 = vpop.f32.mrb[0].mxu0
        %3731 = vmatprep.mubr.bf16.mxu0 0
        %3732 = vmatmul.mubr.bf16.gmra.mrb[0].mxu0 %v3642
        %v3733 = vpop.f32.mrb[0].mxu0
        %v3734 = vadd.f32 0.0, %v3733
        %v3735 = vpop.f32.mrb[0].mxu0
        %v3736 = vpop.f32.mrb[0].mxu0
        %v3737 = vadd.f32 0.0, %v3736
        %v3738 = vpop.f32.mrb[0].mxu0
        %3739 = vmatprep.mubr.bf16.mxu0 0
        %3740 = vmatmul.mubr.bf16.gmra.mrb[0].mxu0 %v3645
        %v3741 = vpop.f32.mrb[0].mxu0
        %v3742 = vadd.f32 0.0, %v3741
        %v3743 = vpop.f32.mrb[0].mxu0
        %v3744 = vpop.f32.mrb[0].mxu0
        %v3745 = vadd.f32 0.0, %v3744
        %v3746 = vpop.f32.mrb[0].mxu0
        %3747 = vmatprep.mubr.bf16.mxu0 0
        %3748 = vmatmul.mubr.bf16.gmra.mrb[0].mxu0 %v3648
        %v3749 = vpop.f32.mrb[0].mxu0
        %v3750 = vadd.f32 0.0, %v3749
        %v3751 = vpop.f32.mrb[0].mxu0
        %v3752 = vpop.f32.mrb[0].mxu0
        %v3753 = vadd.f32 0.0, %v3752
        %v3754 = vpop.f32.mrb[0].mxu0
        %3755 = vmatprep.mubr.bf16.mxu0 0
        %3756 = vmatmul.mubr.bf16.gmra.mrb[0].mxu0 %v3651
        %v3757 = vpop.f32.mrb[0].mxu0
        %v3758 = vadd.f32 0.0, %v3757
        %v3759 = vpop.f32.mrb[0].mxu0
        %v3760 = vpop.f32.mrb[0].mxu0
        %v3761 = vadd.f32 0.0, %v3760
        %v3762 = vpop.f32.mrb[0].mxu0
        %3763 = vmatprep.mubr.bf16.mxu0 0
        %3764 = vmatmul.mubr.bf16.gmra.mrb[0].mxu0 %v3654
        %v3765 = vpop.f32.mrb[0].mxu0
        %v3766 = vadd.f32 0.0, %v3765
        %v3767 = vpop.f32.mrb[0].mxu0
        %v3768 = vpop.f32.mrb[0].mxu0
        %v3769 = vadd.f32 0.0, %v3768
        %v3770 = vpop.f32.mrb[0].mxu0
        %3771 = vmatprep.mubr.bf16.mxu0 0
        %3772 = vmatmul.mubr.bf16.gmra.mrb[0].mxu0 %v3657
        %v3773 = vpop.f32.mrb[0].mxu0
        %v3774 = vadd.f32 0.0, %v3773
        %v3775 = vpop.f32.mrb[0].mxu0
        %v3776 = vpop.f32.mrb[0].mxu0
        %v3777 = vadd.f32 0.0, %v3776
        %v3778 = vpop.f32.mrb[0].mxu0
        %3779 = vmatprep.mubr.bf16.mxu0 0
        %3780 = vmatmul.mubr.bf16.gmra.mrb[0].mxu0 %v3660
        %v3781 = vpop.f32.mrb[0].mxu0
        %v3782 = vadd.f32 0.0, %v3781
        %v3783 = vpop.f32.mrb[0].mxu0
        %v3784 = vpop.f32.mrb[0].mxu0
        %v3785 = vadd.f32 0.0, %v3784
        %v3786 = vpop.f32.mrb[0].mxu0
        %3787 = vmatprep.mubr.bf16.mxu0 0
        %3788 = vmatmul.mubr.bf16.gmra.mrb[0].mxu0 %v3663
        %v3789 = vpop.f32.mrb[0].mxu0
        %v3790 = vadd.f32 0.0, %v3789
        %v3791 = vpop.f32.mrb[0].mxu0
        %v3792 = vpop.f32.mrb[0].mxu0
        %v3793 = vadd.f32 0.0, %v3792
        %v3794 = vpop.f32.mrb[0].mxu0
        %3795 = vmatprep.mubr.bf16.mxu0 0
        %3796 = vmatmul.mubr.bf16.gmra.mrb[0].mxu0 %v3666
        %v3797 = vpop.f32.mrb[0].mxu0
        %v3798 = vadd.f32 0.0, %v3797
        %v3799 = vpop.f32.mrb[0].mxu0
        %v3800 = vpop.f32.mrb[0].mxu0
        %v3801 = vadd.f32 0.0, %v3800
        %v3802 = vpop.f32.mrb[0].mxu0
        %3803 = vmatprep.mubr.bf16.mxu0 0
        %3804 = vmatmul.mubr.bf16.gmra.mrb[0].mxu0 %v3669
        %v3805 = vpop.f32.mrb[0].mxu0
        %v3806 = vadd.f32 0.0, %v3805
        %v3807 = vpop.f32.mrb[0].mxu0
        %v3808 = vpop.f32.mrb[0].mxu0
        %v3809 = vadd.f32 0.0, %v3808
        %v3810 = vpop.f32.mrb[0].mxu0
        %3811 = vmatprep.mubr.bf16.mxu0 0
        %3812 = vmatmul.mubr.bf16.gmra.mrb[0].mxu0 %v3672
        %v3813 = vpop.f32.mrb[0].mxu0
        %v3814 = vadd.f32 0.0, %v3813
        %v3815 = vpop.f32.mrb[0].mxu0
        %v3816 = vpop.f32.mrb[0].mxu0
        %v3817 = vadd.f32 0.0, %v3816
        %v3818 = vpop.f32.mrb[0].mxu0
        %3819 = vmatprep.mubr.bf16.mxu0 0
        %3820 = vmatmul.mubr.bf16.gmra.mrb[0].mxu0 %v3675
        %v3821 = vpop.f32.mrb[0].mxu0
        %v3822 = vadd.f32 0.0, %v3821
        %v3823 = vpop.f32.mrb[0].mxu0
        %v3824 = vpop.f32.mrb[0].mxu0
        %v3825 = vadd.f32 0.0, %v3824
        %v3826 = vpop.f32.mrb[0].mxu0
        %3827 = vmatprep.mubr.bf16.mxu0 0
        %3828 = vmatmul.mubr.bf16.gmra.mrb[0].mxu0 %v3678
        %v3829 = vpop.f32.mrb[0].mxu0
        %v3830 = vadd.f32 0.0, %v3829
        %v3831 = vpop.f32.mrb[0].mxu0
        %v3832 = vpop.f32.mrb[0].mxu0
        %v3833 = vadd.f32 0.0, %v3832
        %v3834 = vpop.f32.mrb[0].mxu0
        %3835 = vmatprep.mubr.bf16.mxu0 0
        %3836 = vmatmul.mubr.bf16.gmra.mrb[0].mxu0 %v3681
        %v3837 = vpop.f32.mrb[0].mxu0
        %v3838 = vadd.f32 0.0, %v3837
        %v3839 = vpop.f32.mrb[0].mxu0
        %v3840 = vpop.f32.mrb[0].mxu0
        %v3841 = vadd.f32 0.0, %v3840
        %v3842 = vpop.f32.mrb[0].mxu0
        %3843 = vdwg.mxu0
        %v3844 = vadd.f32 %v3362, %v3718
        %v3845 = vadd.f32 %v3363, %v3721
        %v3846 = vadd.f32 %v3364, %v3726
        %v3847 = vadd.f32 %v3365, %v3729
        %v3848 = vadd.f32 %v3366, %v3734
        %v3849 = vadd.f32 %v3367, %v3737
        %v3850 = vadd.f32 %v3368, %v3742
        %v3851 = vadd.f32 %v3369, %v3745
        %v3852 = vadd.f32 %v3370, %v3750
        %v3853 = vadd.f32 %v3371, %v3753
        %v3854 = vadd.f32 %v3372, %v3758
        %v3855 = vadd.f32 %v3373, %v3761
        %v3856 = vadd.f32 %v3374, %v3766
        %v3857 = vadd.f32 %v3375, %v3769
        %v3858 = vadd.f32 %v3376, %v3774
        %v3859 = vadd.f32 %v3377, %v3777
        %v3860 = vadd.f32 %v3378, %v3782
        %v3861 = vadd.f32 %v3379, %v3785
        %v3862 = vadd.f32 %v3380, %v3790
        %v3863 = vadd.f32 %v3381, %v3793
        %v3864 = vadd.f32 %v3382, %v3798
        %v3865 = vadd.f32 %v3383, %v3801
        %v3866 = vadd.f32 %v3384, %v3806
        %v3867 = vadd.f32 %v3385, %v3809
        %v3868 = vadd.f32 %v3386, %v3814
        %v3869 = vadd.f32 %v3387, %v3817
        %v3870 = vadd.f32 %v3388, %v3822
        %v3871 = vadd.f32 %v3389, %v3825
        %v3872 = vadd.f32 %v3390, %v3830
        %v3873 = vadd.f32 %v3391, %v3833
        %v3874 = vadd.f32 %v3392, %v3838
        %v3875 = vadd.f32 %v3393, %v3841
        %s3876 = scalar_lea.vmem [#allocation2], 24
        %v3877 = vld [vmem:[%s3876] sm:$0xf]
        %v3878 = vld [vmem:[%s3876 + $0x4] sm:$0xf]
        %v3879 = vld [vmem:[%s3876 + $0xc] sm:$0xf]
        %v3880 = vld [vmem:[%s3876 + $0x10] sm:$0xf]
        %v3881 = vld [vmem:[%s3876 + $0x18] sm:$0xf]
        %v3882 = vld [vmem:[%s3876 + $0x1c] sm:$0xf]
        %v3883 = vld [vmem:[%s3876 + $0x24] sm:$0xf]
        %v3884 = vld [vmem:[%s3876 + $0x28] sm:$0xf]
        %v3885 = vld [vmem:[%s3876 + $0x30] sm:$0xf]
        %v3886 = vld [vmem:[%s3876 + $0x34] sm:$0xf]
        %v3887 = vld [vmem:[%s3876 + $0x3c] sm:$0xf]
        %v3888 = vld [vmem:[%s3876 + $0x40] sm:$0xf]
        %v3889 = vld [vmem:[%s3876 + $0x48] sm:$0xf]
        %v3890 = vld [vmem:[%s3876 + $0x4c] sm:$0xf]
        %v3891 = vld [vmem:[%s3876 + $0x54] sm:$0xf]
        %v3892 = vld [vmem:[%s3876 + $0x58] sm:$0xf]
        %v3893 = vld [vmem:[%s3876 + $0x60] sm:$0xf]
        %v3894 = vld [vmem:[%s3876 + $0x64] sm:$0xf]
        %v3895 = vld [vmem:[%s3876 + $0x6c] sm:$0xf]
        %v3896 = vld [vmem:[%s3876 + $0x70] sm:$0xf]
        %v3897 = vld [vmem:[%s3876 + $0x78] sm:$0xf]
        %v3898 = vld [vmem:[%s3876 + $0x7c] sm:$0xf]
        %v3899 = vld [vmem:[%s3876 + $0x84] sm:$0xf]
        %v3900 = vld [vmem:[%s3876 + $0x88] sm:$0xf]
        %v3901 = vld [vmem:[%s3876 + $0x90] sm:$0xf]
        %v3902 = vld [vmem:[%s3876 + $0x94] sm:$0xf]
        %v3903 = vld [vmem:[%s3876 + $0x9c] sm:$0xf]
        %v3904 = vld [vmem:[%s3876 + $0xa0] sm:$0xf]
        %v3905 = vld [vmem:[%s3876 + $0xa8] sm:$0xf]
        %v3906 = vld [vmem:[%s3876 + $0xac] sm:$0xf]
        %v3907 = vld [vmem:[%s3876 + $0xb4] sm:$0xf]
        %v3908 = vld [vmem:[%s3876 + $0xb8] sm:$0xf]
        %s3909 = scalar_lea.vmem [#allocation6], 96
        %v3910 = vld [vmem:[%s3909] sm:$0xf]
        %v3911 = vld [vmem:[%s3909 + $0x4] sm:$0xf]
        %v3912 = vld [vmem:[%s3909 + $0x8] sm:$0xf]
        %v3913 = vld [vmem:[%s3909 + $0xc] sm:$0xf]
        %v3946 = vunpack.c.l.b16 %v3877
        %v3947 = vunpack.c.l.b16 %v3878
        %v3948 = vunpack.c.l.b16 %v3879
        %v3949 = vunpack.c.l.b16 %v3880
        %v3950 = vunpack.c.l.b16 %v3881
        %v3951 = vunpack.c.l.b16 %v3882
        %v3952 = vunpack.c.l.b16 %v3883
        %v3953 = vunpack.c.l.b16 %v3884
        %v3954 = vunpack.c.l.b16 %v3885
        %v3955 = vunpack.c.l.b16 %v3886
        %v3956 = vunpack.c.l.b16 %v3887
        %v3957 = vunpack.c.l.b16 %v3888
        %v3958 = vunpack.c.l.b16 %v3889
        %v3959 = vunpack.c.l.b16 %v3890
        %v3960 = vunpack.c.l.b16 %v3891
        %v3961 = vunpack.c.l.b16 %v3892
        %v3962 = vunpack.c.l.b16 %v3893
        %v3963 = vunpack.c.l.b16 %v3894
        %v3964 = vunpack.c.l.b16 %v3895
        %v3965 = vunpack.c.l.b16 %v3896
        %v3966 = vunpack.c.l.b16 %v3897
        %v3967 = vunpack.c.l.b16 %v3898
        %v3968 = vunpack.c.l.b16 %v3899
        %v3969 = vunpack.c.l.b16 %v3900
        %v3970 = vunpack.c.l.b16 %v3901
        %v3971 = vunpack.c.l.b16 %v3902
        %v3972 = vunpack.c.l.b16 %v3903
        %v3973 = vunpack.c.l.b16 %v3904
        %v3974 = vunpack.c.l.b16 %v3905
        %v3975 = vunpack.c.l.b16 %v3906
        %v3976 = vunpack.c.l.b16 %v3907
        %v3977 = vunpack.c.l.b16 %v3908
        %v3978 = vpack.c.b16 %v3947, %v3946
        %v3979 = vpack.c.b16 %v3949, %v3948
        %v3980 = vpack.c.b16 %v3951, %v3950
        %v3981 = vpack.c.b16 %v3953, %v3952
        %v3982 = vpack.c.b16 %v3955, %v3954
        %v3983 = vpack.c.b16 %v3957, %v3956
        %v3984 = vpack.c.b16 %v3959, %v3958
        %v3985 = vpack.c.b16 %v3961, %v3960
        %v3986 = vpack.c.b16 %v3963, %v3962
        %v3987 = vpack.c.b16 %v3965, %v3964
        %v3988 = vpack.c.b16 %v3967, %v3966
        %v3989 = vpack.c.b16 %v3969, %v3968
        %v3990 = vpack.c.b16 %v3971, %v3970
        %v3991 = vpack.c.b16 %v3973, %v3972
        %v3992 = vpack.c.b16 %v3975, %v3974
        %v3993 = vpack.c.b16 %v3977, %v3976
        %v3998 = vunpack.c.l.b16 %v3910
        %v3999 = vunpack.c.l.b16 %v3911
        %v4000 = vunpack.c.l.b16 %v3912
        %v4001 = vunpack.c.l.b16 %v3913
        %v4002 = vpack.c.b16 %v3999, %v3998
        %v4003 = vpack.c.b16 %v4001, %v4000
        %v4007 = vsel %vm1306, %v3978, 0
        %v4010 = vsel %vm1306, %v3979, 0
        %v4013 = vsel %vm1306, %v3980, 0
        %v4016 = vsel %vm1306, %v3981, 0
        %v4019 = vsel %vm1306, %v3982, 0
        %v4022 = vsel %vm1306, %v3983, 0
        %v4025 = vsel %vm1306, %v3984, 0
        %v4028 = vsel %vm1306, %v3985, 0
        %v4031 = vsel %vm1306, %v3986, 0
        %v4034 = vsel %vm1306, %v3987, 0
        %v4037 = vsel %vm1306, %v3988, 0
        %v4040 = vsel %vm1306, %v3989, 0
        %v4043 = vsel %vm1306, %v3990, 0
        %v4046 = vsel %vm1306, %v3991, 0
        %v4049 = vsel %vm1306, %v3992, 0
        %v4052 = vsel %vm1306, %v3993, 0
        %4054 = vmatprep.subr.bf16.mxu0 0
        %4055 = vmatpush1.bf16.msra.mxu0 %v4002
        %4056 = vmatprep.subr.bf16.mxu0 0
        %4057 = vmatpush1.bf16.msra.mxu0 %v4003
        %4058 = vmatprep.subr.bf16.mxu0 0
        %4059 = vmatpush1.bf16.msra.mxu0 0
        %4060 = vmatprep.subr.bf16.mxu0 0
        %4061 = vmatpush1.bf16.msra.mxu0 0
        %4062 = vmatprep.subr.bf16.mxu0 0
        %4063 = vmatpush1.bf16.msra.mxu0 0
        %4064 = vmatprep.subr.bf16.mxu0 0
        %4065 = vmatpush1.bf16.msra.mxu0 0
        %4066 = vmatprep.subr.bf16.mxu0 0
        %4067 = vmatpush1.bf16.msra.mxu0 0
        %4068 = vmatprep.subr.bf16.mxu0 0
        %4069 = vmatpush1.bf16.msra.mxu0 0
        %4070 = vmatprep.subr.bf16.mxu0 0
        %4071 = vmatpush1.bf16.msra.mxu0 0
        %4072 = vmatprep.subr.bf16.mxu0 0
        %4073 = vmatpush1.bf16.msra.mxu0 0
        %4074 = vmatprep.subr.bf16.mxu0 0
        %4075 = vmatpush1.bf16.msra.mxu0 0
        %4076 = vmatprep.subr.bf16.mxu0 0
        %4077 = vmatpush1.bf16.msra.mxu0 0
        %4078 = vmatprep.subr.bf16.mxu0 0
        %4079 = vmatpush1.bf16.msra.mxu0 0
        %4080 = vmatprep.subr.bf16.mxu0 0
        %4081 = vmatpush1.bf16.msra.mxu0 0
        %4082 = vmatprep.subr.bf16.mxu0 0
        %4083 = vmatpush1.bf16.msra.mxu0 0
        %4084 = vmatprep.subr.bf16.mxu0 0
        %4085 = vmatpush1.bf16.msra.mxu0 0
        %4086 = vmatprep.mubr.bf16.mxu0 0
        %4087 = vmatmul.mubr.bf16.gmra.mrb[0].mxu0 %v4007
        %v4088 = vpop.f32.mrb[0].mxu0
        %v4089 = vadd.f32 0.0, %v4088
        %v4090 = vpop.f32.mrb[0].mxu0
        %v4091 = vpop.f32.mrb[0].mxu0
        %v4092 = vadd.f32 0.0, %v4091
        %v4093 = vpop.f32.mrb[0].mxu0
        %4094 = vmatprep.mubr.bf16.mxu0 0
        %4095 = vmatmul.mubr.bf16.gmra.mrb[0].mxu0 %v4010
        %v4096 = vpop.f32.mrb[0].mxu0
        %v4097 = vadd.f32 0.0, %v4096
        %v4098 = vpop.f32.mrb[0].mxu0
        %v4099 = vpop.f32.mrb[0].mxu0
        %v4100 = vadd.f32 0.0, %v4099
        %v4101 = vpop.f32.mrb[0].mxu0
        %4102 = vmatprep.mubr.bf16.mxu0 0
        %4103 = vmatmul.mubr.bf16.gmra.mrb[0].mxu0 %v4013
        %v4104 = vpop.f32.mrb[0].mxu0
        %v4105 = vadd.f32 0.0, %v4104
        %v4106 = vpop.f32.mrb[0].mxu0
        %v4107 = vpop.f32.mrb[0].mxu0
        %v4108 = vadd.f32 0.0, %v4107
        %v4109 = vpop.f32.mrb[0].mxu0
        %4110 = vmatprep.mubr.bf16.mxu0 0
        %4111 = vmatmul.mubr.bf16.gmra.mrb[0].mxu0 %v4016
        %v4112 = vpop.f32.mrb[0].mxu0
        %v4113 = vadd.f32 0.0, %v4112
        %v4114 = vpop.f32.mrb[0].mxu0
        %v4115 = vpop.f32.mrb[0].mxu0
        %v4116 = vadd.f32 0.0, %v4115
        %v4117 = vpop.f32.mrb[0].mxu0
        %4118 = vmatprep.mubr.bf16.mxu0 0
        %4119 = vmatmul.mubr.bf16.gmra.mrb[0].mxu0 %v4019
        %v4120 = vpop.f32.mrb[0].mxu0
        %v4121 = vadd.f32 0.0, %v4120
        %v4122 = vpop.f32.mrb[0].mxu0
        %v4123 = vpop.f32.mrb[0].mxu0
        %v4124 = vadd.f32 0.0, %v4123
        %v4125 = vpop.f32.mrb[0].mxu0
        %4126 = vmatprep.mubr.bf16.mxu0 0
        %4127 = vmatmul.mubr.bf16.gmra.mrb[0].mxu0 %v4022
        %v4128 = vpop.f32.mrb[0].mxu0
        %v4129 = vadd.f32 0.0, %v4128
        %v4130 = vpop.f32.mrb[0].mxu0
        %v4131 = vpop.f32.mrb[0].mxu0
        %v4132 = vadd.f32 0.0, %v4131
        %v4133 = vpop.f32.mrb[0].mxu0
        %4134 = vmatprep.mubr.bf16.mxu0 0
        %4135 = vmatmul.mubr.bf16.gmra.mrb[0].mxu0 %v4025
        %v4136 = vpop.f32.mrb[0].mxu0
        %v4137 = vadd.f32 0.0, %v4136
        %v4138 = vpop.f32.mrb[0].mxu0
        %v4139 = vpop.f32.mrb[0].mxu0
        %v4140 = vadd.f32 0.0, %v4139
        %v4141 = vpop.f32.mrb[0].mxu0
        %4142 = vmatprep.mubr.bf16.mxu0 0
        %4143 = vmatmul.mubr.bf16.gmra.mrb[0].mxu0 %v4028
        %v4144 = vpop.f32.mrb[0].mxu0
        %v4145 = vadd.f32 0.0, %v4144
        %v4146 = vpop.f32.mrb[0].mxu0
        %v4147 = vpop.f32.mrb[0].mxu0
        %v4148 = vadd.f32 0.0, %v4147
        %v4149 = vpop.f32.mrb[0].mxu0
        %4150 = vmatprep.mubr.bf16.mxu0 0
        %4151 = vmatmul.mubr.bf16.gmra.mrb[0].mxu0 %v4031
        %v4152 = vpop.f32.mrb[0].mxu0
        %v4153 = vadd.f32 0.0, %v4152
        %v4154 = vpop.f32.mrb[0].mxu0
        %v4155 = vpop.f32.mrb[0].mxu0
        %v4156 = vadd.f32 0.0, %v4155
        %v4157 = vpop.f32.mrb[0].mxu0
        %4158 = vmatprep.mubr.bf16.mxu0 0
        %4159 = vmatmul.mubr.bf16.gmra.mrb[0].mxu0 %v4034
        %v4160 = vpop.f32.mrb[0].mxu0
        %v4161 = vadd.f32 0.0, %v4160
        %v4162 = vpop.f32.mrb[0].mxu0
        %v4163 = vpop.f32.mrb[0].mxu0
        %v4164 = vadd.f32 0.0, %v4163
        %v4165 = vpop.f32.mrb[0].mxu0
        %4166 = vmatprep.mubr.bf16.mxu0 0
        %4167 = vmatmul.mubr.bf16.gmra.mrb[0].mxu0 %v4037
        %v4168 = vpop.f32.mrb[0].mxu0
        %v4169 = vadd.f32 0.0, %v4168
        %v4170 = vpop.f32.mrb[0].mxu0
        %v4171 = vpop.f32.mrb[0].mxu0
        %v4172 = vadd.f32 0.0, %v4171
        %v4173 = vpop.f32.mrb[0].mxu0
        %4174 = vmatprep.mubr.bf16.mxu0 0
        %4175 = vmatmul.mubr.bf16.gmra.mrb[0].mxu0 %v4040
        %v4176 = vpop.f32.mrb[0].mxu0
        %v4177 = vadd.f32 0.0, %v4176
        %v4178 = vpop.f32.mrb[0].mxu0
        %v4179 = vpop.f32.mrb[0].mxu0
        %v4180 = vadd.f32 0.0, %v4179
        %v4181 = vpop.f32.mrb[0].mxu0
        %4182 = vmatprep.mubr.bf16.mxu0 0
        %4183 = vmatmul.mubr.bf16.gmra.mrb[0].mxu0 %v4043
        %v4184 = vpop.f32.mrb[0].mxu0
        %v4185 = vadd.f32 0.0, %v4184
        %v4186 = vpop.f32.mrb[0].mxu0
        %v4187 = vpop.f32.mrb[0].mxu0
        %v4188 = vadd.f32 0.0, %v4187
        %v4189 = vpop.f32.mrb[0].mxu0
        %4190 = vmatprep.mubr.bf16.mxu0 0
        %4191 = vmatmul.mubr.bf16.gmra.mrb[0].mxu0 %v4046
        %v4192 = vpop.f32.mrb[0].mxu0
        %v4193 = vadd.f32 0.0, %v4192
        %v4194 = vpop.f32.mrb[0].mxu0
        %v4195 = vpop.f32.mrb[0].mxu0
        %v4196 = vadd.f32 0.0, %v4195
        %v4197 = vpop.f32.mrb[0].mxu0
        %4198 = vmatprep.mubr.bf16.mxu0 0
        %4199 = vmatmul.mubr.bf16.gmra.mrb[0].mxu0 %v4049
        %v4200 = vpop.f32.mrb[0].mxu0
        %v4201 = vadd.f32 0.0, %v4200
        %v4202 = vpop.f32.mrb[0].mxu0
        %v4203 = vpop.f32.mrb[0].mxu0
        %v4204 = vadd.f32 0.0, %v4203
        %v4205 = vpop.f32.mrb[0].mxu0
        %4206 = vmatprep.mubr.bf16.mxu0 0
        %4207 = vmatmul.mubr.bf16.gmra.mrb[0].mxu0 %v4052
        %v4208 = vpop.f32.mrb[0].mxu0
        %v4209 = vadd.f32 0.0, %v4208
        %v4210 = vpop.f32.mrb[0].mxu0
        %v4211 = vpop.f32.mrb[0].mxu0
        %v4212 = vadd.f32 0.0, %v4211
        %v4213 = vpop.f32.mrb[0].mxu0
        %4214 = vdwg.mxu0
        %v4215 = vadd.f32 %v3844, %v4089
        %v4216 = vadd.f32 %v3845, %v4092
        %v4217 = vadd.f32 %v3846, %v4097
        %v4218 = vadd.f32 %v3847, %v4100
        %v4219 = vadd.f32 %v3848, %v4105
        %v4220 = vadd.f32 %v3849, %v4108
        %v4221 = vadd.f32 %v3850, %v4113
        %v4222 = vadd.f32 %v3851, %v4116
        %v4223 = vadd.f32 %v3852, %v4121
        %v4224 = vadd.f32 %v3853, %v4124
        %v4225 = vadd.f32 %v3854, %v4129
        %v4226 = vadd.f32 %v3855, %v4132
        %v4227 = vadd.f32 %v3856, %v4137
        %v4228 = vadd.f32 %v3857, %v4140
        %v4229 = vadd.f32 %v3858, %v4145
        %v4230 = vadd.f32 %v3859, %v4148
        %v4231 = vadd.f32 %v3860, %v4153
        %v4232 = vadd.f32 %v3861, %v4156
        %v4233 = vadd.f32 %v3862, %v4161
        %v4234 = vadd.f32 %v3863, %v4164
        %v4235 = vadd.f32 %v3864, %v4169
        %v4236 = vadd.f32 %v3865, %v4172
        %v4237 = vadd.f32 %v3866, %v4177
        %v4238 = vadd.f32 %v3867, %v4180
        %v4239 = vadd.f32 %v3868, %v4185
        %v4240 = vadd.f32 %v3869, %v4188
        %v4241 = vadd.f32 %v3870, %v4193
        %v4242 = vadd.f32 %v3871, %v4196
        %v4243 = vadd.f32 %v3872, %v4201
        %v4244 = vadd.f32 %v3873, %v4204
        %v4245 = vadd.f32 %v3874, %v4209
        %v4246 = vadd.f32 %v3875, %v4212
        %v4247 = vld [vmem:[%s3876] sm:$0xf]
        %v4248 = vld [vmem:[%s3876 + $0x4] sm:$0xf]
        %v4249 = vld [vmem:[%s3876 + $0x8] sm:$0x1]
        %v4250 = vld [vmem:[%s3876 + $0xc] sm:$0xf]
        %v4251 = vld [vmem:[%s3876 + $0x10] sm:$0xf]
        %v4252 = vld [vmem:[%s3876 + $0x14] sm:$0x1]
        %v4253 = vld [vmem:[%s3876 + $0x18] sm:$0xf]
        %v4254 = vld [vmem:[%s3876 + $0x1c] sm:$0xf]
        %v4255 = vld [vmem:[%s3876 + $0x20] sm:$0x1]
        %v4256 = vld [vmem:[%s3876 + $0x24] sm:$0xf]
        %v4257 = vld [vmem:[%s3876 + $0x28] sm:$0xf]
        %v4258 = vld [vmem:[%s3876 + $0x2c] sm:$0x1]
        %v4259 = vld [vmem:[%s3876 + $0x30] sm:$0xf]
        %v4260 = vld [vmem:[%s3876 + $0x34] sm:$0xf]
        %v4261 = vld [vmem:[%s3876 + $0x38] sm:$0x1]
        %v4262 = vld [vmem:[%s3876 + $0x3c] sm:$0xf]
        %v4263 = vld [vmem:[%s3876 + $0x40] sm:$0xf]
        %v4264 = vld [vmem:[%s3876 + $0x44] sm:$0x1]
        %v4265 = vld [vmem:[%s3876 + $0x48] sm:$0xf]
        %v4266 = vld [vmem:[%s3876 + $0x4c] sm:$0xf]
        %v4267 = vld [vmem:[%s3876 + $0x50] sm:$0x1]
        %v4268 = vld [vmem:[%s3876 + $0x54] sm:$0xf]
        %v4269 = vld [vmem:[%s3876 + $0x58] sm:$0xf]
        %v4270 = vld [vmem:[%s3876 + $0x5c] sm:$0x1]
        %v4271 = vld [vmem:[%s3876 + $0x60] sm:$0xf]
        %v4272 = vld [vmem:[%s3876 + $0x64] sm:$0xf]
        %v4273 = vld [vmem:[%s3876 + $0x68] sm:$0x1]
        %v4274 = vld [vmem:[%s3876 + $0x6c] sm:$0xf]
        %v4275 = vld [vmem:[%s3876 + $0x70] sm:$0xf]
        %v4276 = vld [vmem:[%s3876 + $0x74] sm:$0x1]
        %v4277 = vld [vmem:[%s3876 + $0x78] sm:$0xf]
        %v4278 = vld [vmem:[%s3876 + $0x7c] sm:$0xf]
        %v4279 = vld [vmem:[%s3876 + $0x80] sm:$0x1]
        %v4280 = vld [vmem:[%s3876 + $0x84] sm:$0xf]
        %v4281 = vld [vmem:[%s3876 + $0x88] sm:$0xf]
        %v4282 = vld [vmem:[%s3876 + $0x8c] sm:$0x1]
        %v4283 = vld [vmem:[%s3876 + $0x90] sm:$0xf]
        %v4284 = vld [vmem:[%s3876 + $0x94] sm:$0xf]
        %v4285 = vld [vmem:[%s3876 + $0x98] sm:$0x1]
        %v4286 = vld [vmem:[%s3876 + $0x9c] sm:$0xf]
        %v4287 = vld [vmem:[%s3876 + $0xa0] sm:$0xf]
        %v4288 = vld [vmem:[%s3876 + $0xa4] sm:$0x1]
        %v4289 = vld [vmem:[%s3876 + $0xa8] sm:$0xf]
        %v4290 = vld [vmem:[%s3876 + $0xac] sm:$0xf]
        %v4291 = vld [vmem:[%s3876 + $0xb0] sm:$0x1]
        %v4292 = vld [vmem:[%s3876 + $0xb4] sm:$0xf]
        %v4293 = vld [vmem:[%s3876 + $0xb8] sm:$0xf]
        %v4294 = vld [vmem:[%s3876 + $0xbc] sm:$0x1]
        %v4296 = vshrl.u32 %v4247, 16
        %v4298 = vrot.slane %v4296, 4
        %v4299 = vshll.u32 %v4247, 16
        %v4301 = vrot.slane %v4299, 5
        %v4302 = vor.u32 %v4298, %v4301
        %v4303 = vrot.slane %v4302, 4
        %v4305 = vshll.u32 %v4248, 16
        %v4307 = vrot.slane %v4305, 5
        %v4308 = vsel %vm856, %v4303, %v4307
        %v4309 = vshrl.u32 %v4248, 16
        %v4311 = vrot.slane %v4309, 4
        %v4312 = vor.u32 %v4311, %v4307
        %v4313 = vrot.slane %v4312, 4
        %v4315 = vshll.u32 %v4249, 16
        %v4317 = vrot.slane %v4315, 5
        %v4318 = vsel %vm856, %v4313, %v4317
        %v4320 = vshrl.u32 %v4250, 16
        %v4322 = vrot.slane %v4320, 4
        %v4323 = vshll.u32 %v4250, 16
        %v4325 = vrot.slane %v4323, 5
        %v4326 = vor.u32 %v4322, %v4325
        %v4327 = vrot.slane %v4326, 4
        %v4329 = vshll.u32 %v4251, 16
        %v4331 = vrot.slane %v4329, 5
        %v4332 = vsel %vm856, %v4327, %v4331
        %v4333 = vshrl.u32 %v4251, 16
        %v4335 = vrot.slane %v4333, 4
        %v4336 = vor.u32 %v4335, %v4331
        %v4337 = vrot.slane %v4336, 4
        %v4339 = vshll.u32 %v4252, 16
        %v4341 = vrot.slane %v4339, 5
        %v4342 = vsel %vm856, %v4337, %v4341
        %v4344 = vshrl.u32 %v4253, 16
        %v4346 = vrot.slane %v4344, 4
        %v4347 = vshll.u32 %v4253, 16
        %v4349 = vrot.slane %v4347, 5
        %v4350 = vor.u32 %v4346, %v4349
        %v4351 = vrot.slane %v4350, 4
        %v4353 = vshll.u32 %v4254, 16
        %v4355 = vrot.slane %v4353, 5
        %v4356 = vsel %vm856, %v4351, %v4355
        %v4357 = vshrl.u32 %v4254, 16
        %v4359 = vrot.slane %v4357, 4
        %v4360 = vor.u32 %v4359, %v4355
        %v4361 = vrot.slane %v4360, 4
        %v4363 = vshll.u32 %v4255, 16
        %v4365 = vrot.slane %v4363, 5
        %v4366 = vsel %vm856, %v4361, %v4365
        %v4368 = vshrl.u32 %v4256, 16
        %v4370 = vrot.slane %v4368, 4
        %v4371 = vshll.u32 %v4256, 16
        %v4373 = vrot.slane %v4371, 5
        %v4374 = vor.u32 %v4370, %v4373
        %v4375 = vrot.slane %v4374, 4
        %v4377 = vshll.u32 %v4257, 16
        %v4379 = vrot.slane %v4377, 5
        %v4380 = vsel %vm856, %v4375, %v4379
        %v4381 = vshrl.u32 %v4257, 16
        %v4383 = vrot.slane %v4381, 4
        %v4384 = vor.u32 %v4383, %v4379
        %v4385 = vrot.slane %v4384, 4
        %v4387 = vshll.u32 %v4258, 16
        %v4389 = vrot.slane %v4387, 5
        %v4390 = vsel %vm856, %v4385, %v4389
        %v4392 = vshrl.u32 %v4259, 16
        %v4394 = vrot.slane %v4392, 4
        %v4395 = vshll.u32 %v4259, 16
        %v4397 = vrot.slane %v4395, 5
        %v4398 = vor.u32 %v4394, %v4397
        %v4399 = vrot.slane %v4398, 4
        %v4401 = vshll.u32 %v4260, 16
        %v4403 = vrot.slane %v4401, 5
        %v4404 = vsel %vm856, %v4399, %v4403
        %v4405 = vshrl.u32 %v4260, 16
        %v4407 = vrot.slane %v4405, 4
        %v4408 = vor.u32 %v4407, %v4403
        %v4409 = vrot.slane %v4408, 4
        %v4411 = vshll.u32 %v4261, 16
        %v4413 = vrot.slane %v4411, 5
        %v4414 = vsel %vm856, %v4409, %v4413
        %v4416 = vshrl.u32 %v4262, 16
        %v4418 = vrot.slane %v4416, 4
        %v4419 = vshll.u32 %v4262, 16
        %v4421 = vrot.slane %v4419, 5
        %v4422 = vor.u32 %v4418, %v4421
        %v4423 = vrot.slane %v4422, 4
        %v4425 = vshll.u32 %v4263, 16
        %v4427 = vrot.slane %v4425, 5
        %v4428 = vsel %vm856, %v4423, %v4427
        %v4429 = vshrl.u32 %v4263, 16
        %v4431 = vrot.slane %v4429, 4
        %v4432 = vor.u32 %v4431, %v4427
        %v4433 = vrot.slane %v4432, 4
        %v4435 = vshll.u32 %v4264, 16
        %v4437 = vrot.slane %v4435, 5
        %v4438 = vsel %vm856, %v4433, %v4437
        %v4440 = vshrl.u32 %v4265, 16
        %v4442 = vrot.slane %v4440, 4
        %v4443 = vshll.u32 %v4265, 16
        %v4445 = vrot.slane %v4443, 5
        %v4446 = vor.u32 %v4442, %v4445
        %v4447 = vrot.slane %v4446, 4
        %v4449 = vshll.u32 %v4266, 16
        %v4451 = vrot.slane %v4449, 5
        %v4452 = vsel %vm856, %v4447, %v4451
        %v4453 = vshrl.u32 %v4266, 16
        %v4455 = vrot.slane %v4453, 4
        %v4456 = vor.u32 %v4455, %v4451
        %v4457 = vrot.slane %v4456, 4
        %v4459 = vshll.u32 %v4267, 16
        %v4461 = vrot.slane %v4459, 5
        %v4462 = vsel %vm856, %v4457, %v4461
        %v4464 = vshrl.u32 %v4268, 16
        %v4466 = vrot.slane %v4464, 4
        %v4467 = vshll.u32 %v4268, 16
        %v4469 = vrot.slane %v4467, 5
        %v4470 = vor.u32 %v4466, %v4469
        %v4471 = vrot.slane %v4470, 4
        %v4473 = vshll.u32 %v4269, 16
        %v4475 = vrot.slane %v4473, 5
        %v4476 = vsel %vm856, %v4471, %v4475
        %v4477 = vshrl.u32 %v4269, 16
        %v4479 = vrot.slane %v4477, 4
        %v4480 = vor.u32 %v4479, %v4475
        %v4481 = vrot.slane %v4480, 4
        %v4483 = vshll.u32 %v4270, 16
        %v4485 = vrot.slane %v4483, 5
        %v4486 = vsel %vm856, %v4481, %v4485
        %v4488 = vshrl.u32 %v4271, 16
        %v4490 = vrot.slane %v4488, 4
        %v4491 = vshll.u32 %v4271, 16
        %v4493 = vrot.slane %v4491, 5
        %v4494 = vor.u32 %v4490, %v4493
        %v4495 = vrot.slane %v4494, 4
        %v4497 = vshll.u32 %v4272, 16
        %v4499 = vrot.slane %v4497, 5
        %v4500 = vsel %vm856, %v4495, %v4499
        %v4501 = vshrl.u32 %v4272, 16
        %v4503 = vrot.slane %v4501, 4
        %v4504 = vor.u32 %v4503, %v4499
        %v4505 = vrot.slane %v4504, 4
        %v4507 = vshll.u32 %v4273, 16
        %v4509 = vrot.slane %v4507, 5
        %v4510 = vsel %vm856, %v4505, %v4509
        %v4512 = vshrl.u32 %v4274, 16
        %v4514 = vrot.slane %v4512, 4
        %v4515 = vshll.u32 %v4274, 16
        %v4517 = vrot.slane %v4515, 5
        %v4518 = vor.u32 %v4514, %v4517
        %v4519 = vrot.slane %v4518, 4
        %v4521 = vshll.u32 %v4275, 16
        %v4523 = vrot.slane %v4521, 5
        %v4524 = vsel %vm856, %v4519, %v4523
        %v4525 = vshrl.u32 %v4275, 16
        %v4527 = vrot.slane %v4525, 4
        %v4528 = vor.u32 %v4527, %v4523
        %v4529 = vrot.slane %v4528, 4
        %v4531 = vshll.u32 %v4276, 16
        %v4533 = vrot.slane %v4531, 5
        %v4534 = vsel %vm856, %v4529, %v4533
        %v4536 = vshrl.u32 %v4277, 16
        %v4538 = vrot.slane %v4536, 4
        %v4539 = vshll.u32 %v4277, 16
        %v4541 = vrot.slane %v4539, 5
        %v4542 = vor.u32 %v4538, %v4541
        %v4543 = vrot.slane %v4542, 4
        %v4545 = vshll.u32 %v4278, 16
        %v4547 = vrot.slane %v4545, 5
        %v4548 = vsel %vm856, %v4543, %v4547
        %v4549 = vshrl.u32 %v4278, 16
        %v4551 = vrot.slane %v4549, 4
        %v4552 = vor.u32 %v4551, %v4547
        %v4553 = vrot.slane %v4552, 4
        %v4555 = vshll.u32 %v4279, 16
        %v4557 = vrot.slane %v4555, 5
        %v4558 = vsel %vm856, %v4553, %v4557
        %v4560 = vshrl.u32 %v4280, 16
        %v4562 = vrot.slane %v4560, 4
        %v4563 = vshll.u32 %v4280, 16
        %v4565 = vrot.slane %v4563, 5
        %v4566 = vor.u32 %v4562, %v4565
        %v4567 = vrot.slane %v4566, 4
        %v4569 = vshll.u32 %v4281, 16
        %v4571 = vrot.slane %v4569, 5
        %v4572 = vsel %vm856, %v4567, %v4571
        %v4573 = vshrl.u32 %v4281, 16
        %v4575 = vrot.slane %v4573, 4
        %v4576 = vor.u32 %v4575, %v4571
        %v4577 = vrot.slane %v4576, 4
        %v4579 = vshll.u32 %v4282, 16
        %v4581 = vrot.slane %v4579, 5
        %v4582 = vsel %vm856, %v4577, %v4581
        %v4584 = vshrl.u32 %v4283, 16
        %v4586 = vrot.slane %v4584, 4
        %v4587 = vshll.u32 %v4283, 16
        %v4589 = vrot.slane %v4587, 5
        %v4590 = vor.u32 %v4586, %v4589
        %v4591 = vrot.slane %v4590, 4
        %v4593 = vshll.u32 %v4284, 16
        %v4595 = vrot.slane %v4593, 5
        %v4596 = vsel %vm856, %v4591, %v4595
        %v4597 = vshrl.u32 %v4284, 16
        %v4599 = vrot.slane %v4597, 4
        %v4600 = vor.u32 %v4599, %v4595
        %v4601 = vrot.slane %v4600, 4
        %v4603 = vshll.u32 %v4285, 16
        %v4605 = vrot.slane %v4603, 5
        %v4606 = vsel %vm856, %v4601, %v4605
        %v4608 = vshrl.u32 %v4286, 16
        %v4610 = vrot.slane %v4608, 4
        %v4611 = vshll.u32 %v4286, 16
        %v4613 = vrot.slane %v4611, 5
        %v4614 = vor.u32 %v4610, %v4613
        %v4615 = vrot.slane %v4614, 4
        %v4617 = vshll.u32 %v4287, 16
        %v4619 = vrot.slane %v4617, 5
        %v4620 = vsel %vm856, %v4615, %v4619
        %v4621 = vshrl.u32 %v4287, 16
        %v4623 = vrot.slane %v4621, 4
        %v4624 = vor.u32 %v4623, %v4619
        %v4625 = vrot.slane %v4624, 4
        %v4627 = vshll.u32 %v4288, 16
        %v4629 = vrot.slane %v4627, 5
        %v4630 = vsel %vm856, %v4625, %v4629
        %v4632 = vshrl.u32 %v4289, 16
        %v4634 = vrot.slane %v4632, 4
        %v4635 = vshll.u32 %v4289, 16
        %v4637 = vrot.slane %v4635, 5
        %v4638 = vor.u32 %v4634, %v4637
        %v4639 = vrot.slane %v4638, 4
        %v4641 = vshll.u32 %v4290, 16
        %v4643 = vrot.slane %v4641, 5
        %v4644 = vsel %vm856, %v4639, %v4643
        %v4645 = vshrl.u32 %v4290, 16
        %v4647 = vrot.slane %v4645, 4
        %v4648 = vor.u32 %v4647, %v4643
        %v4649 = vrot.slane %v4648, 4
        %v4651 = vshll.u32 %v4291, 16
        %v4653 = vrot.slane %v4651, 5
        %v4654 = vsel %vm856, %v4649, %v4653
        %v4656 = vshrl.u32 %v4292, 16
        %v4658 = vrot.slane %v4656, 4
        %v4659 = vshll.u32 %v4292, 16
        %v4661 = vrot.slane %v4659, 5
        %v4662 = vor.u32 %v4658, %v4661
        %v4663 = vrot.slane %v4662, 4
        %v4665 = vshll.u32 %v4293, 16
        %v4667 = vrot.slane %v4665, 5
        %v4668 = vsel %vm856, %v4663, %v4667
        %v4669 = vshrl.u32 %v4293, 16
        %v4671 = vrot.slane %v4669, 4
        %v4672 = vor.u32 %v4671, %v4667
        %v4673 = vrot.slane %v4672, 4
        %v4675 = vshll.u32 %v4294, 16
        %v4677 = vrot.slane %v4675, 5
        %v4678 = vsel %vm856, %v4673, %v4677
        %s4679 = scalar_lea.vmem [#allocation6], 112
        %v4680 = vld [vmem:[%s4679] sm:$0xf]
        %v4681 = vld [vmem:[%s4679 + $0x4] sm:$0xf]
        %v4682 = vld [vmem:[%s4679 + $0x8] sm:$0xf]
        %v4683 = vld [vmem:[%s4679 + $0xc] sm:$0xf]
        %v4684 = vunpack.c.l.b16 %v4308
        %v4685 = vunpack.c.l.b16 %v4318
        %v4686 = vunpack.c.l.b16 %v4332
        %v4687 = vunpack.c.l.b16 %v4342
        %v4688 = vunpack.c.l.b16 %v4356
        %v4689 = vunpack.c.l.b16 %v4366
        %v4690 = vunpack.c.l.b16 %v4380
        %v4691 = vunpack.c.l.b16 %v4390
        %v4692 = vunpack.c.l.b16 %v4404
        %v4693 = vunpack.c.l.b16 %v4414
        %v4694 = vunpack.c.l.b16 %v4428
        %v4695 = vunpack.c.l.b16 %v4438
        %v4696 = vunpack.c.l.b16 %v4452
        %v4697 = vunpack.c.l.b16 %v4462
        %v4698 = vunpack.c.l.b16 %v4476
        %v4699 = vunpack.c.l.b16 %v4486
        %v4700 = vunpack.c.l.b16 %v4500
        %v4701 = vunpack.c.l.b16 %v4510
        %v4702 = vunpack.c.l.b16 %v4524
        %v4703 = vunpack.c.l.b16 %v4534
        %v4704 = vunpack.c.l.b16 %v4548
        %v4705 = vunpack.c.l.b16 %v4558
        %v4706 = vunpack.c.l.b16 %v4572
        %v4707 = vunpack.c.l.b16 %v4582
        %v4708 = vunpack.c.l.b16 %v4596
        %v4709 = vunpack.c.l.b16 %v4606
        %v4710 = vunpack.c.l.b16 %v4620
        %v4711 = vunpack.c.l.b16 %v4630
        %v4712 = vunpack.c.l.b16 %v4644
        %v4713 = vunpack.c.l.b16 %v4654
        %v4714 = vunpack.c.l.b16 %v4668
        %v4715 = vunpack.c.l.b16 %v4678
        %v4716 = vpack.c.b16 %v4685, %v4684
        %v4717 = vpack.c.b16 %v4687, %v4686
        %v4718 = vpack.c.b16 %v4689, %v4688
        %v4719 = vpack.c.b16 %v4691, %v4690
        %v4720 = vpack.c.b16 %v4693, %v4692
        %v4721 = vpack.c.b16 %v4695, %v4694
        %v4722 = vpack.c.b16 %v4697, %v4696
        %v4723 = vpack.c.b16 %v4699, %v4698
        %v4724 = vpack.c.b16 %v4701, %v4700
        %v4725 = vpack.c.b16 %v4703, %v4702
        %v4726 = vpack.c.b16 %v4705, %v4704
        %v4727 = vpack.c.b16 %v4707, %v4706
        %v4728 = vpack.c.b16 %v4709, %v4708
        %v4729 = vpack.c.b16 %v4711, %v4710
        %v4730 = vpack.c.b16 %v4713, %v4712
        %v4731 = vpack.c.b16 %v4715, %v4714
        %v4736 = vunpack.c.l.b16 %v4680
        %v4737 = vunpack.c.l.b16 %v4681
        %v4738 = vunpack.c.l.b16 %v4682
        %v4739 = vunpack.c.l.b16 %v4683
        %v4740 = vpack.c.b16 %v4737, %v4736
        %v4741 = vpack.c.b16 %v4739, %v4738
        %v4745 = vsel %vm1306, %v4716, 0
        %v4748 = vsel %vm1306, %v4717, 0
        %v4751 = vsel %vm1306, %v4718, 0
        %v4754 = vsel %vm1306, %v4719, 0
        %v4757 = vsel %vm1306, %v4720, 0
        %v4760 = vsel %vm1306, %v4721, 0
        %v4763 = vsel %vm1306, %v4722, 0
        %v4766 = vsel %vm1306, %v4723, 0
        %v4769 = vsel %vm1306, %v4724, 0
        %v4772 = vsel %vm1306, %v4725, 0
        %v4775 = vsel %vm1306, %v4726, 0
        %v4778 = vsel %vm1306, %v4727, 0
        %v4781 = vsel %vm1306, %v4728, 0
        %v4784 = vsel %vm1306, %v4729, 0
        %v4787 = vsel %vm1306, %v4730, 0
        %v4790 = vsel %vm1306, %v4731, 0
        %4792 = vmatprep.subr.bf16.mxu0 0
        %4793 = vmatpush1.bf16.msra.mxu0 %v4740
        %4794 = vmatprep.subr.bf16.mxu0 0
        %4795 = vmatpush1.bf16.msra.mxu0 %v4741
        %4796 = vmatprep.subr.bf16.mxu0 0
        %4797 = vmatpush1.bf16.msra.mxu0 0
        %4798 = vmatprep.subr.bf16.mxu0 0
        %4799 = vmatpush1.bf16.msra.mxu0 0
        %4800 = vmatprep.subr.bf16.mxu0 0
        %4801 = vmatpush1.bf16.msra.mxu0 0
        %4802 = vmatprep.subr.bf16.mxu0 0
        %4803 = vmatpush1.bf16.msra.mxu0 0
        %4804 = vmatprep.subr.bf16.mxu0 0
        %4805 = vmatpush1.bf16.msra.mxu0 0
        %4806 = vmatprep.subr.bf16.mxu0 0
        %4807 = vmatpush1.bf16.msra.mxu0 0
        %4808 = vmatprep.subr.bf16.mxu0 0
        %4809 = vmatpush1.bf16.msra.mxu0 0
        %4810 = vmatprep.subr.bf16.mxu0 0
        %4811 = vmatpush1.bf16.msra.mxu0 0
        %4812 = vmatprep.subr.bf16.mxu0 0
        %4813 = vmatpush1.bf16.msra.mxu0 0
        %4814 = vmatprep.subr.bf16.mxu0 0
        %4815 = vmatpush1.bf16.msra.mxu0 0
        %4816 = vmatprep.subr.bf16.mxu0 0
        %4817 = vmatpush1.bf16.msra.mxu0 0
        %4818 = vmatprep.subr.bf16.mxu0 0
        %4819 = vmatpush1.bf16.msra.mxu0 0
        %4820 = vmatprep.subr.bf16.mxu0 0
        %4821 = vmatpush1.bf16.msra.mxu0 0
        %4822 = vmatprep.subr.bf16.mxu0 0
        %4823 = vmatpush1.bf16.msra.mxu0 0
        %4824 = vmatprep.mubr.bf16.mxu0 0
        %4825 = vmatmul.mubr.bf16.gmra.mrb[0].mxu0 %v4745
        %v4826 = vpop.f32.mrb[0].mxu0
        %v4827 = vadd.f32 0.0, %v4826
        %v4828 = vpop.f32.mrb[0].mxu0
        %v4829 = vpop.f32.mrb[0].mxu0
        %v4830 = vadd.f32 0.0, %v4829
        %v4831 = vpop.f32.mrb[0].mxu0
        %4832 = vmatprep.mubr.bf16.mxu0 0
        %4833 = vmatmul.mubr.bf16.gmra.mrb[0].mxu0 %v4748
        %v4834 = vpop.f32.mrb[0].mxu0
        %v4835 = vadd.f32 0.0, %v4834
        %v4836 = vpop.f32.mrb[0].mxu0
        %v4837 = vpop.f32.mrb[0].mxu0
        %v4838 = vadd.f32 0.0, %v4837
        %v4839 = vpop.f32.mrb[0].mxu0
        %4840 = vmatprep.mubr.bf16.mxu0 0
        %4841 = vmatmul.mubr.bf16.gmra.mrb[0].mxu0 %v4751
        %v4842 = vpop.f32.mrb[0].mxu0
        %v4843 = vadd.f32 0.0, %v4842
        %v4844 = vpop.f32.mrb[0].mxu0
        %v4845 = vpop.f32.mrb[0].mxu0
        %v4846 = vadd.f32 0.0, %v4845
        %v4847 = vpop.f32.mrb[0].mxu0
        %4848 = vmatprep.mubr.bf16.mxu0 0
        %4849 = vmatmul.mubr.bf16.gmra.mrb[0].mxu0 %v4754
        %v4850 = vpop.f32.mrb[0].mxu0
        %v4851 = vadd.f32 0.0, %v4850
        %v4852 = vpop.f32.mrb[0].mxu0
        %v4853 = vpop.f32.mrb[0].mxu0
        %v4854 = vadd.f32 0.0, %v4853
        %v4855 = vpop.f32.mrb[0].mxu0
        %4856 = vmatprep.mubr.bf16.mxu0 0
        %4857 = vmatmul.mubr.bf16.gmra.mrb[0].mxu0 %v4757
        %v4858 = vpop.f32.mrb[0].mxu0
        %v4859 = vadd.f32 0.0, %v4858
        %v4860 = vpop.f32.mrb[0].mxu0
        %v4861 = vpop.f32.mrb[0].mxu0
        %v4862 = vadd.f32 0.0, %v4861
        %v4863 = vpop.f32.mrb[0].mxu0
        %4864 = vmatprep.mubr.bf16.mxu0 0
        %4865 = vmatmul.mubr.bf16.gmra.mrb[0].mxu0 %v4760
        %v4866 = vpop.f32.mrb[0].mxu0
        %v4867 = vadd.f32 0.0, %v4866
        %v4868 = vpop.f32.mrb[0].mxu0
        %v4869 = vpop.f32.mrb[0].mxu0
        %v4870 = vadd.f32 0.0, %v4869
        %v4871 = vpop.f32.mrb[0].mxu0
        %4872 = vmatprep.mubr.bf16.mxu0 0
        %4873 = vmatmul.mubr.bf16.gmra.mrb[0].mxu0 %v4763
        %v4874 = vpop.f32.mrb[0].mxu0
        %v4875 = vadd.f32 0.0, %v4874
        %v4876 = vpop.f32.mrb[0].mxu0
        %v4877 = vpop.f32.mrb[0].mxu0
        %v4878 = vadd.f32 0.0, %v4877
        %v4879 = vpop.f32.mrb[0].mxu0
        %4880 = vmatprep.mubr.bf16.mxu0 0
        %4881 = vmatmul.mubr.bf16.gmra.mrb[0].mxu0 %v4766
        %v4882 = vpop.f32.mrb[0].mxu0
        %v4883 = vadd.f32 0.0, %v4882
        %v4884 = vpop.f32.mrb[0].mxu0
        %v4885 = vpop.f32.mrb[0].mxu0
        %v4886 = vadd.f32 0.0, %v4885
        %v4887 = vpop.f32.mrb[0].mxu0
        %4888 = vmatprep.mubr.bf16.mxu0 0
        %4889 = vmatmul.mubr.bf16.gmra.mrb[0].mxu0 %v4769
        %v4890 = vpop.f32.mrb[0].mxu0
        %v4891 = vadd.f32 0.0, %v4890
        %v4892 = vpop.f32.mrb[0].mxu0
        %v4893 = vpop.f32.mrb[0].mxu0
        %v4894 = vadd.f32 0.0, %v4893
        %v4895 = vpop.f32.mrb[0].mxu0
        %4896 = vmatprep.mubr.bf16.mxu0 0
        %4897 = vmatmul.mubr.bf16.gmra.mrb[0].mxu0 %v4772
        %v4898 = vpop.f32.mrb[0].mxu0
        %v4899 = vadd.f32 0.0, %v4898
        %v4900 = vpop.f32.mrb[0].mxu0
        %v4901 = vpop.f32.mrb[0].mxu0
        %v4902 = vadd.f32 0.0, %v4901
        %v4903 = vpop.f32.mrb[0].mxu0
        %4904 = vmatprep.mubr.bf16.mxu0 0
        %4905 = vmatmul.mubr.bf16.gmra.mrb[0].mxu0 %v4775
        %v4906 = vpop.f32.mrb[0].mxu0
        %v4907 = vadd.f32 0.0, %v4906
        %v4908 = vpop.f32.mrb[0].mxu0
        %v4909 = vpop.f32.mrb[0].mxu0
        %v4910 = vadd.f32 0.0, %v4909
        %v4911 = vpop.f32.mrb[0].mxu0
        %4912 = vmatprep.mubr.bf16.mxu0 0
        %4913 = vmatmul.mubr.bf16.gmra.mrb[0].mxu0 %v4778
        %v4914 = vpop.f32.mrb[0].mxu0
        %v4915 = vadd.f32 0.0, %v4914
        %v4916 = vpop.f32.mrb[0].mxu0
        %v4917 = vpop.f32.mrb[0].mxu0
        %v4918 = vadd.f32 0.0, %v4917
        %v4919 = vpop.f32.mrb[0].mxu0
        %4920 = vmatprep.mubr.bf16.mxu0 0
        %4921 = vmatmul.mubr.bf16.gmra.mrb[0].mxu0 %v4781
        %v4922 = vpop.f32.mrb[0].mxu0
        %v4923 = vadd.f32 0.0, %v4922
        %v4924 = vpop.f32.mrb[0].mxu0
        %v4925 = vpop.f32.mrb[0].mxu0
        %v4926 = vadd.f32 0.0, %v4925
        %v4927 = vpop.f32.mrb[0].mxu0
        %4928 = vmatprep.mubr.bf16.mxu0 0
        %4929 = vmatmul.mubr.bf16.gmra.mrb[0].mxu0 %v4784
        %v4930 = vpop.f32.mrb[0].mxu0
        %v4931 = vadd.f32 0.0, %v4930
        %v4932 = vpop.f32.mrb[0].mxu0
        %v4933 = vpop.f32.mrb[0].mxu0
        %v4934 = vadd.f32 0.0, %v4933
        %v4935 = vpop.f32.mrb[0].mxu0
        %4936 = vmatprep.mubr.bf16.mxu0 0
        %4937 = vmatmul.mubr.bf16.gmra.mrb[0].mxu0 %v4787
        %v4938 = vpop.f32.mrb[0].mxu0
        %v4939 = vadd.f32 0.0, %v4938
        %v4940 = vpop.f32.mrb[0].mxu0
        %v4941 = vpop.f32.mrb[0].mxu0
        %v4942 = vadd.f32 0.0, %v4941
        %v4943 = vpop.f32.mrb[0].mxu0
        %4944 = vmatprep.mubr.bf16.mxu0 0
        %4945 = vmatmul.mubr.bf16.gmra.mrb[0].mxu0 %v4790
        %v4946 = vpop.f32.mrb[0].mxu0
        %v4947 = vadd.f32 0.0, %v4946
        %v4948 = vpop.f32.mrb[0].mxu0
        %v4949 = vpop.f32.mrb[0].mxu0
        %v4950 = vadd.f32 0.0, %v4949
        %v4951 = vpop.f32.mrb[0].mxu0
        %4952 = vdwg.mxu0
        %v4953 = vadd.f32 %v4215, %v4827
        %v4954 = vadd.f32 %v4216, %v4830
        %v4955 = vadd.f32 %v4217, %v4835
        %v4956 = vadd.f32 %v4218, %v4838
        %v4957 = vadd.f32 %v4219, %v4843
        %v4958 = vadd.f32 %v4220, %v4846
        %v4959 = vadd.f32 %v4221, %v4851
        %v4960 = vadd.f32 %v4222, %v4854
        %v4961 = vadd.f32 %v4223, %v4859
        %v4962 = vadd.f32 %v4224, %v4862
        %v4963 = vadd.f32 %v4225, %v4867
        %v4964 = vadd.f32 %v4226, %v4870
        %v4965 = vadd.f32 %v4227, %v4875
        %v4966 = vadd.f32 %v4228, %v4878
        %v4967 = vadd.f32 %v4229, %v4883
        %v4968 = vadd.f32 %v4230, %v4886
        %v4969 = vadd.f32 %v4231, %v4891
        %v4970 = vadd.f32 %v4232, %v4894
        %v4971 = vadd.f32 %v4233, %v4899
        %v4972 = vadd.f32 %v4234, %v4902
        %v4973 = vadd.f32 %v4235, %v4907
        %v4974 = vadd.f32 %v4236, %v4910
        %v4975 = vadd.f32 %v4237, %v4915
        %v4976 = vadd.f32 %v4238, %v4918
        %v4977 = vadd.f32 %v4239, %v4923
        %v4978 = vadd.f32 %v4240, %v4926
        %v4979 = vadd.f32 %v4241, %v4931
        %v4980 = vadd.f32 %v4242, %v4934
        %v4981 = vadd.f32 %v4243, %v4939
        %v4982 = vadd.f32 %v4244, %v4942
        %v4983 = vadd.f32 %v4245, %v4947
        %v4984 = vadd.f32 %v4246, %v4950
        %v4985 = vld [vmem:[%s3876] sm:$0xe]
        %v4986 = vld [vmem:[%s3876 + $0xc] sm:$0xe]
        %v4987 = vld [vmem:[%s3876 + $0x18] sm:$0xe]
        %v4988 = vld [vmem:[%s3876 + $0x24] sm:$0xe]
        %v4989 = vld [vmem:[%s3876 + $0x30] sm:$0xe]
        %v4990 = vld [vmem:[%s3876 + $0x3c] sm:$0xe]
        %v4991 = vld [vmem:[%s3876 + $0x48] sm:$0xe]
        %v4992 = vld [vmem:[%s3876 + $0x54] sm:$0xe]
        %v4993 = vld [vmem:[%s3876 + $0x60] sm:$0xe]
        %v4994 = vld [vmem:[%s3876 + $0x6c] sm:$0xe]
        %v4995 = vld [vmem:[%s3876 + $0x78] sm:$0xe]
        %v4996 = vld [vmem:[%s3876 + $0x84] sm:$0xe]
        %v4997 = vld [vmem:[%s3876 + $0x90] sm:$0xe]
        %v4998 = vld [vmem:[%s3876 + $0x9c] sm:$0xe]
        %v4999 = vld [vmem:[%s3876 + $0xa8] sm:$0xe]
        %v5000 = vld [vmem:[%s3876 + $0xb4] sm:$0xe]
        %v5049 = vrot.slane %v4985, 5
        %v5050 = vrot.slane %v5049, 4
        %v5051 = vrot.slane %v4248, 5
        %v5052 = vsel %vm1867, %v5050, %v5051
        %v5053 = vrot.slane %v5051, 4
        %v5054 = vrot.slane %v4249, 5
        %v5055 = vsel %vm1867, %v5053, %v5054
        %v5056 = vrot.slane %v4986, 5
        %v5057 = vrot.slane %v5056, 4
        %v5058 = vrot.slane %v4251, 5
        %v5059 = vsel %vm1867, %v5057, %v5058
        %v5060 = vrot.slane %v5058, 4
        %v5061 = vrot.slane %v4252, 5
        %v5062 = vsel %vm1867, %v5060, %v5061
        %v5063 = vrot.slane %v4987, 5
        %v5064 = vrot.slane %v5063, 4
        %v5065 = vrot.slane %v4254, 5
        %v5066 = vsel %vm1867, %v5064, %v5065
        %v5067 = vrot.slane %v5065, 4
        %v5068 = vrot.slane %v4255, 5
        %v5069 = vsel %vm1867, %v5067, %v5068
        %v5070 = vrot.slane %v4988, 5
        %v5071 = vrot.slane %v5070, 4
        %v5072 = vrot.slane %v4257, 5
        %v5073 = vsel %vm1867, %v5071, %v5072
        %v5074 = vrot.slane %v5072, 4
        %v5075 = vrot.slane %v4258, 5
        %v5076 = vsel %vm1867, %v5074, %v5075
        %v5077 = vrot.slane %v4989, 5
        %v5078 = vrot.slane %v5077, 4
        %v5079 = vrot.slane %v4260, 5
        %v5080 = vsel %vm1867, %v5078, %v5079
        %v5081 = vrot.slane %v5079, 4
        %v5082 = vrot.slane %v4261, 5
        %v5083 = vsel %vm1867, %v5081, %v5082
        %v5084 = vrot.slane %v4990, 5
        %v5085 = vrot.slane %v5084, 4
        %v5086 = vrot.slane %v4263, 5
        %v5087 = vsel %vm1867, %v5085, %v5086
        %v5088 = vrot.slane %v5086, 4
        %v5089 = vrot.slane %v4264, 5
        %v5090 = vsel %vm1867, %v5088, %v5089
        %v5091 = vrot.slane %v4991, 5
        %v5092 = vrot.slane %v5091, 4
        %v5093 = vrot.slane %v4266, 5
        %v5094 = vsel %vm1867, %v5092, %v5093
        %v5095 = vrot.slane %v5093, 4
        %v5096 = vrot.slane %v4267, 5
        %v5097 = vsel %vm1867, %v5095, %v5096
        %v5098 = vrot.slane %v4992, 5
        %v5099 = vrot.slane %v5098, 4
        %v5100 = vrot.slane %v4269, 5
        %v5101 = vsel %vm1867, %v5099, %v5100
        %v5102 = vrot.slane %v5100, 4
        %v5103 = vrot.slane %v4270, 5
        %v5104 = vsel %vm1867, %v5102, %v5103
        %v5105 = vrot.slane %v4993, 5
        %v5106 = vrot.slane %v5105, 4
        %v5107 = vrot.slane %v4272, 5
        %v5108 = vsel %vm1867, %v5106, %v5107
        %v5109 = vrot.slane %v5107, 4
        %v5110 = vrot.slane %v4273, 5
        %v5111 = vsel %vm1867, %v5109, %v5110
        %v5112 = vrot.slane %v4994, 5
        %v5113 = vrot.slane %v5112, 4
        %v5114 = vrot.slane %v4275, 5
        %v5115 = vsel %vm1867, %v5113, %v5114
        %v5116 = vrot.slane %v5114, 4
        %v5117 = vrot.slane %v4276, 5
        %v5118 = vsel %vm1867, %v5116, %v5117
        %v5119 = vrot.slane %v4995, 5
        %v5120 = vrot.slane %v5119, 4
        %v5121 = vrot.slane %v4278, 5
        %v5122 = vsel %vm1867, %v5120, %v5121
        %v5123 = vrot.slane %v5121, 4
        %v5124 = vrot.slane %v4279, 5
        %v5125 = vsel %vm1867, %v5123, %v5124
        %v5126 = vrot.slane %v4996, 5
        %v5127 = vrot.slane %v5126, 4
        %v5128 = vrot.slane %v4281, 5
        %v5129 = vsel %vm1867, %v5127, %v5128
        %v5130 = vrot.slane %v5128, 4
        %v5131 = vrot.slane %v4282, 5
        %v5132 = vsel %vm1867, %v5130, %v5131
        %v5133 = vrot.slane %v4997, 5
        %v5134 = vrot.slane %v5133, 4
        %v5135 = vrot.slane %v4284, 5
        %v5136 = vsel %vm1867, %v5134, %v5135
        %v5137 = vrot.slane %v5135, 4
        %v5138 = vrot.slane %v4285, 5
        %v5139 = vsel %vm1867, %v5137, %v5138
        %v5140 = vrot.slane %v4998, 5
        %v5141 = vrot.slane %v5140, 4
        %v5142 = vrot.slane %v4287, 5
        %v5143 = vsel %vm1867, %v5141, %v5142
        %v5144 = vrot.slane %v5142, 4
        %v5145 = vrot.slane %v4288, 5
        %v5146 = vsel %vm1867, %v5144, %v5145
        %v5147 = vrot.slane %v4999, 5
        %v5148 = vrot.slane %v5147, 4
        %v5149 = vrot.slane %v4290, 5
        %v5150 = vsel %vm1867, %v5148, %v5149
        %v5151 = vrot.slane %v5149, 4
        %v5152 = vrot.slane %v4291, 5
        %v5153 = vsel %vm1867, %v5151, %v5152
        %v5154 = vrot.slane %v5000, 5
        %v5155 = vrot.slane %v5154, 4
        %v5156 = vrot.slane %v4293, 5
        %v5157 = vsel %vm1867, %v5155, %v5156
        %v5158 = vrot.slane %v5156, 4
        %v5159 = vrot.slane %v4294, 5
        %v5160 = vsel %vm1867, %v5158, %v5159
        %s5161 = scalar_lea.vmem [#allocation6], 128
        %v5162 = vld [vmem:[%s5161] sm:$0xf]
        %v5163 = vld [vmem:[%s5161 + $0x4] sm:$0xf]
        %v5164 = vld [vmem:[%s5161 + $0x8] sm:$0xf]
        %v5165 = vld [vmem:[%s5161 + $0xc] sm:$0xf]
        %v5166 = vunpack.c.l.b16 %v5052
        %v5167 = vunpack.c.l.b16 %v5055
        %v5168 = vunpack.c.l.b16 %v5059
        %v5169 = vunpack.c.l.b16 %v5062
        %v5170 = vunpack.c.l.b16 %v5066
        %v5171 = vunpack.c.l.b16 %v5069
        %v5172 = vunpack.c.l.b16 %v5073
        %v5173 = vunpack.c.l.b16 %v5076
        %v5174 = vunpack.c.l.b16 %v5080
        %v5175 = vunpack.c.l.b16 %v5083
        %v5176 = vunpack.c.l.b16 %v5087
        %v5177 = vunpack.c.l.b16 %v5090
        %v5178 = vunpack.c.l.b16 %v5094
        %v5179 = vunpack.c.l.b16 %v5097
        %v5180 = vunpack.c.l.b16 %v5101
        %v5181 = vunpack.c.l.b16 %v5104
        %v5182 = vunpack.c.l.b16 %v5108
        %v5183 = vunpack.c.l.b16 %v5111
        %v5184 = vunpack.c.l.b16 %v5115
        %v5185 = vunpack.c.l.b16 %v5118
        %v5186 = vunpack.c.l.b16 %v5122
        %v5187 = vunpack.c.l.b16 %v5125
        %v5188 = vunpack.c.l.b16 %v5129
        %v5189 = vunpack.c.l.b16 %v5132
        %v5190 = vunpack.c.l.b16 %v5136
        %v5191 = vunpack.c.l.b16 %v5139
        %v5192 = vunpack.c.l.b16 %v5143
        %v5193 = vunpack.c.l.b16 %v5146
        %v5194 = vunpack.c.l.b16 %v5150
        %v5195 = vunpack.c.l.b16 %v5153
        %v5196 = vunpack.c.l.b16 %v5157
        %v5197 = vunpack.c.l.b16 %v5160
        %v5198 = vpack.c.b16 %v5167, %v5166
        %v5199 = vpack.c.b16 %v5169, %v5168
        %v5200 = vpack.c.b16 %v5171, %v5170
        %v5201 = vpack.c.b16 %v5173, %v5172
        %v5202 = vpack.c.b16 %v5175, %v5174
        %v5203 = vpack.c.b16 %v5177, %v5176
        %v5204 = vpack.c.b16 %v5179, %v5178
        %v5205 = vpack.c.b16 %v5181, %v5180
        %v5206 = vpack.c.b16 %v5183, %v5182
        %v5207 = vpack.c.b16 %v5185, %v5184
        %v5208 = vpack.c.b16 %v5187, %v5186
        %v5209 = vpack.c.b16 %v5189, %v5188
        %v5210 = vpack.c.b16 %v5191, %v5190
        %v5211 = vpack.c.b16 %v5193, %v5192
        %v5212 = vpack.c.b16 %v5195, %v5194
        %v5213 = vpack.c.b16 %v5197, %v5196
        %v5218 = vunpack.c.l.b16 %v5162
        %v5219 = vunpack.c.l.b16 %v5163
        %v5220 = vunpack.c.l.b16 %v5164
        %v5221 = vunpack.c.l.b16 %v5165
        %v5222 = vpack.c.b16 %v5219, %v5218
        %v5223 = vpack.c.b16 %v5221, %v5220
        %v5227 = vsel %vm1306, %v5198, 0
        %v5230 = vsel %vm1306, %v5199, 0
        %v5233 = vsel %vm1306, %v5200, 0
        %v5236 = vsel %vm1306, %v5201, 0
        %v5239 = vsel %vm1306, %v5202, 0
        %v5242 = vsel %vm1306, %v5203, 0
        %v5245 = vsel %vm1306, %v5204, 0
        %v5248 = vsel %vm1306, %v5205, 0
        %v5251 = vsel %vm1306, %v5206, 0
        %v5254 = vsel %vm1306, %v5207, 0
        %v5257 = vsel %vm1306, %v5208, 0
        %v5260 = vsel %vm1306, %v5209, 0
        %v5263 = vsel %vm1306, %v5210, 0
        %v5266 = vsel %vm1306, %v5211, 0
        %v5269 = vsel %vm1306, %v5212, 0
        %v5272 = vsel %vm1306, %v5213, 0
        %5274 = vmatprep.subr.bf16.mxu0 0
        %5275 = vmatpush1.bf16.msra.mxu0 %v5222
        %5276 = vmatprep.subr.bf16.mxu0 0
        %5277 = vmatpush1.bf16.msra.mxu0 %v5223
        %5278 = vmatprep.subr.bf16.mxu0 0
        %5279 = vmatpush1.bf16.msra.mxu0 0
        %5280 = vmatprep.subr.bf16.mxu0 0
        %5281 = vmatpush1.bf16.msra.mxu0 0
        %5282 = vmatprep.subr.bf16.mxu0 0
        %5283 = vmatpush1.bf16.msra.mxu0 0
        %5284 = vmatprep.subr.bf16.mxu0 0
        %5285 = vmatpush1.bf16.msra.mxu0 0
        %5286 = vmatprep.subr.bf16.mxu0 0
        %5287 = vmatpush1.bf16.msra.mxu0 0
        %5288 = vmatprep.subr.bf16.mxu0 0
        %5289 = vmatpush1.bf16.msra.mxu0 0
        %5290 = vmatprep.subr.bf16.mxu0 0
        %5291 = vmatpush1.bf16.msra.mxu0 0
        %5292 = vmatprep.subr.bf16.mxu0 0
        %5293 = vmatpush1.bf16.msra.mxu0 0
        %5294 = vmatprep.subr.bf16.mxu0 0
        %5295 = vmatpush1.bf16.msra.mxu0 0
        %5296 = vmatprep.subr.bf16.mxu0 0
        %5297 = vmatpush1.bf16.msra.mxu0 0
        %5298 = vmatprep.subr.bf16.mxu0 0
        %5299 = vmatpush1.bf16.msra.mxu0 0
        %5300 = vmatprep.subr.bf16.mxu0 0
        %5301 = vmatpush1.bf16.msra.mxu0 0
        %5302 = vmatprep.subr.bf16.mxu0 0
        %5303 = vmatpush1.bf16.msra.mxu0 0
        %5304 = vmatprep.subr.bf16.mxu0 0
        %5305 = vmatpush1.bf16.msra.mxu0 0
        %5306 = vmatprep.mubr.bf16.mxu0 0
        %5307 = vmatmul.mubr.bf16.gmra.mrb[0].mxu0 %v5227
        %v5308 = vpop.f32.mrb[0].mxu0
        %v5309 = vadd.f32 0.0, %v5308
        %v5310 = vpop.f32.mrb[0].mxu0
        %v5311 = vpop.f32.mrb[0].mxu0
        %v5312 = vadd.f32 0.0, %v5311
        %v5313 = vpop.f32.mrb[0].mxu0
        %5314 = vmatprep.mubr.bf16.mxu0 0
        %5315 = vmatmul.mubr.bf16.gmra.mrb[0].mxu0 %v5230
        %v5316 = vpop.f32.mrb[0].mxu0
        %v5317 = vadd.f32 0.0, %v5316
        %v5318 = vpop.f32.mrb[0].mxu0
        %v5319 = vpop.f32.mrb[0].mxu0
        %v5320 = vadd.f32 0.0, %v5319
        %v5321 = vpop.f32.mrb[0].mxu0
        %5322 = vmatprep.mubr.bf16.mxu0 0
        %5323 = vmatmul.mubr.bf16.gmra.mrb[0].mxu0 %v5233
        %v5324 = vpop.f32.mrb[0].mxu0
        %v5325 = vadd.f32 0.0, %v5324
        %v5326 = vpop.f32.mrb[0].mxu0
        %v5327 = vpop.f32.mrb[0].mxu0
        %v5328 = vadd.f32 0.0, %v5327
        %v5329 = vpop.f32.mrb[0].mxu0
        %5330 = vmatprep.mubr.bf16.mxu0 0
        %5331 = vmatmul.mubr.bf16.gmra.mrb[0].mxu0 %v5236
        %v5332 = vpop.f32.mrb[0].mxu0
        %v5333 = vadd.f32 0.0, %v5332
        %v5334 = vpop.f32.mrb[0].mxu0
        %v5335 = vpop.f32.mrb[0].mxu0
        %v5336 = vadd.f32 0.0, %v5335
        %v5337 = vpop.f32.mrb[0].mxu0
        %5338 = vmatprep.mubr.bf16.mxu0 0
        %5339 = vmatmul.mubr.bf16.gmra.mrb[0].mxu0 %v5239
        %v5340 = vpop.f32.mrb[0].mxu0
        %v5341 = vadd.f32 0.0, %v5340
        %v5342 = vpop.f32.mrb[0].mxu0
        %v5343 = vpop.f32.mrb[0].mxu0
        %v5344 = vadd.f32 0.0, %v5343
        %v5345 = vpop.f32.mrb[0].mxu0
        %5346 = vmatprep.mubr.bf16.mxu0 0
        %5347 = vmatmul.mubr.bf16.gmra.mrb[0].mxu0 %v5242
        %v5348 = vpop.f32.mrb[0].mxu0
        %v5349 = vadd.f32 0.0, %v5348
        %v5350 = vpop.f32.mrb[0].mxu0
        %v5351 = vpop.f32.mrb[0].mxu0
        %v5352 = vadd.f32 0.0, %v5351
        %v5353 = vpop.f32.mrb[0].mxu0
        %5354 = vmatprep.mubr.bf16.mxu0 0
        %5355 = vmatmul.mubr.bf16.gmra.mrb[0].mxu0 %v5245
        %v5356 = vpop.f32.mrb[0].mxu0
        %v5357 = vadd.f32 0.0, %v5356
        %v5358 = vpop.f32.mrb[0].mxu0
        %v5359 = vpop.f32.mrb[0].mxu0
        %v5360 = vadd.f32 0.0, %v5359
        %v5361 = vpop.f32.mrb[0].mxu0
        %5362 = vmatprep.mubr.bf16.mxu0 0
        %5363 = vmatmul.mubr.bf16.gmra.mrb[0].mxu0 %v5248
        %v5364 = vpop.f32.mrb[0].mxu0
        %v5365 = vadd.f32 0.0, %v5364
        %v5366 = vpop.f32.mrb[0].mxu0
        %v5367 = vpop.f32.mrb[0].mxu0
        %v5368 = vadd.f32 0.0, %v5367
        %v5369 = vpop.f32.mrb[0].mxu0
        %5370 = vmatprep.mubr.bf16.mxu0 0
        %5371 = vmatmul.mubr.bf16.gmra.mrb[0].mxu0 %v5251
        %v5372 = vpop.f32.mrb[0].mxu0
        %v5373 = vadd.f32 0.0, %v5372
        %v5374 = vpop.f32.mrb[0].mxu0
        %v5375 = vpop.f32.mrb[0].mxu0
        %v5376 = vadd.f32 0.0, %v5375
        %v5377 = vpop.f32.mrb[0].mxu0
        %5378 = vmatprep.mubr.bf16.mxu0 0
        %5379 = vmatmul.mubr.bf16.gmra.mrb[0].mxu0 %v5254
        %v5380 = vpop.f32.mrb[0].mxu0
        %v5381 = vadd.f32 0.0, %v5380
        %v5382 = vpop.f32.mrb[0].mxu0
        %v5383 = vpop.f32.mrb[0].mxu0
        %v5384 = vadd.f32 0.0, %v5383
        %v5385 = vpop.f32.mrb[0].mxu0
        %5386 = vmatprep.mubr.bf16.mxu0 0
        %5387 = vmatmul.mubr.bf16.gmra.mrb[0].mxu0 %v5257
        %v5388 = vpop.f32.mrb[0].mxu0
        %v5389 = vadd.f32 0.0, %v5388
        %v5390 = vpop.f32.mrb[0].mxu0
        %v5391 = vpop.f32.mrb[0].mxu0
        %v5392 = vadd.f32 0.0, %v5391
        %v5393 = vpop.f32.mrb[0].mxu0
        %5394 = vmatprep.mubr.bf16.mxu0 0
        %5395 = vmatmul.mubr.bf16.gmra.mrb[0].mxu0 %v5260
        %v5396 = vpop.f32.mrb[0].mxu0
        %v5397 = vadd.f32 0.0, %v5396
        %v5398 = vpop.f32.mrb[0].mxu0
        %v5399 = vpop.f32.mrb[0].mxu0
        %v5400 = vadd.f32 0.0, %v5399
        %v5401 = vpop.f32.mrb[0].mxu0
        %5402 = vmatprep.mubr.bf16.mxu0 0
        %5403 = vmatmul.mubr.bf16.gmra.mrb[0].mxu0 %v5263
        %v5404 = vpop.f32.mrb[0].mxu0
        %v5405 = vadd.f32 0.0, %v5404
        %v5406 = vpop.f32.mrb[0].mxu0
        %v5407 = vpop.f32.mrb[0].mxu0
        %v5408 = vadd.f32 0.0, %v5407
        %v5409 = vpop.f32.mrb[0].mxu0
        %5410 = vmatprep.mubr.bf16.mxu0 0
        %5411 = vmatmul.mubr.bf16.gmra.mrb[0].mxu0 %v5266
        %v5412 = vpop.f32.mrb[0].mxu0
        %v5413 = vadd.f32 0.0, %v5412
        %v5414 = vpop.f32.mrb[0].mxu0
        %v5415 = vpop.f32.mrb[0].mxu0
        %v5416 = vadd.f32 0.0, %v5415
        %v5417 = vpop.f32.mrb[0].mxu0
        %5418 = vmatprep.mubr.bf16.mxu0 0
        %5419 = vmatmul.mubr.bf16.gmra.mrb[0].mxu0 %v5269
        %v5420 = vpop.f32.mrb[0].mxu0
        %v5421 = vadd.f32 0.0, %v5420
        %v5422 = vpop.f32.mrb[0].mxu0
        %v5423 = vpop.f32.mrb[0].mxu0
        %v5424 = vadd.f32 0.0, %v5423
        %v5425 = vpop.f32.mrb[0].mxu0
        %5426 = vmatprep.mubr.bf16.mxu0 0
        %5427 = vmatmul.mubr.bf16.gmra.mrb[0].mxu0 %v5272
        %v5428 = vpop.f32.mrb[0].mxu0
        %v5429 = vadd.f32 0.0, %v5428
        %v5430 = vpop.f32.mrb[0].mxu0
        %v5431 = vpop.f32.mrb[0].mxu0
        %v5432 = vadd.f32 0.0, %v5431
        %v5433 = vpop.f32.mrb[0].mxu0
        %5434 = vdwg.mxu0
        %v5435 = vadd.f32 %v4953, %v5309
        %v5436 = vadd.f32 %v4954, %v5312
        %v5437 = vadd.f32 %v4955, %v5317
        %v5438 = vadd.f32 %v4956, %v5320
        %v5439 = vadd.f32 %v4957, %v5325
        %v5440 = vadd.f32 %v4958, %v5328
        %v5441 = vadd.f32 %v4959, %v5333
        %v5442 = vadd.f32 %v4960, %v5336
        %v5443 = vadd.f32 %v4961, %v5341
        %v5444 = vadd.f32 %v4962, %v5344
        %v5445 = vadd.f32 %v4963, %v5349
        %v5446 = vadd.f32 %v4964, %v5352
        %v5447 = vadd.f32 %v4965, %v5357
        %v5448 = vadd.f32 %v4966, %v5360
        %v5449 = vadd.f32 %v4967, %v5365
        %v5450 = vadd.f32 %v4968, %v5368
        %v5451 = vadd.f32 %v4969, %v5373
        %v5452 = vadd.f32 %v4970, %v5376
        %v5453 = vadd.f32 %v4971, %v5381
        %v5454 = vadd.f32 %v4972, %v5384
        %v5455 = vadd.f32 %v4973, %v5389
        %v5456 = vadd.f32 %v4974, %v5392
        %v5457 = vadd.f32 %v4975, %v5397
        %v5458 = vadd.f32 %v4976, %v5400
        %v5459 = vadd.f32 %v4977, %v5405
        %v5460 = vadd.f32 %v4978, %v5408
        %v5461 = vadd.f32 %v4979, %v5413
        %v5462 = vadd.f32 %v4980, %v5416
        %v5463 = vadd.f32 %v4981, %v5421
        %v5464 = vadd.f32 %v4982, %v5424
        %v5465 = vadd.f32 %v4983, %v5429
        %v5466 = vadd.f32 %v4984, %v5432
        %v5467 = vld [vmem:[%s2] sm:$0x1]
        %v5469 = vlaneseq
        %v5470 = vshrl.u32 %v5469, 7
        %v5471 = vsub.s32 0, %v5470
        %v5472 = vrot.slane %v5467, %v5471
        %v5474 = vadd.f32 %v5435, %v5472
        %v5475 = vadd.f32 %v5436, %v5472
        %v5476 = vadd.f32 %v5437, %v5472
        %v5477 = vadd.f32 %v5438, %v5472
        %v5478 = vadd.f32 %v5439, %v5472
        %v5479 = vadd.f32 %v5440, %v5472
        %v5480 = vadd.f32 %v5441, %v5472
        %v5481 = vadd.f32 %v5442, %v5472
        %v5482 = vadd.f32 %v5443, %v5472
        %v5483 = vadd.f32 %v5444, %v5472
        %v5484 = vadd.f32 %v5445, %v5472
        %v5485 = vadd.f32 %v5446, %v5472
        %v5486 = vadd.f32 %v5447, %v5472
        %v5487 = vadd.f32 %v5448, %v5472
        %v5488 = vadd.f32 %v5449, %v5472
        %v5489 = vadd.f32 %v5450, %v5472
        %v5490 = vadd.f32 %v5451, %v5472
        %v5491 = vadd.f32 %v5452, %v5472
        %v5492 = vadd.f32 %v5453, %v5472
        %v5493 = vadd.f32 %v5454, %v5472
        %v5494 = vadd.f32 %v5455, %v5472
        %v5495 = vadd.f32 %v5456, %v5472
        %v5496 = vadd.f32 %v5457, %v5472
        %v5497 = vadd.f32 %v5458, %v5472
        %v5498 = vadd.f32 %v5459, %v5472
        %v5499 = vadd.f32 %v5460, %v5472
        %v5500 = vadd.f32 %v5461, %v5472
        %v5501 = vadd.f32 %v5462, %v5472
        %v5502 = vadd.f32 %v5463, %v5472
        %v5503 = vadd.f32 %v5464, %v5472
        %v5504 = vadd.f32 %v5465, %v5472
        %v5505 = vadd.f32 %v5466, %v5472
        %v5506 = vmax.f32 %v5474, 0.0
        %v5507 = vmax.f32 %v5475, 0.0
        %v5508 = vmax.f32 %v5476, 0.0
        %v5509 = vmax.f32 %v5477, 0.0
        %v5510 = vmax.f32 %v5478, 0.0
        %v5511 = vmax.f32 %v5479, 0.0
        %v5512 = vmax.f32 %v5480, 0.0
        %v5513 = vmax.f32 %v5481, 0.0
        %v5514 = vmax.f32 %v5482, 0.0
        %v5515 = vmax.f32 %v5483, 0.0
        %v5516 = vmax.f32 %v5484, 0.0
        %v5517 = vmax.f32 %v5485, 0.0
        %v5518 = vmax.f32 %v5486, 0.0
        %v5519 = vmax.f32 %v5487, 0.0
        %v5520 = vmax.f32 %v5488, 0.0
        %v5521 = vmax.f32 %v5489, 0.0
        %v5522 = vmax.f32 %v5490, 0.0
        %v5523 = vmax.f32 %v5491, 0.0
        %v5524 = vmax.f32 %v5492, 0.0
        %v5525 = vmax.f32 %v5493, 0.0
        %v5526 = vmax.f32 %v5494, 0.0
        %v5527 = vmax.f32 %v5495, 0.0
        %v5528 = vmax.f32 %v5496, 0.0
        %v5529 = vmax.f32 %v5497, 0.0
        %v5530 = vmax.f32 %v5498, 0.0
        %v5531 = vmax.f32 %v5499, 0.0
        %v5532 = vmax.f32 %v5500, 0.0
        %v5533 = vmax.f32 %v5501, 0.0
        %v5534 = vmax.f32 %v5502, 0.0
        %v5535 = vmax.f32 %v5503, 0.0
        %v5536 = vmax.f32 %v5504, 0.0
        %v5537 = vmax.f32 %v5505, 0.0
        %v5538 = vpack.c.bf16 %v5507, %v5506
        %v5539 = vpack.c.bf16 %v5509, %v5508
        %v5540 = vpack.c.bf16 %v5511, %v5510
        %v5541 = vpack.c.bf16 %v5513, %v5512
        %v5542 = vpack.c.bf16 %v5515, %v5514
        %v5543 = vpack.c.bf16 %v5517, %v5516
        %v5544 = vpack.c.bf16 %v5519, %v5518
        %v5545 = vpack.c.bf16 %v5521, %v5520
        %v5546 = vpack.c.bf16 %v5523, %v5522
        %v5547 = vpack.c.bf16 %v5525, %v5524
        %v5548 = vpack.c.bf16 %v5527, %v5526
        %v5549 = vpack.c.bf16 %v5529, %v5528
        %v5550 = vpack.c.bf16 %v5531, %v5530
        %v5551 = vpack.c.bf16 %v5533, %v5532
        %v5552 = vpack.c.bf16 %v5535, %v5534
        %v5553 = vpack.c.bf16 %v5537, %v5536
        %v5554 = vld [vmem:[#allocation8] sm:$0xff]
        %v5555 = vld [vmem:[#allocation8 + $0x8] sm:$0xff]
        %v5556 = vld [vmem:[#allocation8 + $0x10] sm:$0xff]
        %v5557 = vld [vmem:[#allocation8 + $0x18] sm:$0xff]
        %v5558 = vld [vmem:[#allocation8 + $0x20] sm:$0xff]
        %v5559 = vld [vmem:[#allocation8 + $0x28] sm:$0xff]
        %v5560 = vld [vmem:[#allocation8 + $0x30] sm:$0xff]
        %v5561 = vld [vmem:[#allocation8 + $0x38] sm:$0xff]
        %v5562 = vld [vmem:[%s4] sm:$0x3]
        %v5564 = vlaneseq
        %v5565 = vshrl.u32 %v5564, 7
        %v5566 = vsub.s32 0, %v5565
        %v5567 = vrot.slane %v5562, %v5566
        %v5568 = vlaneseq
        %v5569 = vshrl.u32 %v5568, 7
        %v5570 = vsub.s32 1, %v5569
        %v5571 = vrot.slane %v5562, %v5570
        %v5582 = vunpack.c.l.b16 %v5554
        %v5583 = vunpack.c.h.b16 %v5554
        %v5584 = vunpack.c.l.b16 %v5555
        %v5585 = vunpack.c.h.b16 %v5555
        %v5586 = vunpack.c.l.b16 %v5556
        %v5587 = vunpack.c.h.b16 %v5556
        %v5588 = vunpack.c.l.b16 %v5557
        %v5589 = vunpack.c.h.b16 %v5557
        %v5590 = vunpack.c.l.b16 %v5558
        %v5591 = vunpack.c.h.b16 %v5558
        %v5592 = vunpack.c.l.b16 %v5559
        %v5593 = vunpack.c.h.b16 %v5559
        %v5594 = vunpack.c.l.b16 %v5560
        %v5595 = vunpack.c.h.b16 %v5560
        %v5596 = vunpack.c.l.b16 %v5561
        %v5597 = vunpack.c.h.b16 %v5561
        %v5598 = vpack.c.b16 %v5584, %v5582
        %v5599 = vpack.c.b16 %v5585, %v5583
        %v5600 = vpack.c.b16 %v5588, %v5586
        %v5601 = vpack.c.b16 %v5589, %v5587
        %v5602 = vpack.c.b16 %v5592, %v5590
        %v5603 = vpack.c.b16 %v5593, %v5591
        %v5604 = vpack.c.b16 %v5596, %v5594
        %v5605 = vpack.c.b16 %v5597, %v5595
        %vm5614 = vcmask 523264
        %v5616 = vsel %vm5614, %v5538, 0
        %v5619 = vsel %vm5614, %v5539, 0
        %v5622 = vsel %vm5614, %v5540, 0
        %v5625 = vsel %vm5614, %v5541, 0
        %v5628 = vsel %vm5614, %v5542, 0
        %v5631 = vsel %vm5614, %v5543, 0
        %v5634 = vsel %vm5614, %v5544, 0
        %v5637 = vsel %vm5614, %v5545, 0
        %v5640 = vsel %vm5614, %v5546, 0
        %v5643 = vsel %vm5614, %v5547, 0
        %v5646 = vsel %vm5614, %v5548, 0
        %v5649 = vsel %vm5614, %v5549, 0
        %v5652 = vsel %vm5614, %v5550, 0
        %v5655 = vsel %vm5614, %v5551, 0
        %v5658 = vsel %vm5614, %v5552, 0
        %v5661 = vsel %vm5614, %v5553, 0
        %5663 = vmatprep.subr.bf16.mxu0 %v5599
        %5664 = vmatpush1.bf16.msra.mxu0 %v5598
        %5665 = vmatprep.subr.bf16.mxu0 %v5601
        %5666 = vmatpush1.bf16.msra.mxu0 %v5600
        %5667 = vmatprep.subr.bf16.mxu0 %v5603
        %5668 = vmatpush1.bf16.msra.mxu0 %v5602
        %5669 = vmatprep.subr.bf16.mxu0 %v5605
        %5670 = vmatpush1.bf16.msra.mxu0 %v5604
        %5671 = vmatprep.subr.bf16.mxu0 0
        %5672 = vmatpush1.bf16.msra.mxu0 0
        %5673 = vmatprep.subr.bf16.mxu0 0
        %5674 = vmatpush1.bf16.msra.mxu0 0
        %5675 = vmatprep.subr.bf16.mxu0 0
        %5676 = vmatpush1.bf16.msra.mxu0 0
        %5677 = vmatprep.subr.bf16.mxu0 0
        %5678 = vmatpush1.bf16.msra.mxu0 0
        %5679 = vmatprep.subr.bf16.mxu0 0
        %5680 = vmatpush1.bf16.msra.mxu0 0
        %5681 = vmatprep.subr.bf16.mxu0 0
        %5682 = vmatpush1.bf16.msra.mxu0 0
        %5683 = vmatprep.subr.bf16.mxu0 0
        %5684 = vmatpush1.bf16.msra.mxu0 0
        %5685 = vmatprep.subr.bf16.mxu0 0
        %5686 = vmatpush1.bf16.msra.mxu0 0
        %5687 = vmatprep.subr.bf16.mxu0 0
        %5688 = vmatpush1.bf16.msra.mxu0 0
        %5689 = vmatprep.subr.bf16.mxu0 0
        %5690 = vmatpush1.bf16.msra.mxu0 0
        %5691 = vmatprep.subr.bf16.mxu0 0
        %5692 = vmatpush1.bf16.msra.mxu0 0
        %5693 = vmatprep.subr.bf16.mxu0 0
        %5694 = vmatpush1.bf16.msra.mxu0 0
        %5695 = vmatprep.mubr.bf16.mxu0 0
        %5696 = vmatmul.mubr.bf16.gmra.mrb[0].mxu0 %v5616
        %v5697 = vpop.f32.mrb[0].mxu0
        %v5698 = vadd.f32 %v5567, %v5697
        %v5699 = vpop.f32.mrb[0].mxu0
        %v5700 = vadd.f32 %v5571, %v5699
        %v5701 = vpop.f32.mrb[0].mxu0
        %v5702 = vadd.f32 %v5567, %v5701
        %v5703 = vpop.f32.mrb[0].mxu0
        %v5704 = vadd.f32 %v5571, %v5703
        %5705 = vmatprep.mubr.bf16.mxu0 0
        %5706 = vmatmul.mubr.bf16.gmra.mrb[0].mxu0 %v5619
        %v5707 = vpop.f32.mrb[0].mxu0
        %v5708 = vadd.f32 %v5567, %v5707
        %v5709 = vpop.f32.mrb[0].mxu0
        %v5710 = vadd.f32 %v5571, %v5709
        %v5711 = vpop.f32.mrb[0].mxu0
        %v5712 = vadd.f32 %v5567, %v5711
        %v5713 = vpop.f32.mrb[0].mxu0
        %v5714 = vadd.f32 %v5571, %v5713
        %5715 = vmatprep.mubr.bf16.mxu0 0
        %5716 = vmatmul.mubr.bf16.gmra.mrb[0].mxu0 %v5622
        %v5717 = vpop.f32.mrb[0].mxu0
        %v5718 = vadd.f32 %v5567, %v5717
        %v5719 = vpop.f32.mrb[0].mxu0
        %v5720 = vadd.f32 %v5571, %v5719
        %v5721 = vpop.f32.mrb[0].mxu0
        %v5722 = vadd.f32 %v5567, %v5721
        %v5723 = vpop.f32.mrb[0].mxu0
        %v5724 = vadd.f32 %v5571, %v5723
        %5725 = vmatprep.mubr.bf16.mxu0 0
        %5726 = vmatmul.mubr.bf16.gmra.mrb[0].mxu0 %v5625
        %v5727 = vpop.f32.mrb[0].mxu0
        %v5728 = vadd.f32 %v5567, %v5727
        %v5729 = vpop.f32.mrb[0].mxu0
        %v5730 = vadd.f32 %v5571, %v5729
        %v5731 = vpop.f32.mrb[0].mxu0
        %v5732 = vadd.f32 %v5567, %v5731
        %v5733 = vpop.f32.mrb[0].mxu0
        %v5734 = vadd.f32 %v5571, %v5733
        %5735 = vmatprep.mubr.bf16.mxu0 0
        %5736 = vmatmul.mubr.bf16.gmra.mrb[0].mxu0 %v5628
        %v5737 = vpop.f32.mrb[0].mxu0
        %v5738 = vadd.f32 %v5567, %v5737
        %v5739 = vpop.f32.mrb[0].mxu0
        %v5740 = vadd.f32 %v5571, %v5739
        %v5741 = vpop.f32.mrb[0].mxu0
        %v5742 = vadd.f32 %v5567, %v5741
        %v5743 = vpop.f32.mrb[0].mxu0
        %v5744 = vadd.f32 %v5571, %v5743
        %5745 = vmatprep.mubr.bf16.mxu0 0
        %5746 = vmatmul.mubr.bf16.gmra.mrb[0].mxu0 %v5631
        %v5747 = vpop.f32.mrb[0].mxu0
        %v5748 = vadd.f32 %v5567, %v5747
        %v5749 = vpop.f32.mrb[0].mxu0
        %v5750 = vadd.f32 %v5571, %v5749
        %v5751 = vpop.f32.mrb[0].mxu0
        %v5752 = vadd.f32 %v5567, %v5751
        %v5753 = vpop.f32.mrb[0].mxu0
        %v5754 = vadd.f32 %v5571, %v5753
        %5755 = vmatprep.mubr.bf16.mxu0 0
        %5756 = vmatmul.mubr.bf16.gmra.mrb[0].mxu0 %v5634
        %v5757 = vpop.f32.mrb[0].mxu0
        %v5758 = vadd.f32 %v5567, %v5757
        %v5759 = vpop.f32.mrb[0].mxu0
        %v5760 = vadd.f32 %v5571, %v5759
        %v5761 = vpop.f32.mrb[0].mxu0
        %v5762 = vadd.f32 %v5567, %v5761
        %v5763 = vpop.f32.mrb[0].mxu0
        %v5764 = vadd.f32 %v5571, %v5763
        %5765 = vmatprep.mubr.bf16.mxu0 0
        %5766 = vmatmul.mubr.bf16.gmra.mrb[0].mxu0 %v5637
        %v5767 = vpop.f32.mrb[0].mxu0
        %v5768 = vadd.f32 %v5567, %v5767
        %v5769 = vpop.f32.mrb[0].mxu0
        %v5770 = vadd.f32 %v5571, %v5769
        %v5771 = vpop.f32.mrb[0].mxu0
        %v5772 = vadd.f32 %v5567, %v5771
        %v5773 = vpop.f32.mrb[0].mxu0
        %v5774 = vadd.f32 %v5571, %v5773
        %5775 = vmatprep.mubr.bf16.mxu0 0
        %5776 = vmatmul.mubr.bf16.gmra.mrb[0].mxu0 %v5640
        %v5777 = vpop.f32.mrb[0].mxu0
        %v5778 = vadd.f32 %v5567, %v5777
        %v5779 = vpop.f32.mrb[0].mxu0
        %v5780 = vadd.f32 %v5571, %v5779
        %v5781 = vpop.f32.mrb[0].mxu0
        %v5782 = vadd.f32 %v5567, %v5781
        %v5783 = vpop.f32.mrb[0].mxu0
        %v5784 = vadd.f32 %v5571, %v5783
        %5785 = vmatprep.mubr.bf16.mxu0 0
        %5786 = vmatmul.mubr.bf16.gmra.mrb[0].mxu0 %v5643
        %v5787 = vpop.f32.mrb[0].mxu0
        %v5788 = vadd.f32 %v5567, %v5787
        %v5789 = vpop.f32.mrb[0].mxu0
        %v5790 = vadd.f32 %v5571, %v5789
        %v5791 = vpop.f32.mrb[0].mxu0
        %v5792 = vadd.f32 %v5567, %v5791
        %v5793 = vpop.f32.mrb[0].mxu0
        %v5794 = vadd.f32 %v5571, %v5793
        %5795 = vmatprep.mubr.bf16.mxu0 0
        %5796 = vmatmul.mubr.bf16.gmra.mrb[0].mxu0 %v5646
        %v5797 = vpop.f32.mrb[0].mxu0
        %v5798 = vadd.f32 %v5567, %v5797
        %v5799 = vpop.f32.mrb[0].mxu0
        %v5800 = vadd.f32 %v5571, %v5799
        %v5801 = vpop.f32.mrb[0].mxu0
        %v5802 = vadd.f32 %v5567, %v5801
        %v5803 = vpop.f32.mrb[0].mxu0
        %v5804 = vadd.f32 %v5571, %v5803
        %5805 = vmatprep.mubr.bf16.mxu0 0
        %5806 = vmatmul.mubr.bf16.gmra.mrb[0].mxu0 %v5649
        %v5807 = vpop.f32.mrb[0].mxu0
        %v5808 = vadd.f32 %v5567, %v5807
        %v5809 = vpop.f32.mrb[0].mxu0
        %v5810 = vadd.f32 %v5571, %v5809
        %v5811 = vpop.f32.mrb[0].mxu0
        %v5812 = vadd.f32 %v5567, %v5811
        %v5813 = vpop.f32.mrb[0].mxu0
        %v5814 = vadd.f32 %v5571, %v5813
        %5815 = vmatprep.mubr.bf16.mxu0 0
        %5816 = vmatmul.mubr.bf16.gmra.mrb[0].mxu0 %v5652
        %v5817 = vpop.f32.mrb[0].mxu0
        %v5818 = vadd.f32 %v5567, %v5817
        %v5819 = vpop.f32.mrb[0].mxu0
        %v5820 = vadd.f32 %v5571, %v5819
        %v5821 = vpop.f32.mrb[0].mxu0
        %v5822 = vadd.f32 %v5567, %v5821
        %v5823 = vpop.f32.mrb[0].mxu0
        %v5824 = vadd.f32 %v5571, %v5823
        %5825 = vmatprep.mubr.bf16.mxu0 0
        %5826 = vmatmul.mubr.bf16.gmra.mrb[0].mxu0 %v5655
        %v5827 = vpop.f32.mrb[0].mxu0
        %v5828 = vadd.f32 %v5567, %v5827
        %v5829 = vpop.f32.mrb[0].mxu0
        %v5830 = vadd.f32 %v5571, %v5829
        %v5831 = vpop.f32.mrb[0].mxu0
        %v5832 = vadd.f32 %v5567, %v5831
        %v5833 = vpop.f32.mrb[0].mxu0
        %v5834 = vadd.f32 %v5571, %v5833
        %5835 = vmatprep.mubr.bf16.mxu0 0
        %5836 = vmatmul.mubr.bf16.gmra.mrb[0].mxu0 %v5658
        %v5837 = vpop.f32.mrb[0].mxu0
        %v5838 = vadd.f32 %v5567, %v5837
        %v5839 = vpop.f32.mrb[0].mxu0
        %v5840 = vadd.f32 %v5571, %v5839
        %v5841 = vpop.f32.mrb[0].mxu0
        %v5842 = vadd.f32 %v5567, %v5841
        %v5843 = vpop.f32.mrb[0].mxu0
        %v5844 = vadd.f32 %v5571, %v5843
        %5845 = vmatprep.mubr.bf16.mxu0 0
        %5846 = vmatmul.mubr.bf16.gmra.mrb[0].mxu0 %v5661
        %v5847 = vpop.f32.mrb[0].mxu0
        %v5848 = vadd.f32 %v5567, %v5847
        %v5849 = vpop.f32.mrb[0].mxu0
        %v5850 = vadd.f32 %v5571, %v5849
        %v5851 = vpop.f32.mrb[0].mxu0
        %v5852 = vadd.f32 %v5567, %v5851
        %v5853 = vpop.f32.mrb[0].mxu0
        %v5854 = vadd.f32 %v5571, %v5853
        %5855 = vdwg.mxu0
        %v5856 = vmul.f32 %v5698, 0.25
        %v5857 = vmul.f32 %v5700, 0.25
        %v5858 = vmul.f32 %v5702, 0.25
        %v5859 = vmul.f32 %v5704, 0.25
        %v5860 = vmul.f32 %v5708, 0.25
        %v5861 = vmul.f32 %v5710, 0.25
        %v5862 = vmul.f32 %v5712, 0.25
        %v5863 = vmul.f32 %v5714, 0.25
        %v5864 = vmul.f32 %v5718, 0.25
        %v5865 = vmul.f32 %v5720, 0.25
        %v5866 = vmul.f32 %v5722, 0.25
        %v5867 = vmul.f32 %v5724, 0.25
        %v5868 = vmul.f32 %v5728, 0.25
        %v5869 = vmul.f32 %v5730, 0.25
        %v5870 = vmul.f32 %v5732, 0.25
        %v5871 = vmul.f32 %v5734, 0.25
        %v5872 = vmul.f32 %v5738, 0.25
        %v5873 = vmul.f32 %v5740, 0.25
        %v5874 = vmul.f32 %v5742, 0.25
        %v5875 = vmul.f32 %v5744, 0.25
        %v5876 = vmul.f32 %v5748, 0.25
        %v5877 = vmul.f32 %v5750, 0.25
        %v5878 = vmul.f32 %v5752, 0.25
        %v5879 = vmul.f32 %v5754, 0.25
        %v5880 = vmul.f32 %v5758, 0.25
        %v5881 = vmul.f32 %v5760, 0.25
        %v5882 = vmul.f32 %v5762, 0.25
        %v5883 = vmul.f32 %v5764, 0.25
        %v5884 = vmul.f32 %v5768, 0.25
        %v5885 = vmul.f32 %v5770, 0.25
        %v5886 = vmul.f32 %v5772, 0.25
        %v5887 = vmul.f32 %v5774, 0.25
        %v5888 = vmul.f32 %v5778, 0.25
        %v5889 = vmul.f32 %v5780, 0.25
        %v5890 = vmul.f32 %v5782, 0.25
        %v5891 = vmul.f32 %v5784, 0.25
        %v5892 = vmul.f32 %v5788, 0.25
        %v5893 = vmul.f32 %v5790, 0.25
        %v5894 = vmul.f32 %v5792, 0.25
        %v5895 = vmul.f32 %v5794, 0.25
        %v5896 = vmul.f32 %v5798, 0.25
        %v5897 = vmul.f32 %v5800, 0.25
        %v5898 = vmul.f32 %v5802, 0.25
        %v5899 = vmul.f32 %v5804, 0.25
        %v5900 = vmul.f32 %v5808, 0.25
        %v5901 = vmul.f32 %v5810, 0.25
        %v5902 = vmul.f32 %v5812, 0.25
        %v5903 = vmul.f32 %v5814, 0.25
        %v5904 = vmul.f32 %v5818, 0.25
        %v5905 = vmul.f32 %v5820, 0.25
        %v5906 = vmul.f32 %v5822, 0.25
        %v5907 = vmul.f32 %v5824, 0.25
        %v5908 = vmul.f32 %v5828, 0.25
        %v5909 = vmul.f32 %v5830, 0.25
        %v5910 = vmul.f32 %v5832, 0.25
        %v5911 = vmul.f32 %v5834, 0.25
        %v5912 = vmul.f32 %v5838, 0.25
        %v5913 = vmul.f32 %v5840, 0.25
        %v5914 = vmul.f32 %v5842, 0.25
        %v5915 = vmul.f32 %v5844, 0.25
        %v5916 = vmul.f32 %v5848, 0.25
        %v5917 = vmul.f32 %v5850, 0.25
        %v5918 = vmul.f32 %v5852, 0.25
        %v5919 = vmul.f32 %v5854, 0.25
        %5920 = vst [vmem:[%s271] sm:$0xff] %v5856
        %vm5921 = vcmask 130048
        %5922 = vst.msk [vmem:[%s271 + $0x8] sm:$0xff] %vm5921, %v5857
        %5923 = vst [vmem:[%s271 + $0x10] sm:$0xff] %v5858
        %5924 = vst.msk [vmem:[%s271 + $0x18] sm:$0xff] %vm5921, %v5859
        %5925 = vst [vmem:[%s271 + $0x20] sm:$0xff] %v5860
        %5926 = vst.msk [vmem:[%s271 + $0x28] sm:$0xff] %vm5921, %v5861
        %5927 = vst [vmem:[%s271 + $0x30] sm:$0xff] %v5862
        %5928 = vst.msk [vmem:[%s271 + $0x38] sm:$0xff] %vm5921, %v5863
        %5929 = vst [vmem:[%s271 + $0x40] sm:$0xff] %v5864
        %5930 = vst.msk [vmem:[%s271 + $0x48] sm:$0xff] %vm5921, %v5865
        %5931 = vst [vmem:[%s271 + $0x50] sm:$0xff] %v5866
        %5932 = vst.msk [vmem:[%s271 + $0x58] sm:$0xff] %vm5921, %v5867
        %5933 = vst [vmem:[%s271 + $0x60] sm:$0xff] %v5868
        %5934 = vst.msk [vmem:[%s271 + $0x68] sm:$0xff] %vm5921, %v5869
        %5935 = vst [vmem:[%s271 + $0x70] sm:$0xff] %v5870
        %5936 = vst.msk [vmem:[%s271 + $0x78] sm:$0xff] %vm5921, %v5871
        %5937 = vst [vmem:[%s271 + $0x80] sm:$0xff] %v5872
        %5938 = vst.msk [vmem:[%s271 + $0x88] sm:$0xff] %vm5921, %v5873
        %5939 = vst [vmem:[%s271 + $0x90] sm:$0xff] %v5874
        %5940 = vst.msk [vmem:[%s271 + $0x98] sm:$0xff] %vm5921, %v5875
        %5941 = vst [vmem:[%s271 + $0xa0] sm:$0xff] %v5876
        %5942 = vst.msk [vmem:[%s271 + $0xa8] sm:$0xff] %vm5921, %v5877
        %5943 = vst [vmem:[%s271 + $0xb0] sm:$0xff] %v5878
        %5944 = vst.msk [vmem:[%s271 + $0xb8] sm:$0xff] %vm5921, %v5879
        %5945 = vst [vmem:[%s271 + $0xc0] sm:$0xff] %v5880
        %5946 = vst.msk [vmem:[%s271 + $0xc8] sm:$0xff] %vm5921, %v5881
        %5947 = vst [vmem:[%s271 + $0xd0] sm:$0xff] %v5882
        %5948 = vst.msk [vmem:[%s271 + $0xd8] sm:$0xff] %vm5921, %v5883
        %5949 = vst [vmem:[%s271 + $0xe0] sm:$0xff] %v5884
        %5950 = vst.msk [vmem:[%s271 + $0xe8] sm:$0xff] %vm5921, %v5885
        %5951 = vst [vmem:[%s271 + $0xf0] sm:$0xff] %v5886
        %5952 = vst.msk [vmem:[%s271 + $0xf8] sm:$0xff] %vm5921, %v5887
        %5953 = vst [vmem:[%s271 + $0x100] sm:$0xff] %v5888
        %5954 = vst.msk [vmem:[%s271 + $0x108] sm:$0xff] %vm5921, %v5889
        %5955 = vst [vmem:[%s271 + $0x110] sm:$0xff] %v5890
        %5956 = vst.msk [vmem:[%s271 + $0x118] sm:$0xff] %vm5921, %v5891
        %5957 = vst [vmem:[%s271 + $0x120] sm:$0xff] %v5892
        %5958 = vst.msk [vmem:[%s271 + $0x128] sm:$0xff] %vm5921, %v5893
        %5959 = vst [vmem:[%s271 + $0x130] sm:$0xff] %v5894
        %5960 = vst.msk [vmem:[%s271 + $0x138] sm:$0xff] %vm5921, %v5895
        %5961 = vst [vmem:[%s271 + $0x140] sm:$0xff] %v5896
        %5962 = vst.msk [vmem:[%s271 + $0x148] sm:$0xff] %vm5921, %v5897
        %5963 = vst [vmem:[%s271 + $0x150] sm:$0xff] %v5898
        %5964 = vst.msk [vmem:[%s271 + $0x158] sm:$0xff] %vm5921, %v5899
        %5965 = vst [vmem:[%s271 + $0x160] sm:$0xff] %v5900
        %5966 = vst.msk [vmem:[%s271 + $0x168] sm:$0xff] %vm5921, %v5901
        %5967 = vst [vmem:[%s271 + $0x170] sm:$0xff] %v5902
        %5968 = vst.msk [vmem:[%s271 + $0x178] sm:$0xff] %vm5921, %v5903
        %5969 = vst [vmem:[%s271 + $0x180] sm:$0xff] %v5904
        %5970 = vst.msk [vmem:[%s271 + $0x188] sm:$0xff] %vm5921, %v5905
        %5971 = vst [vmem:[%s271 + $0x190] sm:$0xff] %v5906
        %5972 = vst.msk [vmem:[%s271 + $0x198] sm:$0xff] %vm5921, %v5907
        %5973 = vst [vmem:[%s271 + $0x1a0] sm:$0xff] %v5908
        %5974 = vst.msk [vmem:[%s271 + $0x1a8] sm:$0xff] %vm5921, %v5909
        %5975 = vst [vmem:[%s271 + $0x1b0] sm:$0xff] %v5910
        %5976 = vst.msk [vmem:[%s271 + $0x1b8] sm:$0xff] %vm5921, %v5911
        %5977 = vst [vmem:[%s271 + $0x1c0] sm:$0xff] %v5912
        %5978 = vst.msk [vmem:[%s271 + $0x1c8] sm:$0xff] %vm5921, %v5913
        %5979 = vst [vmem:[%s271 + $0x1d0] sm:$0xff] %v5914
        %5980 = vst.msk [vmem:[%s271 + $0x1d8] sm:$0xff] %vm5921, %v5915
        %5981 = vst [vmem:[%s271 + $0x1e0] sm:$0xff] %v5916
        %5982 = vst.msk [vmem:[%s271 + $0x1e8] sm:$0xff] %vm5921, %v5917
        %5983 = vst [vmem:[%s271 + $0x1f0] sm:$0xff] %v5918
        %5984 = vst.msk [vmem:[%s271 + $0x1f8] sm:$0xff] %vm5921, %v5919
        %s5985 = sand.u32 %s141, 1
        %s5986 = scalar_lea.sflag [#allocation5], %s5985
        %s5987 = sand.u32 %s141, 1
        %s5988 = smul.addr %s5987, 512
        %s5989 = scalar_lea.vmem [#allocation9], %s5988
        // Predicated region
        $region53: #{tpu_custom_call.1} parent=39 // pred_check
          %p5990 = pneg %p151
        $region54: #{tpu_custom_call.1} parent=39 // pred_check_branch
          %5992 = sbr.rel (%p5990) target = $region56
        $region55: #{tpu_custom_call.1} parent=39 // pred_region
          %s5994 = ssub.s32 8192, 8192
          %5995 = vsyncadd %s5986, %s5994
          %s5996 = smul.addr %s23, 64
          %s5997 = smul.addr %s5996, 128
          %s5998 = scalar_lea.hbm %s5, %s5997
          %s5999 = sshll.u32 %s5989, 4
          %s6000 = int_to_ptr.vmem [resolvable:$true] %s5999
          %6005 = dma.vmem_to_hbm [thread:$0]  %s6000, 8192, %s5998, %s5986, 256, 256, 16
        $region56: #{tpu_custom_call.1} parent=39 // pred_fallthru
          _
      $region40: #{tpu_custom_call.1} parent=5 // pred_fallthru
        _
      %p6006 = scmp.le.s32.totalorder 2, %s18
      // Predicated region
      $region57: #{tpu_custom_call.1} parent=5 // pred_check
        %p6007 = pneg %p6006
      $region58: #{tpu_custom_call.1} parent=5 // pred_check_branch
        %6009 = sbr.rel (%p6007) target = $region60
      $region59: #{tpu_custom_call.1} parent=5 // pred_region
        %s6010 = ssub.s32 %s18, 2
        // Predicated region
        $region61: #{tpu_custom_call.1} parent=59 // pred_check
          %p6011 = pneg %p157
        $region62: #{tpu_custom_call.1} parent=59 // pred_check_branch
          %6013 = sbr.rel (%p6011) target = $region64
        $region63: #{tpu_custom_call.1} parent=59 // pred_region
          %s6014 = sand.u32 %s142, 1
          %s6015 = scalar_lea.sflag [#allocation5], %s6014
          %s6016 = sand.u32 %s142, 1
          %s6017 = smul.addr %s6016, 512
          %s6018 = scalar_lea.vmem [#allocation9], %s6017
          %6019 = dma.done %s6015, 8192
        $region64: #{tpu_custom_call.1} parent=59 // pred_fallthru
          _
      $region60: #{tpu_custom_call.1} parent=5 // pred_fallthru
        _
    $region6: #{tpu_custom_call.1} parent=1 // loop_footer
      %s22 = sadd.s32 1, %s18
    $region7: #{tpu_custom_call.1} parent=1 // loop_footer_branch
      %17 = sbr.rel target = $region3
    $region8: #{tpu_custom_call.1} parent=1 // loop_exit
      _
    %6020 = vsyncpa [#allocation4], 1
    %s6021 = scalar_lea.sflag [#allocation4], 1
    %6022 = vsyncpa %s6021, 1
    %6023 = vsyncpa [#allocation7], 1
    %6024 = vsyncpa [#allocation5], 1
    %s6025 = scalar_lea.sflag [#allocation5], 1
    %6026 = vsyncpa %s6025, 1

</llo_original>
